<compile_context>
chip_gen: v6e
topology: v6e:2x2x1
jax: 0.10.0
libtpu: 0.0.40
codegen_flags: <defaults>
</compile_context>

<pallas_src>
import functools

import jax
import jax.numpy as jnp
from jax.experimental import pallas as pl
from jax.experimental.pallas import tpu as pltpu


def trill_graph_kernel(x_ref, edges_ref,
                       w1t_ref, b1_ref, w2t_ref, b2_ref,
                       wzrh_t_ref, uzur_ref, uh_ref, ba_ref,
                       wo1t_ref, bo1_ref, wo2t_ref, bo2_ref,
                       out_ref, act_ref, *, hidden, num_edge_types, iterations):
    f32 = jnp.float32
    bf16 = jnp.bfloat16
    H = hidden
    n = x_ref.shape[1]                                    # padded note count (lane axis)

    x_t = x_ref[...]                                      # (D_in_pad, Np)

    # ---- note_fc (feature-major): ReLU(W @ x + b), twice ----
    h = jnp.maximum(jnp.dot(w1t_ref[...], x_t, preferred_element_type=f32)
                    + b1_ref[...], 0.0)                   # (H, Np)
    h = jnp.maximum(jnp.dot(w2t_ref[...], h, preferred_element_type=f32)
                    + b2_ref[...], 0.0)                   # (H, Np)

    wzrh_t = wzrh_t_ref[...]                              # (3H, E*H)
    uzur = uzur_ref[...]                                  # (2H, H)
    uh = uh_ref[...]                                      # (H, H)
    ba = jnp.broadcast_to(ba_ref[...], (H, n))            # hoisted once (not per iter)

    # ---- GatedGraph, iteration = 5 (GGNN-style gated update) ----
    for _ in range(iterations):                           # static, small -> unrolled
        h_bf = h.astype(bf16)
        for e in range(num_edge_types):                   # static, small
            # act_e^T = (edges[e]^T @ h)^T = h^T @ edges[e]   (bf16 MXU, f32 acc)
            act_ref[e * H:(e + 1) * H, :] = jnp.dot(
                h_bf, edges_ref[e], preferred_element_type=f32)
        # fused K = E*H matmul for z / r / h-tilde messages
        msg = jnp.dot(wzrh_t, act_ref[...], preferred_element_type=f32)   # (3H, Np)
        uzr = jnp.dot(uzur, h, preferred_element_type=f32)                # (2H, Np)
        z = jax.nn.sigmoid(msg[:H, :] + uzr[:H, :] + ba)
        r = jax.nn.sigmoid(msg[H:2 * H, :] + uzr[H:, :])
        htil = jnp.tanh(msg[2 * H:, :]
                        + jnp.dot(uh, r * h, preferred_element_type=f32))
        h = (1.0 - z) * h + z * htil

    # ---- out_fc: Linear -> ReLU -> Dropout(id) -> Linear, then sigmoid ----
    o = jnp.maximum(jnp.dot(wo1t_ref[...], h, preferred_element_type=f32)
                    + bo1_ref[...], 0.0)
    o = jnp.dot(wo2t_ref[...], o, preferred_element_type=f32) + bo2_ref[...]
    out_ref[...] = jax.nn.sigmoid(o)                      # loss_type != 'MSE'


PARAM_ORDER = ("w1t", "b1", "w2t", "b2", "wzrh_t", "uzur", "uh", "ba",
               "wo1t", "bo1", "wo2t", "bo2")


def _round_up(v, m):
    return ((v + m - 1) // m) * m


def trill_graph_forward(x, edges, params, *, num_edge_types, hidden,
                        output_size, iterations=5):
    """x: (1, N, input_size); edges: (E_in, N, N) with E_in >= num_edge_types."""
    if edges.shape[0] != num_edge_types:
        edges = edges[:num_edge_types, :, :]
    n_notes = x.shape[1]
    input_size = x.shape[2]
    H = hidden
    n_pad = _round_up(n_notes, 128)                       # lane-dense note axis
    in_pad = _round_up(input_size, 8)                     # sublane-aligned K for 1st matmul
    out_pad = _round_up(output_size, 8)                   # sublane-aligned output rows

    # Feature-major inputs; zero-padded edges isolate the padded notes.
    x_t = jnp.zeros((in_pad, n_pad), jnp.float32)
    x_t = x_t.at[:input_size, :n_notes].set(x[0].T.astype(jnp.float32))
    edges_b = jnp.zeros((num_edge_types, n_pad, n_pad), jnp.bfloat16)
    edges_b = edges_b.at[:, :n_notes, :n_notes].set(edges.astype(jnp.bfloat16))

    # One-time host-side weight re-layouts (cheap, small tensors).
    w1t = jnp.zeros((H, in_pad), jnp.float32).at[:, :input_size].set(params["w1"].T)
    wo2t = jnp.zeros((out_pad, H), jnp.float32).at[:output_size, :].set(params["wo2"].T)
    bo2 = jnp.zeros((out_pad, 1), jnp.float32).at[:output_size, :].set(
        params["bo2"].reshape(output_size, 1))
    flat = dict(
        w1t=w1t, b1=params["b1"].reshape(H, 1),
        w2t=params["w2"].T, b2=params["b2"].reshape(H, 1),
        wzrh_t=params["wzrh"].reshape(num_edge_types * H, 3 * H).T,  # (3H, E*H)
        uzur=params["uzur"], uh=params["uh"], ba=params["ba"].reshape(H, 1),
        wo1t=params["wo1"].T, bo1=params["bo1"].reshape(H, 1),
        wo2t=wo2t, bo2=bo2,
    )
    flat_list = [flat[k].astype(jnp.float32) for k in PARAM_ORDER]

    # Explicit scoped-VMEM budget (default limit is only 16/32 MiB).
    edge_bytes = int(edges_b.size) * 2
    act_bytes = num_edge_types * H * n_pad * 4
    vmem_limit = int(min(100 << 20,
                         max(32 << 20, 2 * edge_bytes + 2 * act_bytes + (4 << 20))))

    vmem = pl.BlockSpec(memory_space=pltpu.MemorySpace.VMEM)
    kernel = functools.partial(trill_graph_kernel, hidden=H,
                               num_edge_types=num_edge_types, iterations=iterations)
    out_t = pl.pallas_call(
        kernel,
        out_shape=jax.ShapeDtypeStruct((out_pad, n_pad), jnp.float32),
        in_specs=[vmem] * (2 + len(flat_list)),
        out_specs=vmem,
        scratch_shapes=[pltpu.VMEM((num_edge_types * H, n_pad), jnp.float32)],
        compiler_params=pltpu.CompilerParams(vmem_limit_bytes=vmem_limit),
    )(x_t, edges_b, *flat_list)
    return out_t[:output_size, :n_notes].T[None, :, :]    # (1, N, output_size)


def init_params(key, input_size, hidden, output_size, num_edge_types):
    ks = jax.random.split(key, 8)
    std = (2.0 / (2 * hidden)) ** 0.5

    def dense(k, fan_in, fan_out):
        return jax.random.normal(k, (fan_in, fan_out), jnp.float32) * (2.0 / (fan_in + fan_out)) ** 0.5

    return dict(
        w1=dense(ks[0], input_size, hidden),     b1=jnp.zeros((1, hidden), jnp.float32),
        w2=dense(ks[1], hidden, hidden),         b2=jnp.zeros((1, hidden), jnp.float32),
        wzrh=jax.random.normal(ks[2], (num_edge_types, hidden, 3 * hidden), jnp.float32) * std,
        uzur=jax.random.normal(ks[3], (2 * hidden, hidden), jnp.float32) * std,
        uh=jax.random.normal(ks[4], (hidden, hidden), jnp.float32) * std,
        ba=jnp.zeros((1, hidden), jnp.float32),
        wo1=dense(ks[5], hidden, hidden),        bo1=jnp.zeros((1, hidden), jnp.float32),
        wo2=dense(ks[6], hidden, output_size),   bo2=jnp.zeros((1, output_size), jnp.float32),
    )


def reference_forward(x, edges, params, *, num_edge_types, hidden, output_size,
                      iterations=5, match_kernel_precision=True):
    """Pure-JAX mirror for correctness. match_kernel_precision=True reproduces the
    kernel's bf16 edge-matmul inputs (f32 accumulation); False is the full-f32 model."""
    if edges.shape[0] != num_edge_types:
        edges = edges[:num_edge_types]
    H = hidden
    e_mat = edges.astype(jnp.bfloat16 if match_kernel_precision else jnp.float32)
    wzrh_flat = params["wzrh"].reshape(num_edge_types * H, 3 * H)
    h = jnp.maximum(x[0] @ params["w1"] + params["b1"], 0.0)
    h = jnp.maximum(h @ params["w2"] + params["b2"], 0.0)
    for _ in range(iterations):
        hb = h.astype(jnp.bfloat16) if match_kernel_precision else h
        acts = [jax.lax.dot_general(e_mat[e], hb, (((0,), (0,)), ((), ())),
                                    preferred_element_type=jnp.float32)
                for e in range(num_edge_types)]            # each = edges[e].T @ h
        msg = jnp.concatenate(acts, axis=1) @ wzrh_flat    # == sum_e (edges[e].T@h) @ wzrh[e]
        uzr = h @ params["uzur"].T
        z = jax.nn.sigmoid(msg[:, :H] + uzr[:, :H] + params["ba"])
        r = jax.nn.sigmoid(msg[:, H:2 * H] + uzr[:, H:])
        htil = jnp.tanh(msg[:, 2 * H:] + (r * h) @ params["uh"].T)
        h = (1.0 - z) * h + z * htil
    o = jnp.maximum(h @ params["wo1"] + params["bo1"], 0.0)
    o = o @ params["wo2"] + params["bo2"]
    return jax.nn.sigmoid(o)[None]


if __name__ == "__main__":
    INPUT_SIZE, HIDDEN, OUTPUT_SIZE = 20, 32, 5
    NUM_EDGE_TYPES, N_NOTES = 4, 16

    key = jax.random.PRNGKey(0)
    kx, ke, kp = jax.random.split(key, 3)
    x = jax.random.normal(kx, (1, N_NOTES, INPUT_SIZE), jnp.float32)
    # 6 edge types supplied -> exercises the `edges[:num_edge_types]` slicing branch
    edges = (jax.random.uniform(ke, (6, N_NOTES, N_NOTES)) < 0.25).astype(jnp.float32)
    params = init_params(kp, INPUT_SIZE, HIDDEN, OUTPUT_SIZE, NUM_EDGE_TYPES)

    out = trill_graph_forward(x, edges, params, num_edge_types=NUM_EDGE_TYPES,
                              hidden=HIDDEN, output_size=OUTPUT_SIZE)
    out = jax.block_until_ready(out)
    assert out.shape == (1, N_NOTES, OUTPUT_SIZE), out.shape

    # Tight check vs a reference that mirrors the kernel's bf16 edge-matmul precision.
    ref_match = reference_forward(x, edges, params, num_edge_types=NUM_EDGE_TYPES,
                                  hidden=HIDDEN, output_size=OUTPUT_SIZE,
                                  match_kernel_precision=True)
    assert jnp.allclose(out, ref_match, atol=2e-3, rtol=2e-3), \
        float(jnp.max(jnp.abs(out - ref_match)))

    # Sanity check vs the full-f32 model (bounds the bf16 edge/h cast error).
    ref_f32 = reference_forward(x, edges, params, num_edge_types=NUM_EDGE_TYPES,
                                hidden=HIDDEN, output_size=OUTPUT_SIZE,
                                match_kernel_precision=False)
    assert jnp.allclose(out, ref_f32, atol=1e-1), float(jnp.max(jnp.abs(out - ref_f32)))

    print("KERNEL_OK")
</pallas_src>

<mosaic_0001>
module attributes {stable_mosaic.version = 11 : i64} {
  func.func @trill_graph_kernel(%arg0: memref<24x128xf32, #tpu.memory_space<vmem>>, %arg1: memref<4x128x128xbf16, #tpu.memory_space<vmem>>, %arg2: memref<32x24xf32, #tpu.memory_space<vmem>>, %arg3: memref<32x1xf32, #tpu.memory_space<vmem>>, %arg4: memref<32x32xf32, #tpu.memory_space<vmem>>, %arg5: memref<32x1xf32, #tpu.memory_space<vmem>>, %arg6: memref<96x128xf32, #tpu.memory_space<vmem>>, %arg7: memref<64x32xf32, #tpu.memory_space<vmem>>, %arg8: memref<32x32xf32, #tpu.memory_space<vmem>>, %arg9: memref<32x1xf32, #tpu.memory_space<vmem>>, %arg10: memref<32x32xf32, #tpu.memory_space<vmem>>, %arg11: memref<32x1xf32, #tpu.memory_space<vmem>>, %arg12: memref<8x32xf32, #tpu.memory_space<vmem>>, %arg13: memref<8x1xf32, #tpu.memory_space<vmem>>, %arg14: memref<8x128xf32, #tpu.memory_space<vmem>>, %arg15: memref<128x128xf32, #tpu.memory_space<vmem>>) attributes {dimension_semantics = [], scalar_prefetch = 0 : i64, scratch_operands = 1 : i64, tpu.core_type = #tpu.core_type<tc>} {
    %c0 = arith.constant 0 : index
    %c0_0 = arith.constant 0 : index
    %0 = vector.load %arg0[%c0, %c0_0] : memref<24x128xf32, #tpu.memory_space<vmem>>, vector<24x128xf32>
    %c0_1 = arith.constant 0 : index
    %c0_2 = arith.constant 0 : index
    %1 = vector.load %arg2[%c0_1, %c0_2] : memref<32x24xf32, #tpu.memory_space<vmem>>, vector<32x24xf32>
    %cst = arith.constant dense<0.000000e+00> : vector<32x128xf32>
    %2 = tpu.matmul %1, %0, %cst {dimension_numbers = #tpu.dot_dimension_numbers<[1], [0], [0], [1], [0, 0, 1, 1], [], []>} : vector<32x24xf32>, vector<24x128xf32>, vector<32x128xf32> -> vector<32x128xf32>
    %c0_3 = arith.constant 0 : index
    %c0_4 = arith.constant 0 : index
    %3 = vector.load %arg3[%c0_3, %c0_4] : memref<32x1xf32, #tpu.memory_space<vmem>>, vector<32x1xf32>
    %4 = vector.broadcast %3 : vector<32x1xf32> to vector<32x128xf32>
    %5 = arith.addf %2, %4 : vector<32x128xf32>
    %cst_5 = arith.constant 0.000000e+00 : f32
    %6 = vector.broadcast %cst_5 : f32 to vector<32x128xf32>
    %7 = arith.maximumf %5, %6 : vector<32x128xf32>
    %c0_6 = arith.constant 0 : index
    %c0_7 = arith.constant 0 : index
    %8 = vector.load %arg4[%c0_6, %c0_7] : memref<32x32xf32, #tpu.memory_space<vmem>>, vector<32x32xf32>
    %cst_8 = arith.constant dense<0.000000e+00> : vector<32x128xf32>
    %9 = tpu.matmul %8, %7, %cst_8 {dimension_numbers = #tpu.dot_dimension_numbers<[1], [0], [0], [1], [0, 0, 1, 1], [], []>} : vector<32x32xf32>, vector<32x128xf32>, vector<32x128xf32> -> vector<32x128xf32>
    %c0_9 = arith.constant 0 : index
    %c0_10 = arith.constant 0 : index
    %10 = vector.load %arg5[%c0_9, %c0_10] : memref<32x1xf32, #tpu.memory_space<vmem>>, vector<32x1xf32>
    %11 = vector.broadcast %10 : vector<32x1xf32> to vector<32x128xf32>
    %12 = arith.addf %9, %11 : vector<32x128xf32>
    %cst_11 = arith.constant 0.000000e+00 : f32
    %13 = vector.broadcast %cst_11 : f32 to vector<32x128xf32>
    %14 = arith.maximumf %12, %13 : vector<32x128xf32>
    %c0_12 = arith.constant 0 : index
    %c0_13 = arith.constant 0 : index
    %15 = vector.load %arg6[%c0_12, %c0_13] : memref<96x128xf32, #tpu.memory_space<vmem>>, vector<96x128xf32>
    %c0_14 = arith.constant 0 : index
    %c0_15 = arith.constant 0 : index
    %16 = vector.load %arg7[%c0_14, %c0_15] : memref<64x32xf32, #tpu.memory_space<vmem>>, vector<64x32xf32>
    %c0_16 = arith.constant 0 : index
    %c0_17 = arith.constant 0 : index
    %17 = vector.load %arg8[%c0_16, %c0_17] : memref<32x32xf32, #tpu.memory_space<vmem>>, vector<32x32xf32>
    %c0_18 = arith.constant 0 : index
    %c0_19 = arith.constant 0 : index
    %18 = vector.load %arg9[%c0_18, %c0_19] : memref<32x1xf32, #tpu.memory_space<vmem>>, vector<32x1xf32>
    %19 = vector.shape_cast %18 : vector<32x1xf32> to vector<32x1xf32>
    %20 = vector.broadcast %19 : vector<32x1xf32> to vector<32x128xf32>
    %21 = arith.truncf %14 : vector<32x128xf32> to vector<32x128xbf16>
    %c0_20 = arith.constant 0 : index
    %c0_21 = arith.constant 0 : index
    %c0_22 = arith.constant 0 : index
    %22 = vector.load %arg1[%c0_20, %c0_21, %c0_22] : memref<4x128x128xbf16, #tpu.memory_space<vmem>>, vector<1x128x128xbf16>
    %23 = vector.shape_cast %22 : vector<1x128x128xbf16> to vector<128x128xbf16>
    %cst_23 = arith.constant dense<0.000000e+00> : vector<32x128xf32>
    %24 = tpu.matmul %21, %23, %cst_23 {dimension_numbers = #tpu.dot_dimension_numbers<[1], [0], [0], [1], [0, 0, 1, 1], [], []>} : vector<32x128xbf16>, vector<128x128xbf16>, vector<32x128xf32> -> vector<32x128xf32>
    %c0_24 = arith.constant 0 : index
    %c0_25 = arith.constant 0 : index
    %25 = vector.load %arg15[%c0_24, %c0_25] : memref<128x128xf32, #tpu.memory_space<vmem>>, vector<32x128xf32>
    tpu.vector_store %arg15[%c0_24, %c0_25], %24 {strides = array<i32>} : memref<128x128xf32, #tpu.memory_space<vmem>>, vector<32x128xf32>,
    %c1 = arith.constant 1 : index
    %c0_26 = arith.constant 0 : index
    %c0_27 = arith.constant 0 : index
    %26 = vector.load %arg1[%c1, %c0_26, %c0_27] : memref<4x128x128xbf16, #tpu.memory_space<vmem>>, vector<1x128x128xbf16>
    %27 = vector.shape_cast %26 : vector<1x128x128xbf16> to vector<128x128xbf16>
    %cst_28 = arith.constant dense<0.000000e+00> : vector<32x128xf32>
    %28 = tpu.matmul %21, %27, %cst_28 {dimension_numbers = #tpu.dot_dimension_numbers<[1], [0], [0], [1], [0, 0, 1, 1], [], []>} : vector<32x128xbf16>, vector<128x128xbf16>, vector<32x128xf32> -> vector<32x128xf32>
    %c32 = arith.constant 32 : index
    %c0_29 = arith.constant 0 : index
    %29 = vector.load %arg15[%c32, %c0_29] : memref<128x128xf32, #tpu.memory_space<vmem>>, vector<32x128xf32>
    tpu.vector_store %arg15[%c32, %c0_29], %28 {strides = array<i32>} : memref<128x128xf32, #tpu.memory_space<vmem>>, vector<32x128xf32>,
    %c2 = arith.constant 2 : index
    %c0_30 = arith.constant 0 : index
    %c0_31 = arith.constant 0 : index
    %30 = vector.load %arg1[%c2, %c0_30, %c0_31] : memref<4x128x128xbf16, #tpu.memory_space<vmem>>, vector<1x128x128xbf16>
    %31 = vector.shape_cast %30 : vector<1x128x128xbf16> to vector<128x128xbf16>
    %cst_32 = arith.constant dense<0.000000e+00> : vector<32x128xf32>
    %32 = tpu.matmul %21, %31, %cst_32 {dimension_numbers = #tpu.dot_dimension_numbers<[1], [0], [0], [1], [0, 0, 1, 1], [], []>} : vector<32x128xbf16>, vector<128x128xbf16>, vector<32x128xf32> -> vector<32x128xf32>
    %c64 = arith.constant 64 : index
    %c0_33 = arith.constant 0 : index
    %33 = vector.load %arg15[%c64, %c0_33] : memref<128x128xf32, #tpu.memory_space<vmem>>, vector<32x128xf32>
    tpu.vector_store %arg15[%c64, %c0_33], %32 {strides = array<i32>} : memref<128x128xf32, #tpu.memory_space<vmem>>, vector<32x128xf32>,
    %c3 = arith.constant 3 : index
    %c0_34 = arith.constant 0 : index
    %c0_35 = arith.constant 0 : index
    %34 = vector.load %arg1[%c3, %c0_34, %c0_35] : memref<4x128x128xbf16, #tpu.memory_space<vmem>>, vector<1x128x128xbf16>
    %35 = vector.shape_cast %34 : vector<1x128x128xbf16> to vector<128x128xbf16>
    %cst_36 = arith.constant dense<0.000000e+00> : vector<32x128xf32>
    %36 = tpu.matmul %21, %35, %cst_36 {dimension_numbers = #tpu.dot_dimension_numbers<[1], [0], [0], [1], [0, 0, 1, 1], [], []>} : vector<32x128xbf16>, vector<128x128xbf16>, vector<32x128xf32> -> vector<32x128xf32>
    %c96 = arith.constant 96 : index
    %c0_37 = arith.constant 0 : index
    %37 = vector.load %arg15[%c96, %c0_37] : memref<128x128xf32, #tpu.memory_space<vmem>>, vector<32x128xf32>
    tpu.vector_store %arg15[%c96, %c0_37], %36 {strides = array<i32>} : memref<128x128xf32, #tpu.memory_space<vmem>>, vector<32x128xf32>,
    %c0_38 = arith.constant 0 : index
    %c0_39 = arith.constant 0 : index
    %38 = vector.load %arg15[%c0_38, %c0_39] : memref<128x128xf32, #tpu.memory_space<vmem>>, vector<128x128xf32>
    %cst_40 = arith.constant dense<0.000000e+00> : vector<96x128xf32>
    %39 = tpu.matmul %15, %38, %cst_40 {dimension_numbers = #tpu.dot_dimension_numbers<[1], [0], [0], [1], [0, 0, 1, 1], [], []>} : vector<96x128xf32>, vector<128x128xf32>, vector<96x128xf32> -> vector<96x128xf32>
    %cst_41 = arith.constant dense<0.000000e+00> : vector<64x128xf32>
    %40 = tpu.matmul %16, %14, %cst_41 {dimension_numbers = #tpu.dot_dimension_numbers<[1], [0], [0], [1], [0, 0, 1, 1], [], []>} : vector<64x32xf32>, vector<32x128xf32>, vector<64x128xf32> -> vector<64x128xf32>
    %41 = vector.extract_strided_slice %39 {offsets = [0, 0], sizes = [32, 128], strides = [1, 1]} : vector<96x128xf32> to vector<32x128xf32>
    %42 = vector.extract_strided_slice %40 {offsets = [0, 0], sizes = [32, 128], strides = [1, 1]} : vector<64x128xf32> to vector<32x128xf32>
    %43 = arith.addf %41, %42 : vector<32x128xf32>
    %44 = arith.addf %43, %20 : vector<32x128xf32>
    %45 = arith.negf %44 : vector<32x128xf32>
    %46 = math.exp %45 : vector<32x128xf32>
    %cst_42 = arith.constant 1.000000e+00 : f32
    %47 = vector.broadcast %cst_42 : f32 to vector<32x128xf32>
    %48 = arith.addf %47, %46 : vector<32x128xf32>
    %49 = arith.divf %47, %48 : vector<32x128xf32>
    %50 = vector.extract_strided_slice %39 {offsets = [32, 0], sizes = [32, 128], strides = [1, 1]} : vector<96x128xf32> to vector<32x128xf32>
    %51 = vector.extract_strided_slice %40 {offsets = [32, 0], sizes = [32, 128], strides = [1, 1]} : vector<64x128xf32> to vector<32x128xf32>
    %52 = arith.addf %50, %51 : vector<32x128xf32>
    %53 = arith.negf %52 : vector<32x128xf32>
    %54 = math.exp %53 : vector<32x128xf32>
    %cst_43 = arith.constant 1.000000e+00 : f32
    %55 = vector.broadcast %cst_43 : f32 to vector<32x128xf32>
    %56 = arith.addf %55, %54 : vector<32x128xf32>
    %57 = arith.divf %55, %56 : vector<32x128xf32>
    %58 = vector.extract_strided_slice %39 {offsets = [64, 0], sizes = [32, 128], strides = [1, 1]} : vector<96x128xf32> to vector<32x128xf32>
    %59 = arith.mulf %57, %14 : vector<32x128xf32>
    %cst_44 = arith.constant dense<0.000000e+00> : vector<32x128xf32>
    %60 = tpu.matmul %17, %59, %cst_44 {dimension_numbers = #tpu.dot_dimension_numbers<[1], [0], [0], [1], [0, 0, 1, 1], [], []>} : vector<32x32xf32>, vector<32x128xf32>, vector<32x128xf32> -> vector<32x128xf32>
    %61 = arith.addf %58, %60 : vector<32x128xf32>
    %62 = math.tanh %61 : vector<32x128xf32>
    %cst_45 = arith.constant 1.000000e+00 : f32
    %63 = vector.broadcast %cst_45 : f32 to vector<32x128xf32>
    %64 = arith.subf %63, %49 : vector<32x128xf32>
    %65 = arith.mulf %64, %14 : vector<32x128xf32>
    %66 = arith.mulf %49, %62 : vector<32x128xf32>
    %67 = arith.addf %65, %66 : vector<32x128xf32>
    %68 = arith.truncf %67 : vector<32x128xf32> to vector<32x128xbf16>
    %c0_46 = arith.constant 0 : index
    %c0_47 = arith.constant 0 : index
    %c0_48 = arith.constant 0 : index
    %69 = vector.load %arg1[%c0_46, %c0_47, %c0_48] : memref<4x128x128xbf16, #tpu.memory_space<vmem>>, vector<1x128x128xbf16>
    %70 = vector.shape_cast %69 : vector<1x128x128xbf16> to vector<128x128xbf16>
    %cst_49 = arith.constant dense<0.000000e+00> : vector<32x128xf32>
    %71 = tpu.matmul %68, %70, %cst_49 {dimension_numbers = #tpu.dot_dimension_numbers<[1], [0], [0], [1], [0, 0, 1, 1], [], []>} : vector<32x128xbf16>, vector<128x128xbf16>, vector<32x128xf32> -> vector<32x128xf32>
    %c0_50 = arith.constant 0 : index
    %c0_51 = arith.constant 0 : index
    %72 = vector.load %arg15[%c0_50, %c0_51] : memref<128x128xf32, #tpu.memory_space<vmem>>, vector<32x128xf32>
    tpu.vector_store %arg15[%c0_50, %c0_51], %71 {strides = array<i32>} : memref<128x128xf32, #tpu.memory_space<vmem>>, vector<32x128xf32>,
    %c1_52 = arith.constant 1 : index
    %c0_53 = arith.constant 0 : index
    %c0_54 = arith.constant 0 : index
    %73 = vector.load %arg1[%c1_52, %c0_53, %c0_54] : memref<4x128x128xbf16, #tpu.memory_space<vmem>>, vector<1x128x128xbf16>
    %74 = vector.shape_cast %73 : vector<1x128x128xbf16> to vector<128x128xbf16>
    %cst_55 = arith.constant dense<0.000000e+00> : vector<32x128xf32>
    %75 = tpu.matmul %68, %74, %cst_55 {dimension_numbers = #tpu.dot_dimension_numbers<[1], [0], [0], [1], [0, 0, 1, 1], [], []>} : vector<32x128xbf16>, vector<128x128xbf16>, vector<32x128xf32> -> vector<32x128xf32>
    %c32_56 = arith.constant 32 : index
    %c0_57 = arith.constant 0 : index
    %76 = vector.load %arg15[%c32_56, %c0_57] : memref<128x128xf32, #tpu.memory_space<vmem>>, vector<32x128xf32>
    tpu.vector_store %arg15[%c32_56, %c0_57], %75 {strides = array<i32>} : memref<128x128xf32, #tpu.memory_space<vmem>>, vector<32x128xf32>,
    %c2_58 = arith.constant 2 : index
    %c0_59 = arith.constant 0 : index
    %c0_60 = arith.constant 0 : index
    %77 = vector.load %arg1[%c2_58, %c0_59, %c0_60] : memref<4x128x128xbf16, #tpu.memory_space<vmem>>, vector<1x128x128xbf16>
    %78 = vector.shape_cast %77 : vector<1x128x128xbf16> to vector<128x128xbf16>
    %cst_61 = arith.constant dense<0.000000e+00> : vector<32x128xf32>
    %79 = tpu.matmul %68, %78, %cst_61 {dimension_numbers = #tpu.dot_dimension_numbers<[1], [0], [0], [1], [0, 0, 1, 1], [], []>} : vector<32x128xbf16>, vector<128x128xbf16>, vector<32x128xf32> -> vector<32x128xf32>
    %c64_62 = arith.constant 64 : index
    %c0_63 = arith.constant 0 : index
    %80 = vector.load %arg15[%c64_62, %c0_63] : memref<128x128xf32, #tpu.memory_space<vmem>>, vector<32x128xf32>
    tpu.vector_store %arg15[%c64_62, %c0_63], %79 {strides = array<i32>} : memref<128x128xf32, #tpu.memory_space<vmem>>, vector<32x128xf32>,
    %c3_64 = arith.constant 3 : index
    %c0_65 = arith.constant 0 : index
    %c0_66 = arith.constant 0 : index
    %81 = vector.load %arg1[%c3_64, %c0_65, %c0_66] : memref<4x128x128xbf16, #tpu.memory_space<vmem>>, vector<1x128x128xbf16>
    %82 = vector.shape_cast %81 : vector<1x128x128xbf16> to vector<128x128xbf16>
    %cst_67 = arith.constant dense<0.000000e+00> : vector<32x128xf32>
    %83 = tpu.matmul %68, %82, %cst_67 {dimension_numbers = #tpu.dot_dimension_numbers<[1], [0], [0], [1], [0, 0, 1, 1], [], []>} : vector<32x128xbf16>, vector<128x128xbf16>, vector<32x128xf32> -> vector<32x128xf32>
    %c96_68 = arith.constant 96 : index
    %c0_69 = arith.constant 0 : index
    %84 = vector.load %arg15[%c96_68, %c0_69] : memref<128x128xf32, #tpu.memory_space<vmem>>, vector<32x128xf32>
    tpu.vector_store %arg15[%c96_68, %c0_69], %83 {strides = array<i32>} : memref<128x128xf32, #tpu.memory_space<vmem>>, vector<32x128xf32>,
    %c0_70 = arith.constant 0 : index
    %c0_71 = arith.constant 0 : index
    %85 = vector.load %arg15[%c0_70, %c0_71] : memref<128x128xf32, #tpu.memory_space<vmem>>, vector<128x128xf32>
    %cst_72 = arith.constant dense<0.000000e+00> : vector<96x128xf32>
    %86 = tpu.matmul %15, %85, %cst_72 {dimension_numbers = #tpu.dot_dimension_numbers<[1], [0], [0], [1], [0, 0, 1, 1], [], []>} : vector<96x128xf32>, vector<128x128xf32>, vector<96x128xf32> -> vector<96x128xf32>
    %cst_73 = arith.constant dense<0.000000e+00> : vector<64x128xf32>
    %87 = tpu.matmul %16, %67, %cst_73 {dimension_numbers = #tpu.dot_dimension_numbers<[1], [0], [0], [1], [0, 0, 1, 1], [], []>} : vector<64x32xf32>, vector<32x128xf32>, vector<64x128xf32> -> vector<64x128xf32>
    %88 = vector.extract_strided_slice %86 {offsets = [0, 0], sizes = [32, 128], strides = [1, 1]} : vector<96x128xf32> to vector<32x128xf32>
    %89 = vector.extract_strided_slice %87 {offsets = [0, 0], sizes = [32, 128], strides = [1, 1]} : vector<64x128xf32> to vector<32x128xf32>
    %90 = arith.addf %88, %89 : vector<32x128xf32>
    %91 = arith.addf %90, %20 : vector<32x128xf32>
    %92 = arith.negf %91 : vector<32x128xf32>
    %93 = math.exp %92 : vector<32x128xf32>
    %cst_74 = arith.constant 1.000000e+00 : f32
    %94 = vector.broadcast %cst_74 : f32 to vector<32x128xf32>
    %95 = arith.addf %94, %93 : vector<32x128xf32>
    %96 = arith.divf %94, %95 : vector<32x128xf32>
    %97 = vector.extract_strided_slice %86 {offsets = [32, 0], sizes = [32, 128], strides = [1, 1]} : vector<96x128xf32> to vector<32x128xf32>
    %98 = vector.extract_strided_slice %87 {offsets = [32, 0], sizes = [32, 128], strides = [1, 1]} : vector<64x128xf32> to vector<32x128xf32>
    %99 = arith.addf %97, %98 : vector<32x128xf32>
    %100 = arith.negf %99 : vector<32x128xf32>
    %101 = math.exp %100 : vector<32x128xf32>
    %cst_75 = arith.constant 1.000000e+00 : f32
    %102 = vector.broadcast %cst_75 : f32 to vector<32x128xf32>
    %103 = arith.addf %102, %101 : vector<32x128xf32>
    %104 = arith.divf %102, %103 : vector<32x128xf32>
    %105 = vector.extract_strided_slice %86 {offsets = [64, 0], sizes = [32, 128], strides = [1, 1]} : vector<96x128xf32> to vector<32x128xf32>
    %106 = arith.mulf %104, %67 : vector<32x128xf32>
    %cst_76 = arith.constant dense<0.000000e+00> : vector<32x128xf32>
    %107 = tpu.matmul %17, %106, %cst_76 {dimension_numbers = #tpu.dot_dimension_numbers<[1], [0], [0], [1], [0, 0, 1, 1], [], []>} : vector<32x32xf32>, vector<32x128xf32>, vector<32x128xf32> -> vector<32x128xf32>
    %108 = arith.addf %105, %107 : vector<32x128xf32>
    %109 = math.tanh %108 : vector<32x128xf32>
    %cst_77 = arith.constant 1.000000e+00 : f32
    %110 = vector.broadcast %cst_77 : f32 to vector<32x128xf32>
    %111 = arith.subf %110, %96 : vector<32x128xf32>
    %112 = arith.mulf %111, %67 : vector<32x128xf32>
    %113 = arith.mulf %96, %109 : vector<32x128xf32>
    %114 = arith.addf %112, %113 : vector<32x128xf32>
    %115 = arith.truncf %114 : vector<32x128xf32> to vector<32x128xbf16>
    %c0_78 = arith.constant 0 : index
    %c0_79 = arith.constant 0 : index
    %c0_80 = arith.constant 0 : index
    %116 = vector.load %arg1[%c0_78, %c0_79, %c0_80] : memref<4x128x128xbf16, #tpu.memory_space<vmem>>, vector<1x128x128xbf16>
    %117 = vector.shape_cast %116 : vector<1x128x128xbf16> to vector<128x128xbf16>
    %cst_81 = arith.constant dense<0.000000e+00> : vector<32x128xf32>
    %118 = tpu.matmul %115, %117, %cst_81 {dimension_numbers = #tpu.dot_dimension_numbers<[1], [0], [0], [1], [0, 0, 1, 1], [], []>} : vector<32x128xbf16>, vector<128x128xbf16>, vector<32x128xf32> -> vector<32x128xf32>
    %c0_82 = arith.constant 0 : index
    %c0_83 = arith.constant 0 : index
    %119 = vector.load %arg15[%c0_82, %c0_83] : memref<128x128xf32, #tpu.memory_space<vmem>>, vector<32x128xf32>
    tpu.vector_store %arg15[%c0_82, %c0_83], %118 {strides = array<i32>} : memref<128x128xf32, #tpu.memory_space<vmem>>, vector<32x128xf32>,
    %c1_84 = arith.constant 1 : index
    %c0_85 = arith.constant 0 : index
    %c0_86 = arith.constant 0 : index
    %120 = vector.load %arg1[%c1_84, %c0_85, %c0_86] : memref<4x128x128xbf16, #tpu.memory_space<vmem>>, vector<1x128x128xbf16>
    %121 = vector.shape_cast %120 : vector<1x128x128xbf16> to vector<128x128xbf16>
    %cst_87 = arith.constant dense<0.000000e+00> : vector<32x128xf32>
    %122 = tpu.matmul %115, %121, %cst_87 {dimension_numbers = #tpu.dot_dimension_numbers<[1], [0], [0], [1], [0, 0, 1, 1], [], []>} : vector<32x128xbf16>, vector<128x128xbf16>, vector<32x128xf32> -> vector<32x128xf32>
    %c32_88 = arith.constant 32 : index
    %c0_89 = arith.constant 0 : index
    %123 = vector.load %arg15[%c32_88, %c0_89] : memref<128x128xf32, #tpu.memory_space<vmem>>, vector<32x128xf32>
    tpu.vector_store %arg15[%c32_88, %c0_89], %122 {strides = array<i32>} : memref<128x128xf32, #tpu.memory_space<vmem>>, vector<32x128xf32>,
    %c2_90 = arith.constant 2 : index
    %c0_91 = arith.constant 0 : index
    %c0_92 = arith.constant 0 : index
    %124 = vector.load %arg1[%c2_90, %c0_91, %c0_92] : memref<4x128x128xbf16, #tpu.memory_space<vmem>>, vector<1x128x128xbf16>
    %125 = vector.shape_cast %124 : vector<1x128x128xbf16> to vector<128x128xbf16>
    %cst_93 = arith.constant dense<0.000000e+00> : vector<32x128xf32>
    %126 = tpu.matmul %115, %125, %cst_93 {dimension_numbers = #tpu.dot_dimension_numbers<[1], [0], [0], [1], [0, 0, 1, 1], [], []>} : vector<32x128xbf16>, vector<128x128xbf16>, vector<32x128xf32> -> vector<32x128xf32>
    %c64_94 = arith.constant 64 : index
    %c0_95 = arith.constant 0 : index
    %127 = vector.load %arg15[%c64_94, %c0_95] : memref<128x128xf32, #tpu.memory_space<vmem>>, vector<32x128xf32>
    tpu.vector_store %arg15[%c64_94, %c0_95], %126 {strides = array<i32>} : memref<128x128xf32, #tpu.memory_space<vmem>>, vector<32x128xf32>,
    %c3_96 = arith.constant 3 : index
    %c0_97 = arith.constant 0 : index
    %c0_98 = arith.constant 0 : index
    %128 = vector.load %arg1[%c3_96, %c0_97, %c0_98] : memref<4x128x128xbf16, #tpu.memory_space<vmem>>, vector<1x128x128xbf16>
    %129 = vector.shape_cast %128 : vector<1x128x128xbf16> to vector<128x128xbf16>
    %cst_99 = arith.constant dense<0.000000e+00> : vector<32x128xf32>
    %130 = tpu.matmul %115, %129, %cst_99 {dimension_numbers = #tpu.dot_dimension_numbers<[1], [0], [0], [1], [0, 0, 1, 1], [], []>} : vector<32x128xbf16>, vector<128x128xbf16>, vector<32x128xf32> -> vector<32x128xf32>
    %c96_100 = arith.constant 96 : index
    %c0_101 = arith.constant 0 : index
    %131 = vector.load %arg15[%c96_100, %c0_101] : memref<128x128xf32, #tpu.memory_space<vmem>>, vector<32x128xf32>
    tpu.vector_store %arg15[%c96_100, %c0_101], %130 {strides = array<i32>} : memref<128x128xf32, #tpu.memory_space<vmem>>, vector<32x128xf32>,
    %c0_102 = arith.constant 0 : index
    %c0_103 = arith.constant 0 : index
    %132 = vector.load %arg15[%c0_102, %c0_103] : memref<128x128xf32, #tpu.memory_space<vmem>>, vector<128x128xf32>
    %cst_104 = arith.constant dense<0.000000e+00> : vector<96x128xf32>
    %133 = tpu.matmul %15, %132, %cst_104 {dimension_numbers = #tpu.dot_dimension_numbers<[1], [0], [0], [1], [0, 0, 1, 1], [], []>} : vector<96x128xf32>, vector<128x128xf32>, vector<96x128xf32> -> vector<96x128xf32>
    %cst_105 = arith.constant dense<0.000000e+00> : vector<64x128xf32>
    %134 = tpu.matmul %16, %114, %cst_105 {dimension_numbers = #tpu.dot_dimension_numbers<[1], [0], [0], [1], [0, 0, 1, 1], [], []>} : vector<64x32xf32>, vector<32x128xf32>, vector<64x128xf32> -> vector<64x128xf32>
    %135 = vector.extract_strided_slice %133 {offsets = [0, 0], sizes = [32, 128], strides = [1, 1]} : vector<96x128xf32> to vector<32x128xf32>
    %136 = vector.extract_strided_slice %134 {offsets = [0, 0], sizes = [32, 128], strides = [1, 1]} : vector<64x128xf32> to vector<32x128xf32>
    %137 = arith.addf %135, %136 : vector<32x128xf32>
    %138 = arith.addf %137, %20 : vector<32x128xf32>
    %139 = arith.negf %138 : vector<32x128xf32>
    %140 = math.exp %139 : vector<32x128xf32>
    %cst_106 = arith.constant 1.000000e+00 : f32
    %141 = vector.broadcast %cst_106 : f32 to vector<32x128xf32>
    %142 = arith.addf %141, %140 : vector<32x128xf32>
    %143 = arith.divf %141, %142 : vector<32x128xf32>
    %144 = vector.extract_strided_slice %133 {offsets = [32, 0], sizes = [32, 128], strides = [1, 1]} : vector<96x128xf32> to vector<32x128xf32>
    %145 = vector.extract_strided_slice %134 {offsets = [32, 0], sizes = [32, 128], strides = [1, 1]} : vector<64x128xf32> to vector<32x128xf32>
    %146 = arith.addf %144, %145 : vector<32x128xf32>
    %147 = arith.negf %146 : vector<32x128xf32>
    %148 = math.exp %147 : vector<32x128xf32>
    %cst_107 = arith.constant 1.000000e+00 : f32
    %149 = vector.broadcast %cst_107 : f32 to vector<32x128xf32>
    %150 = arith.addf %149, %148 : vector<32x128xf32>
    %151 = arith.divf %149, %150 : vector<32x128xf32>
    %152 = vector.extract_strided_slice %133 {offsets = [64, 0], sizes = [32, 128], strides = [1, 1]} : vector<96x128xf32> to vector<32x128xf32>
    %153 = arith.mulf %151, %114 : vector<32x128xf32>
    %cst_108 = arith.constant dense<0.000000e+00> : vector<32x128xf32>
    %154 = tpu.matmul %17, %153, %cst_108 {dimension_numbers = #tpu.dot_dimension_numbers<[1], [0], [0], [1], [0, 0, 1, 1], [], []>} : vector<32x32xf32>, vector<32x128xf32>, vector<32x128xf32> -> vector<32x128xf32>
    %155 = arith.addf %152, %154 : vector<32x128xf32>
    %156 = math.tanh %155 : vector<32x128xf32>
    %cst_109 = arith.constant 1.000000e+00 : f32
    %157 = vector.broadcast %cst_109 : f32 to vector<32x128xf32>
    %158 = arith.subf %157, %143 : vector<32x128xf32>
    %159 = arith.mulf %158, %114 : vector<32x128xf32>
    %160 = arith.mulf %143, %156 : vector<32x128xf32>
    %161 = arith.addf %159, %160 : vector<32x128xf32>
    %162 = arith.truncf %161 : vector<32x128xf32> to vector<32x128xbf16>
    %c0_110 = arith.constant 0 : index
    %c0_111 = arith.constant 0 : index
    %c0_112 = arith.constant 0 : index
    %163 = vector.load %arg1[%c0_110, %c0_111, %c0_112] : memref<4x128x128xbf16, #tpu.memory_space<vmem>>, vector<1x128x128xbf16>
    %164 = vector.shape_cast %163 : vector<1x128x128xbf16> to vector<128x128xbf16>
    %cst_113 = arith.constant dense<0.000000e+00> : vector<32x128xf32>
    %165 = tpu.matmul %162, %164, %cst_113 {dimension_numbers = #tpu.dot_dimension_numbers<[1], [0], [0], [1], [0, 0, 1, 1], [], []>} : vector<32x128xbf16>, vector<128x128xbf16>, vector<32x128xf32> -> vector<32x128xf32>
    %c0_114 = arith.constant 0 : index
    %c0_115 = arith.constant 0 : index
    %166 = vector.load %arg15[%c0_114, %c0_115] : memref<128x128xf32, #tpu.memory_space<vmem>>, vector<32x128xf32>
    tpu.vector_store %arg15[%c0_114, %c0_115], %165 {strides = array<i32>} : memref<128x128xf32, #tpu.memory_space<vmem>>, vector<32x128xf32>,
    %c1_116 = arith.constant 1 : index
    %c0_117 = arith.constant 0 : index
    %c0_118 = arith.constant 0 : index
    %167 = vector.load %arg1[%c1_116, %c0_117, %c0_118] : memref<4x128x128xbf16, #tpu.memory_space<vmem>>, vector<1x128x128xbf16>
    %168 = vector.shape_cast %167 : vector<1x128x128xbf16> to vector<128x128xbf16>
    %cst_119 = arith.constant dense<0.000000e+00> : vector<32x128xf32>
    %169 = tpu.matmul %162, %168, %cst_119 {dimension_numbers = #tpu.dot_dimension_numbers<[1], [0], [0], [1], [0, 0, 1, 1], [], []>} : vector<32x128xbf16>, vector<128x128xbf16>, vector<32x128xf32> -> vector<32x128xf32>
    %c32_120 = arith.constant 32 : index
    %c0_121 = arith.constant 0 : index
    %170 = vector.load %arg15[%c32_120, %c0_121] : memref<128x128xf32, #tpu.memory_space<vmem>>, vector<32x128xf32>
    tpu.vector_store %arg15[%c32_120, %c0_121], %169 {strides = array<i32>} : memref<128x128xf32, #tpu.memory_space<vmem>>, vector<32x128xf32>,
    %c2_122 = arith.constant 2 : index
    %c0_123 = arith.constant 0 : index
    %c0_124 = arith.constant 0 : index
    %171 = vector.load %arg1[%c2_122, %c0_123, %c0_124] : memref<4x128x128xbf16, #tpu.memory_space<vmem>>, vector<1x128x128xbf16>
    %172 = vector.shape_cast %171 : vector<1x128x128xbf16> to vector<128x128xbf16>
    %cst_125 = arith.constant dense<0.000000e+00> : vector<32x128xf32>
    %173 = tpu.matmul %162, %172, %cst_125 {dimension_numbers = #tpu.dot_dimension_numbers<[1], [0], [0], [1], [0, 0, 1, 1], [], []>} : vector<32x128xbf16>, vector<128x128xbf16>, vector<32x128xf32> -> vector<32x128xf32>
    %c64_126 = arith.constant 64 : index
    %c0_127 = arith.constant 0 : index
    %174 = vector.load %arg15[%c64_126, %c0_127] : memref<128x128xf32, #tpu.memory_space<vmem>>, vector<32x128xf32>
    tpu.vector_store %arg15[%c64_126, %c0_127], %173 {strides = array<i32>} : memref<128x128xf32, #tpu.memory_space<vmem>>, vector<32x128xf32>,
    %c3_128 = arith.constant 3 : index
    %c0_129 = arith.constant 0 : index
    %c0_130 = arith.constant 0 : index
    %175 = vector.load %arg1[%c3_128, %c0_129, %c0_130] : memref<4x128x128xbf16, #tpu.memory_space<vmem>>, vector<1x128x128xbf16>
    %176 = vector.shape_cast %175 : vector<1x128x128xbf16> to vector<128x128xbf16>
    %cst_131 = arith.constant dense<0.000000e+00> : vector<32x128xf32>
    %177 = tpu.matmul %162, %176, %cst_131 {dimension_numbers = #tpu.dot_dimension_numbers<[1], [0], [0], [1], [0, 0, 1, 1], [], []>} : vector<32x128xbf16>, vector<128x128xbf16>, vector<32x128xf32> -> vector<32x128xf32>
    %c96_132 = arith.constant 96 : index
    %c0_133 = arith.constant 0 : index
    %178 = vector.load %arg15[%c96_132, %c0_133] : memref<128x128xf32, #tpu.memory_space<vmem>>, vector<32x128xf32>
    tpu.vector_store %arg15[%c96_132, %c0_133], %177 {strides = array<i32>} : memref<128x128xf32, #tpu.memory_space<vmem>>, vector<32x128xf32>,
    %c0_134 = arith.constant 0 : index
    %c0_135 = arith.constant 0 : index
    %179 = vector.load %arg15[%c0_134, %c0_135] : memref<128x128xf32, #tpu.memory_space<vmem>>, vector<128x128xf32>
    %cst_136 = arith.constant dense<0.000000e+00> : vector<96x128xf32>
    %180 = tpu.matmul %15, %179, %cst_136 {dimension_numbers = #tpu.dot_dimension_numbers<[1], [0], [0], [1], [0, 0, 1, 1], [], []>} : vector<96x128xf32>, vector<128x128xf32>, vector<96x128xf32> -> vector<96x128xf32>
    %cst_137 = arith.constant dense<0.000000e+00> : vector<64x128xf32>
    %181 = tpu.matmul %16, %161, %cst_137 {dimension_numbers = #tpu.dot_dimension_numbers<[1], [0], [0], [1], [0, 0, 1, 1], [], []>} : vector<64x32xf32>, vector<32x128xf32>, vector<64x128xf32> -> vector<64x128xf32>
    %182 = vector.extract_strided_slice %180 {offsets = [0, 0], sizes = [32, 128], strides = [1, 1]} : vector<96x128xf32> to vector<32x128xf32>
    %183 = vector.extract_strided_slice %181 {offsets = [0, 0], sizes = [32, 128], strides = [1, 1]} : vector<64x128xf32> to vector<32x128xf32>
    %184 = arith.addf %182, %183 : vector<32x128xf32>
    %185 = arith.addf %184, %20 : vector<32x128xf32>
    %186 = arith.negf %185 : vector<32x128xf32>
    %187 = math.exp %186 : vector<32x128xf32>
    %cst_138 = arith.constant 1.000000e+00 : f32
    %188 = vector.broadcast %cst_138 : f32 to vector<32x128xf32>
    %189 = arith.addf %188, %187 : vector<32x128xf32>
    %190 = arith.divf %188, %189 : vector<32x128xf32>
    %191 = vector.extract_strided_slice %180 {offsets = [32, 0], sizes = [32, 128], strides = [1, 1]} : vector<96x128xf32> to vector<32x128xf32>
    %192 = vector.extract_strided_slice %181 {offsets = [32, 0], sizes = [32, 128], strides = [1, 1]} : vector<64x128xf32> to vector<32x128xf32>
    %193 = arith.addf %191, %192 : vector<32x128xf32>
    %194 = arith.negf %193 : vector<32x128xf32>
    %195 = math.exp %194 : vector<32x128xf32>
    %cst_139 = arith.constant 1.000000e+00 : f32
    %196 = vector.broadcast %cst_139 : f32 to vector<32x128xf32>
    %197 = arith.addf %196, %195 : vector<32x128xf32>
    %198 = arith.divf %196, %197 : vector<32x128xf32>
    %199 = vector.extract_strided_slice %180 {offsets = [64, 0], sizes = [32, 128], strides = [1, 1]} : vector<96x128xf32> to vector<32x128xf32>
    %200 = arith.mulf %198, %161 : vector<32x128xf32>
    %cst_140 = arith.constant dense<0.000000e+00> : vector<32x128xf32>
    %201 = tpu.matmul %17, %200, %cst_140 {dimension_numbers = #tpu.dot_dimension_numbers<[1], [0], [0], [1], [0, 0, 1, 1], [], []>} : vector<32x32xf32>, vector<32x128xf32>, vector<32x128xf32> -> vector<32x128xf32>
    %202 = arith.addf %199, %201 : vector<32x128xf32>
    %203 = math.tanh %202 : vector<32x128xf32>
    %cst_141 = arith.constant 1.000000e+00 : f32
    %204 = vector.broadcast %cst_141 : f32 to vector<32x128xf32>
    %205 = arith.subf %204, %190 : vector<32x128xf32>
    %206 = arith.mulf %205, %161 : vector<32x128xf32>
    %207 = arith.mulf %190, %203 : vector<32x128xf32>
    %208 = arith.addf %206, %207 : vector<32x128xf32>
    %209 = arith.truncf %208 : vector<32x128xf32> to vector<32x128xbf16>
    %c0_142 = arith.constant 0 : index
    %c0_143 = arith.constant 0 : index
    %c0_144 = arith.constant 0 : index
    %210 = vector.load %arg1[%c0_142, %c0_143, %c0_144] : memref<4x128x128xbf16, #tpu.memory_space<vmem>>, vector<1x128x128xbf16>
    %211 = vector.shape_cast %210 : vector<1x128x128xbf16> to vector<128x128xbf16>
    %cst_145 = arith.constant dense<0.000000e+00> : vector<32x128xf32>
    %212 = tpu.matmul %209, %211, %cst_145 {dimension_numbers = #tpu.dot_dimension_numbers<[1], [0], [0], [1], [0, 0, 1, 1], [], []>} : vector<32x128xbf16>, vector<128x128xbf16>, vector<32x128xf32> -> vector<32x128xf32>
    %c0_146 = arith.constant 0 : index
    %c0_147 = arith.constant 0 : index
    %213 = vector.load %arg15[%c0_146, %c0_147] : memref<128x128xf32, #tpu.memory_space<vmem>>, vector<32x128xf32>
    tpu.vector_store %arg15[%c0_146, %c0_147], %212 {strides = array<i32>} : memref<128x128xf32, #tpu.memory_space<vmem>>, vector<32x128xf32>,
    %c1_148 = arith.constant 1 : index
    %c0_149 = arith.constant 0 : index
    %c0_150 = arith.constant 0 : index
    %214 = vector.load %arg1[%c1_148, %c0_149, %c0_150] : memref<4x128x128xbf16, #tpu.memory_space<vmem>>, vector<1x128x128xbf16>
    %215 = vector.shape_cast %214 : vector<1x128x128xbf16> to vector<128x128xbf16>
    %cst_151 = arith.constant dense<0.000000e+00> : vector<32x128xf32>
    %216 = tpu.matmul %209, %215, %cst_151 {dimension_numbers = #tpu.dot_dimension_numbers<[1], [0], [0], [1], [0, 0, 1, 1], [], []>} : vector<32x128xbf16>, vector<128x128xbf16>, vector<32x128xf32> -> vector<32x128xf32>
    %c32_152 = arith.constant 32 : index
    %c0_153 = arith.constant 0 : index
    %217 = vector.load %arg15[%c32_152, %c0_153] : memref<128x128xf32, #tpu.memory_space<vmem>>, vector<32x128xf32>
    tpu.vector_store %arg15[%c32_152, %c0_153], %216 {strides = array<i32>} : memref<128x128xf32, #tpu.memory_space<vmem>>, vector<32x128xf32>,
    %c2_154 = arith.constant 2 : index
    %c0_155 = arith.constant 0 : index
    %c0_156 = arith.constant 0 : index
    %218 = vector.load %arg1[%c2_154, %c0_155, %c0_156] : memref<4x128x128xbf16, #tpu.memory_space<vmem>>, vector<1x128x128xbf16>
    %219 = vector.shape_cast %218 : vector<1x128x128xbf16> to vector<128x128xbf16>
    %cst_157 = arith.constant dense<0.000000e+00> : vector<32x128xf32>
    %220 = tpu.matmul %209, %219, %cst_157 {dimension_numbers = #tpu.dot_dimension_numbers<[1], [0], [0], [1], [0, 0, 1, 1], [], []>} : vector<32x128xbf16>, vector<128x128xbf16>, vector<32x128xf32> -> vector<32x128xf32>
    %c64_158 = arith.constant 64 : index
    %c0_159 = arith.constant 0 : index
    %221 = vector.load %arg15[%c64_158, %c0_159] : memref<128x128xf32, #tpu.memory_space<vmem>>, vector<32x128xf32>
    tpu.vector_store %arg15[%c64_158, %c0_159], %220 {strides = array<i32>} : memref<128x128xf32, #tpu.memory_space<vmem>>, vector<32x128xf32>,
    %c3_160 = arith.constant 3 : index
    %c0_161 = arith.constant 0 : index
    %c0_162 = arith.constant 0 : index
    %222 = vector.load %arg1[%c3_160, %c0_161, %c0_162] : memref<4x128x128xbf16, #tpu.memory_space<vmem>>, vector<1x128x128xbf16>
    %223 = vector.shape_cast %222 : vector<1x128x128xbf16> to vector<128x128xbf16>
    %cst_163 = arith.constant dense<0.000000e+00> : vector<32x128xf32>
    %224 = tpu.matmul %209, %223, %cst_163 {dimension_numbers = #tpu.dot_dimension_numbers<[1], [0], [0], [1], [0, 0, 1, 1], [], []>} : vector<32x128xbf16>, vector<128x128xbf16>, vector<32x128xf32> -> vector<32x128xf32>
    %c96_164 = arith.constant 96 : index
    %c0_165 = arith.constant 0 : index
    %225 = vector.load %arg15[%c96_164, %c0_165] : memref<128x128xf32, #tpu.memory_space<vmem>>, vector<32x128xf32>
    tpu.vector_store %arg15[%c96_164, %c0_165], %224 {strides = array<i32>} : memref<128x128xf32, #tpu.memory_space<vmem>>, vector<32x128xf32>,
    %c0_166 = arith.constant 0 : index
    %c0_167 = arith.constant 0 : index
    %226 = vector.load %arg15[%c0_166, %c0_167] : memref<128x128xf32, #tpu.memory_space<vmem>>, vector<128x128xf32>
    %cst_168 = arith.constant dense<0.000000e+00> : vector<96x128xf32>
    %227 = tpu.matmul %15, %226, %cst_168 {dimension_numbers = #tpu.dot_dimension_numbers<[1], [0], [0], [1], [0, 0, 1, 1], [], []>} : vector<96x128xf32>, vector<128x128xf32>, vector<96x128xf32> -> vector<96x128xf32>
    %cst_169 = arith.constant dense<0.000000e+00> : vector<64x128xf32>
    %228 = tpu.matmul %16, %208, %cst_169 {dimension_numbers = #tpu.dot_dimension_numbers<[1], [0], [0], [1], [0, 0, 1, 1], [], []>} : vector<64x32xf32>, vector<32x128xf32>, vector<64x128xf32> -> vector<64x128xf32>
    %229 = vector.extract_strided_slice %227 {offsets = [0, 0], sizes = [32, 128], strides = [1, 1]} : vector<96x128xf32> to vector<32x128xf32>
    %230 = vector.extract_strided_slice %228 {offsets = [0, 0], sizes = [32, 128], strides = [1, 1]} : vector<64x128xf32> to vector<32x128xf32>
    %231 = arith.addf %229, %230 : vector<32x128xf32>
    %232 = arith.addf %231, %20 : vector<32x128xf32>
    %233 = arith.negf %232 : vector<32x128xf32>
    %234 = math.exp %233 : vector<32x128xf32>
    %cst_170 = arith.constant 1.000000e+00 : f32
    %235 = vector.broadcast %cst_170 : f32 to vector<32x128xf32>
    %236 = arith.addf %235, %234 : vector<32x128xf32>
    %237 = arith.divf %235, %236 : vector<32x128xf32>
    %238 = vector.extract_strided_slice %227 {offsets = [32, 0], sizes = [32, 128], strides = [1, 1]} : vector<96x128xf32> to vector<32x128xf32>
    %239 = vector.extract_strided_slice %228 {offsets = [32, 0], sizes = [32, 128], strides = [1, 1]} : vector<64x128xf32> to vector<32x128xf32>
    %240 = arith.addf %238, %239 : vector<32x128xf32>
    %241 = arith.negf %240 : vector<32x128xf32>
    %242 = math.exp %241 : vector<32x128xf32>
    %cst_171 = arith.constant 1.000000e+00 : f32
    %243 = vector.broadcast %cst_171 : f32 to vector<32x128xf32>
    %244 = arith.addf %243, %242 : vector<32x128xf32>
    %245 = arith.divf %243, %244 : vector<32x128xf32>
    %246 = vector.extract_strided_slice %227 {offsets = [64, 0], sizes = [32, 128], strides = [1, 1]} : vector<96x128xf32> to vector<32x128xf32>
    %247 = arith.mulf %245, %208 : vector<32x128xf32>
    %cst_172 = arith.constant dense<0.000000e+00> : vector<32x128xf32>
    %248 = tpu.matmul %17, %247, %cst_172 {dimension_numbers = #tpu.dot_dimension_numbers<[1], [0], [0], [1], [0, 0, 1, 1], [], []>} : vector<32x32xf32>, vector<32x128xf32>, vector<32x128xf32> -> vector<32x128xf32>
    %249 = arith.addf %246, %248 : vector<32x128xf32>
    %250 = math.tanh %249 : vector<32x128xf32>
    %cst_173 = arith.constant 1.000000e+00 : f32
    %251 = vector.broadcast %cst_173 : f32 to vector<32x128xf32>
    %252 = arith.subf %251, %237 : vector<32x128xf32>
    %253 = arith.mulf %252, %208 : vector<32x128xf32>
    %254 = arith.mulf %237, %250 : vector<32x128xf32>
    %255 = arith.addf %253, %254 : vector<32x128xf32>
    %c0_174 = arith.constant 0 : index
    %c0_175 = arith.constant 0 : index
    %256 = vector.load %arg10[%c0_174, %c0_175] : memref<32x32xf32, #tpu.memory_space<vmem>>, vector<32x32xf32>
    %cst_176 = arith.constant dense<0.000000e+00> : vector<32x128xf32>
    %257 = tpu.matmul %256, %255, %cst_176 {dimension_numbers = #tpu.dot_dimension_numbers<[1], [0], [0], [1], [0, 0, 1, 1], [], []>} : vector<32x32xf32>, vector<32x128xf32>, vector<32x128xf32> -> vector<32x128xf32>
    %c0_177 = arith.constant 0 : index
    %c0_178 = arith.constant 0 : index
    %258 = vector.load %arg11[%c0_177, %c0_178] : memref<32x1xf32, #tpu.memory_space<vmem>>, vector<32x1xf32>
    %259 = vector.broadcast %258 : vector<32x1xf32> to vector<32x128xf32>
    %260 = arith.addf %257, %259 : vector<32x128xf32>
    %cst_179 = arith.constant 0.000000e+00 : f32
    %261 = vector.broadcast %cst_179 : f32 to vector<32x128xf32>
    %262 = arith.maximumf %260, %261 : vector<32x128xf32>
    %c0_180 = arith.constant 0 : index
    %c0_181 = arith.constant 0 : index
    %263 = vector.load %arg12[%c0_180, %c0_181] : memref<8x32xf32, #tpu.memory_space<vmem>>, vector<8x32xf32>
    %cst_182 = arith.constant dense<0.000000e+00> : vector<8x128xf32>
    %264 = tpu.matmul %263, %262, %cst_182 {dimension_numbers = #tpu.dot_dimension_numbers<[1], [0], [0], [1], [0, 0, 1, 1], [], []>} : vector<8x32xf32>, vector<32x128xf32>, vector<8x128xf32> -> vector<8x128xf32>
    %c0_183 = arith.constant 0 : index
    %c0_184 = arith.constant 0 : index
    %265 = vector.load %arg13[%c0_183, %c0_184] : memref<8x1xf32, #tpu.memory_space<vmem>>, vector<8x1xf32>
    %266 = vector.broadcast %265 : vector<8x1xf32> to vector<8x128xf32>
    %267 = arith.addf %264, %266 : vector<8x128xf32>
    %268 = arith.negf %267 : vector<8x128xf32>
    %269 = math.exp %268 : vector<8x128xf32>
    %cst_185 = arith.constant 1.000000e+00 : f32
    %270 = vector.broadcast %cst_185 : f32 to vector<8x128xf32>
    %271 = arith.addf %270, %269 : vector<8x128xf32>
    %272 = arith.divf %270, %271 : vector<8x128xf32>
    %c0_186 = arith.constant 0 : index
    %c0_187 = arith.constant 0 : index
    %273 = vector.load %arg14[%c0_186, %c0_187] : memref<8x128xf32, #tpu.memory_space<vmem>>, vector<8x128xf32>
    tpu.vector_store %arg14[%c0_186, %c0_187], %272 {strides = array<i32>} : memref<8x128xf32, #tpu.memory_space<vmem>>, vector<8x128xf32>,
    return
  }
}

</mosaic_0001>

<llo_original>
// kernel: tpu_custom_call.1
$region0: #{tpu_custom_call.1}
  #allocation0 [shape = 'u32[]', space=smem, size = 0x4, offset = 0x4, fixed_abs, tag = 'smem constant byte address 0x4 - core index']
  #allocation1 [shape = 'u32[144,128]{1,0:T(1,128)}', space=vmem, size = 0x12000, scoped, tag = 'internal scratch']
  #allocation2 [shape = 'f32[128,128]{1,0:T(8,128)}', space=vmem, size = 0x10000, scoped, tag = 'scratch operand']
  %s0 = inlined_call_operand.hbm [shape: f32[24,128], index: 0, kind: input, shape index: {}]
  %s1 = inlined_call_operand.vmem [shape: bf16[4,128,128], index: 1, kind: input, shape index: {}]
  %s2 = inlined_call_operand.vmem [shape: f32[32,24], index: 2, kind: input, shape index: {}]
  %s3 = inlined_call_operand.vmem [shape: f32[32,1], index: 3, kind: input, shape index: {}]
  %s4 = inlined_call_operand.hbm [shape: f32[32,32], index: 4, kind: input, shape index: {}]
  %s5 = inlined_call_operand.vmem [shape: f32[32,1], index: 5, kind: input, shape index: {}]
  %s6 = inlined_call_operand.hbm [shape: f32[96,128], index: 6, kind: input, shape index: {}]
  %s7 = inlined_call_operand.vmem [shape: f32[64,32], index: 7, kind: input, shape index: {}]
  %s8 = inlined_call_operand.hbm [shape: f32[32,32], index: 8, kind: input, shape index: {}]
  %s9 = inlined_call_operand.vmem [shape: f32[32,1], index: 9, kind: input, shape index: {}]
  %s10 = inlined_call_operand.hbm [shape: f32[32,32], index: 10, kind: input, shape index: {}]
  %s11 = inlined_call_operand.vmem [shape: f32[32,1], index: 11, kind: input, shape index: {}]
  %s12 = inlined_call_operand.vmem [shape: f32[8,32], index: 12, kind: input, shape index: {}]
  %s13 = inlined_call_operand.vmem [shape: f32[8,1], index: 13, kind: input, shape index: {}]
  %s14 = inlined_call_operand.hbm [shape: f32[8,128], index: 14, kind: output, shape index: {}]
  %s15 = sld [smem:[#allocation0]]
  $region86: #{tpu_custom_call.1} parent=0
    _
  %s17 = ssub.s32 1, %s15
  %s18 = scalar_select 0, %s17, %s15
  $region1: #{tpu_custom_call.1} parent=0
    #allocation3 [shape = 'u8[12288]{0}', space=vmem, size = 0x3000, scoped, tag = 'input window, operand 0, single buffered']
    #allocation4 [shape = 's32[1]{0}', space=sflag, size = 0x4, scoped, tag = 'scoped memory for tpu_custom_call.1']
    #allocation5 [shape = 's32[1]{0}', space=sflag, size = 0x4, scoped, tag = 'scoped memory for tpu_custom_call.1']
    #allocation6 [shape = 'u8[16384]{0}', space=vmem, size = 0x4000, scoped, tag = 'input window, operand 4, single buffered']
    #allocation7 [shape = 's32[1]{0}', space=sflag, size = 0x4, scoped, tag = 'scoped memory for tpu_custom_call.1']
    #allocation8 [shape = 'u8[49152]{0}', space=vmem, size = 0xc000, scoped, tag = 'input window, operand 6, single buffered']
    #allocation9 [shape = 'u8[16384]{0}', space=vmem, size = 0x4000, scoped, tag = 'input window, operand 8, single buffered']
    #allocation10 [shape = 's32[1]{0}', space=sflag, size = 0x4, scoped, tag = 'scoped memory for tpu_custom_call.1']
    #allocation11 [shape = 'u8[16384]{0}', space=vmem, size = 0x4000, scoped, tag = 'input window, operand 10, single buffered']
    #allocation12 [shape = 'u8[4096]{0}', space=vmem, size = 0x1000, scoped, tag = 'output window, operand 0, single buffered']
    %19 = vsyncpa [#allocation4], 0
    %20 = vsyncpa [#allocation7], 0
    %21 = vsyncpa [#allocation10], 0
    %22 = vsyncpa [#allocation5], 0
    // Predicated region
    $region2: #{tpu_custom_call.1} parent=1 // pred_check
      _
    $region3: #{tpu_custom_call.1} parent=1 // pred_check_branch
      %24 = sbr.rel (0) target = $region5
    $region4: #{tpu_custom_call.1} parent=1 // pred_region
      %s26 = ssub.s32 384, 384
      %27 = vsyncadd [#allocation4], %s26
      %s28 = sshll.u32 [#allocation3], 4
      %s29 = int_to_ptr.vmem [resolvable:$true] %s28
      %34 = dma.hbm_to_vmem [thread:$0]  %s0, 384, %s29, [#allocation4], 128, 128, 8
    $region5: #{tpu_custom_call.1} parent=1 // pred_fallthru
      _
    // Predicated region
    $region6: #{tpu_custom_call.1} parent=1 // pred_check
      _
    $region7: #{tpu_custom_call.1} parent=1 // pred_check_branch
      %36 = sbr.rel (0) target = $region9
    $region8: #{tpu_custom_call.1} parent=1 // pred_region
      _
    $region9: #{tpu_custom_call.1} parent=1 // pred_fallthru
      _
    // Predicated region
    $region10: #{tpu_custom_call.1} parent=1 // pred_check
      _
    $region11: #{tpu_custom_call.1} parent=1 // pred_check_branch
      %38 = sbr.rel (0) target = $region13
    $region12: #{tpu_custom_call.1} parent=1 // pred_region
      _
    $region13: #{tpu_custom_call.1} parent=1 // pred_fallthru
      _
    // Predicated region
    $region14: #{tpu_custom_call.1} parent=1 // pred_check
      _
    $region15: #{tpu_custom_call.1} parent=1 // pred_check_branch
      %40 = sbr.rel (0) target = $region17
    $region16: #{tpu_custom_call.1} parent=1 // pred_region
      _
    $region17: #{tpu_custom_call.1} parent=1 // pred_fallthru
      _
    // Predicated region
    $region18: #{tpu_custom_call.1} parent=1 // pred_check
      _
    $region19: #{tpu_custom_call.1} parent=1 // pred_check_branch
      %42 = sbr.rel (0) target = $region21
    $region20: #{tpu_custom_call.1} parent=1 // pred_region
      %s44 = ssub.s32 512, 512
      %45 = vsyncadd [#allocation7], %s44
      %s46 = sshll.u32 [#allocation6], 4
      %s47 = int_to_ptr.vmem [resolvable:$true] %s46
      %52 = dma.hbm_to_vmem [thread:$0]  %s4, 512, %s47, [#allocation7], 128, 128, 8
    $region21: #{tpu_custom_call.1} parent=1 // pred_fallthru
      _
    // Predicated region
    $region22: #{tpu_custom_call.1} parent=1 // pred_check
      _
    $region23: #{tpu_custom_call.1} parent=1 // pred_check_branch
      %54 = sbr.rel (0) target = $region25
    $region24: #{tpu_custom_call.1} parent=1 // pred_region
      _
    $region25: #{tpu_custom_call.1} parent=1 // pred_fallthru
      _
    // Predicated region
    $region26: #{tpu_custom_call.1} parent=1 // pred_check
      _
    $region27: #{tpu_custom_call.1} parent=1 // pred_check_branch
      %56 = sbr.rel (0) target = $region29
    $region28: #{tpu_custom_call.1} parent=1 // pred_region
      %s58 = ssub.s32 1536, 1536
      %59 = vsyncadd [#allocation7], %s58
      %s60 = sshll.u32 [#allocation8], 4
      %s61 = int_to_ptr.vmem [resolvable:$true] %s60
      %66 = dma.hbm_to_vmem [thread:$0]  %s6, 1536, %s61, [#allocation7], 128, 128, 8
    $region29: #{tpu_custom_call.1} parent=1 // pred_fallthru
      _
    // Predicated region
    $region30: #{tpu_custom_call.1} parent=1 // pred_check
      _
    $region31: #{tpu_custom_call.1} parent=1 // pred_check_branch
      %68 = sbr.rel (0) target = $region33
    $region32: #{tpu_custom_call.1} parent=1 // pred_region
      _
    $region33: #{tpu_custom_call.1} parent=1 // pred_fallthru
      _
    // Predicated region
    $region34: #{tpu_custom_call.1} parent=1 // pred_check
      _
    $region35: #{tpu_custom_call.1} parent=1 // pred_check_branch
      %70 = sbr.rel (0) target = $region37
    $region36: #{tpu_custom_call.1} parent=1 // pred_region
      %s72 = ssub.s32 512, 512
      %73 = vsyncadd [#allocation10], %s72
      %s74 = sshll.u32 [#allocation9], 4
      %s75 = int_to_ptr.vmem [resolvable:$true] %s74
      %80 = dma.hbm_to_vmem [thread:$0]  %s8, 512, %s75, [#allocation10], 128, 128, 8
    $region37: #{tpu_custom_call.1} parent=1 // pred_fallthru
      _
    // Predicated region
    $region38: #{tpu_custom_call.1} parent=1 // pred_check
      _
    $region39: #{tpu_custom_call.1} parent=1 // pred_check_branch
      %82 = sbr.rel (0) target = $region41
    $region40: #{tpu_custom_call.1} parent=1 // pred_region
      _
    $region41: #{tpu_custom_call.1} parent=1 // pred_fallthru
      _
    // Predicated region
    $region42: #{tpu_custom_call.1} parent=1 // pred_check
      _
    $region43: #{tpu_custom_call.1} parent=1 // pred_check_branch
      %84 = sbr.rel (0) target = $region45
    $region44: #{tpu_custom_call.1} parent=1 // pred_region
      %s86 = ssub.s32 512, 512
      %87 = vsyncadd [#allocation10], %s86
      %s88 = sshll.u32 [#allocation11], 4
      %s89 = int_to_ptr.vmem [resolvable:$true] %s88
      %94 = dma.hbm_to_vmem [thread:$0]  %s10, 512, %s89, [#allocation10], 128, 128, 8
    $region45: #{tpu_custom_call.1} parent=1 // pred_fallthru
      _
    // Predicated region
    $region46: #{tpu_custom_call.1} parent=1 // pred_check
      _
    $region47: #{tpu_custom_call.1} parent=1 // pred_check_branch
      %96 = sbr.rel (0) target = $region49
    $region48: #{tpu_custom_call.1} parent=1 // pred_region
      _
    $region49: #{tpu_custom_call.1} parent=1 // pred_fallthru
      _
    // Predicated region
    $region50: #{tpu_custom_call.1} parent=1 // pred_check
      _
    $region51: #{tpu_custom_call.1} parent=1 // pred_check_branch
      %98 = sbr.rel (0) target = $region53
    $region52: #{tpu_custom_call.1} parent=1 // pred_region
      _
    $region53: #{tpu_custom_call.1} parent=1 // pred_fallthru
      _
    // Predicated region
    $region54: #{tpu_custom_call.1} parent=1 // pred_check
      _
    $region55: #{tpu_custom_call.1} parent=1 // pred_check_branch
      %100 = sbr.rel (0) target = $region57
    $region56: #{tpu_custom_call.1} parent=1 // pred_region
      _
    $region57: #{tpu_custom_call.1} parent=1 // pred_fallthru
      _
    // Predicated region
    $region58: #{tpu_custom_call.1} parent=1 // pred_check
      _
    $region59: #{tpu_custom_call.1} parent=1 // pred_check_branch
      %102 = sbr.rel (0) target = $region61
    $region60: #{tpu_custom_call.1} parent=1 // pred_region
      %103 = dma.done [#allocation4], 384
    $region61: #{tpu_custom_call.1} parent=1 // pred_fallthru
      _
    // Predicated region
    $region62: #{tpu_custom_call.1} parent=1 // pred_check
      _
    $region63: #{tpu_custom_call.1} parent=1 // pred_check_branch
      %105 = sbr.rel (0) target = $region65
    $region64: #{tpu_custom_call.1} parent=1 // pred_region
      %106 = dma.done [#allocation7], 512
    $region65: #{tpu_custom_call.1} parent=1 // pred_fallthru
      _
    // Predicated region
    $region66: #{tpu_custom_call.1} parent=1 // pred_check
      _
    $region67: #{tpu_custom_call.1} parent=1 // pred_check_branch
      %108 = sbr.rel (0) target = $region69
    $region68: #{tpu_custom_call.1} parent=1 // pred_region
      %109 = dma.done [#allocation7], 1536
    $region69: #{tpu_custom_call.1} parent=1 // pred_fallthru
      _
    // Predicated region
    $region70: #{tpu_custom_call.1} parent=1 // pred_check
      _
    $region71: #{tpu_custom_call.1} parent=1 // pred_check_branch
      %111 = sbr.rel (0) target = $region73
    $region72: #{tpu_custom_call.1} parent=1 // pred_region
      %112 = dma.done [#allocation10], 512
    $region73: #{tpu_custom_call.1} parent=1 // pred_fallthru
      _
    // Predicated region
    $region74: #{tpu_custom_call.1} parent=1 // pred_check
      _
    $region75: #{tpu_custom_call.1} parent=1 // pred_check_branch
      %114 = sbr.rel (0) target = $region77
    $region76: #{tpu_custom_call.1} parent=1 // pred_region
      %115 = dma.done [#allocation10], 512
    $region77: #{tpu_custom_call.1} parent=1 // pred_fallthru
      _
    %v117 = vld [vmem:[#allocation3] sm:$0xff]
    %v118 = vld [vmem:[#allocation3 + $0x8] sm:$0xff]
    %v119 = vld [vmem:[#allocation3 + $0x10] sm:$0xff]
    %v120 = vld [vmem:[%s2] sm:$0xff]
    %v121 = vld [vmem:[%s2 + $0x8] sm:$0xff]
    %v122 = vld [vmem:[%s2 + $0x10] sm:$0xff]
    %v123 = vld [vmem:[%s2 + $0x18] sm:$0xff]
    %v124 = vld [vmem:[%s3] sm:$0xff]
    %v125 = vld [vmem:[%s3 + $0x8] sm:$0xff]
    %v126 = vld [vmem:[%s3 + $0x10] sm:$0xff]
    %v127 = vld [vmem:[%s3 + $0x18] sm:$0xff]
    %129 = vset.pattern.permute.xlu0 0
    %130 = vperm.xlu0 %129, %v124
    %v131 = vpop.permute.xlu0 %130
    %134 = vset.pattern.permute.xlu0 0
    %135 = vperm.xlu0 %134, %v125
    %v136 = vpop.permute.xlu0 %135
    %139 = vset.pattern.permute.xlu0 0
    %140 = vperm.xlu0 %139, %v126
    %v141 = vpop.permute.xlu0 %140
    %144 = vset.pattern.permute.xlu0 0
    %145 = vperm.xlu0 %144, %v127
    %v146 = vpop.permute.xlu0 %145
    %vm148 = vcmask 195584
    %v150 = vsel %vm148, %v120, 0
    %v153 = vsel %vm148, %v121, 0
    %v156 = vsel %vm148, %v122, 0
    %v159 = vsel %vm148, %v123, 0
    %161 = vmatprep.subr.mxu0 0.0
    %162 = vmatpush1.msra.mxu0 0.0
    %163 = vmatprep.subr.mxu0 0.0
    %164 = vmatpush1.msra.mxu0 0.0
    %165 = vmatprep.subr.mxu0 0.0
    %166 = vmatpush1.msra.mxu0 0.0
    %167 = vmatprep.subr.mxu0 0.0
    %168 = vmatpush1.msra.mxu0 0.0
    %169 = vmatprep.subr.mxu0 0.0
    %170 = vmatpush1.msra.mxu0 0.0
    %171 = vmatprep.subr.mxu0 0.0
    %172 = vmatpush1.msra.mxu0 0.0
    %173 = vmatprep.subr.mxu0 0.0
    %174 = vmatpush1.msra.mxu0 0.0
    %175 = vmatprep.subr.mxu0 0.0
    %176 = vmatpush1.msra.mxu0 0.0
    %177 = vmatprep.subr.mxu0 0.0
    %178 = vmatpush1.msra.mxu0 0.0
    %179 = vmatprep.subr.mxu0 0.0
    %180 = vmatpush1.msra.mxu0 0.0
    %181 = vmatprep.subr.mxu0 0.0
    %182 = vmatpush1.msra.mxu0 0.0
    %183 = vmatprep.subr.mxu0 0.0
    %184 = vmatpush1.msra.mxu0 0.0
    %185 = vmatprep.subr.mxu0 0.0
    %186 = vmatpush1.msra.mxu0 0.0
    %187 = vmatprep.subr.mxu0 0.0
    %188 = vmatpush1.msra.mxu0 %v119
    %189 = vmatprep.subr.mxu0 0.0
    %190 = vmatpush1.msra.mxu0 %v118
    %191 = vmatprep.subr.mxu0 0.0
    %192 = vmatpush1.msra.mxu0 %v117
    %193 = vmatprep.subr.mxu0 0.0
    %194 = vmatpush2.msra.mxu0 0.0
    %195 = vmatprep.subr.mxu0 0.0
    %196 = vmatpush2.msra.mxu0 0.0
    %197 = vmatprep.subr.mxu0 0.0
    %198 = vmatpush2.msra.mxu0 0.0
    %199 = vmatprep.subr.mxu0 0.0
    %200 = vmatpush2.msra.mxu0 0.0
    %201 = vmatprep.subr.mxu0 0.0
    %202 = vmatpush2.msra.mxu0 0.0
    %203 = vmatprep.subr.mxu0 0.0
    %204 = vmatpush2.msra.mxu0 0.0
    %205 = vmatprep.subr.mxu0 0.0
    %206 = vmatpush2.msra.mxu0 0.0
    %207 = vmatprep.subr.mxu0 0.0
    %208 = vmatpush2.msra.mxu0 0.0
    %209 = vmatprep.subr.mxu0 0.0
    %210 = vmatpush2.msra.mxu0 0.0
    %211 = vmatprep.subr.mxu0 0.0
    %212 = vmatpush2.msra.mxu0 0.0
    %213 = vmatprep.subr.mxu0 0.0
    %214 = vmatpush2.msra.mxu0 0.0
    %215 = vmatprep.subr.mxu0 0.0
    %216 = vmatpush2.msra.mxu0 0.0
    %217 = vmatprep.subr.mxu0 0.0
    %218 = vmatpush2.msra.mxu0 0.0
    %219 = vmatprep.subr.mxu0 0.0
    %220 = vmatpush2.msra.mxu0 0.0
    %221 = vmatprep.subr.mxu0 0.0
    %222 = vmatpush2.msra.mxu0 0.0
    %223 = vmatprep.subr.mxu0 0.0
    %224 = vmatpush2.msra.mxu0 0.0
    %225 = vmatprep.mubr.f32.mxu0 0.0
    %226 = vmatmul.mubr.f32.gmra.mxu0 %v150
    %v227 = vpop.f32.mrf.mxu0
    %v228 = vadd.f32 %v131, %v227
    %v229 = vpop.f32.mrf.mxu0
    %230 = vmatprep.mubr.f32.mxu0 0.0
    %231 = vmatmul.mubr.f32.gmra.mxu0 %v153
    %v232 = vpop.f32.mrf.mxu0
    %v233 = vadd.f32 %v136, %v232
    %v234 = vpop.f32.mrf.mxu0
    %235 = vmatprep.mubr.f32.mxu0 0.0
    %236 = vmatmul.mubr.f32.gmra.mxu0 %v156
    %v237 = vpop.f32.mrf.mxu0
    %v238 = vadd.f32 %v141, %v237
    %v239 = vpop.f32.mrf.mxu0
    %240 = vmatprep.mubr.f32.mxu0 0.0
    %241 = vmatmul.mubr.f32.gmra.mxu0 %v159
    %v242 = vpop.f32.mrf.mxu0
    %v243 = vadd.f32 %v146, %v242
    %v244 = vpop.f32.mrf.mxu0
    %245 = vdwg.mxu0
    %v246 = vmax.f32 %v228, 0.0
    %v247 = vmax.f32 %v233, 0.0
    %v248 = vmax.f32 %v238, 0.0
    %v249 = vmax.f32 %v243, 0.0
    %v250 = vld [vmem:[#allocation6] sm:$0xff]
    %v251 = vld [vmem:[#allocation6 + $0x8] sm:$0xff]
    %v252 = vld [vmem:[#allocation6 + $0x10] sm:$0xff]
    %v253 = vld [vmem:[#allocation6 + $0x18] sm:$0xff]
    %v254 = vld [vmem:[%s5] sm:$0xff]
    %v255 = vld [vmem:[%s5 + $0x8] sm:$0xff]
    %v256 = vld [vmem:[%s5 + $0x10] sm:$0xff]
    %v257 = vld [vmem:[%s5 + $0x18] sm:$0xff]
    %259 = vset.pattern.permute.xlu0 0
    %260 = vperm.xlu0 %259, %v254
    %v261 = vpop.permute.xlu0 %260
    %264 = vset.pattern.permute.xlu0 0
    %265 = vperm.xlu0 %264, %v255
    %v266 = vpop.permute.xlu0 %265
    %269 = vset.pattern.permute.xlu0 0
    %270 = vperm.xlu0 %269, %v256
    %v271 = vpop.permute.xlu0 %270
    %274 = vset.pattern.permute.xlu0 0
    %275 = vperm.xlu0 %274, %v257
    %v276 = vpop.permute.xlu0 %275
    %vm278 = vcmask 261120
    %v280 = vsel %vm278, %v250, 0
    %v283 = vsel %vm278, %v251, 0
    %v286 = vsel %vm278, %v252, 0
    %v289 = vsel %vm278, %v253, 0
    %291 = vmatprep.subr.mxu0 0.0
    %292 = vmatpush1.msra.mxu0 0.0
    %293 = vmatprep.subr.mxu0 0.0
    %294 = vmatpush1.msra.mxu0 0.0
    %295 = vmatprep.subr.mxu0 0.0
    %296 = vmatpush1.msra.mxu0 0.0
    %297 = vmatprep.subr.mxu0 0.0
    %298 = vmatpush1.msra.mxu0 0.0
    %299 = vmatprep.subr.mxu0 0.0
    %300 = vmatpush1.msra.mxu0 0.0
    %301 = vmatprep.subr.mxu0 0.0
    %302 = vmatpush1.msra.mxu0 0.0
    %303 = vmatprep.subr.mxu0 0.0
    %304 = vmatpush1.msra.mxu0 0.0
    %305 = vmatprep.subr.mxu0 0.0
    %306 = vmatpush1.msra.mxu0 0.0
    %307 = vmatprep.subr.mxu0 0.0
    %308 = vmatpush1.msra.mxu0 0.0
    %309 = vmatprep.subr.mxu0 0.0
    %310 = vmatpush1.msra.mxu0 0.0
    %311 = vmatprep.subr.mxu0 0.0
    %312 = vmatpush1.msra.mxu0 0.0
    %313 = vmatprep.subr.mxu0 0.0
    %314 = vmatpush1.msra.mxu0 0.0
    %315 = vmatprep.subr.mxu0 0.0
    %316 = vmatpush1.msra.mxu0 %v249
    %317 = vmatprep.subr.mxu0 0.0
    %318 = vmatpush1.msra.mxu0 %v248
    %319 = vmatprep.subr.mxu0 0.0
    %320 = vmatpush1.msra.mxu0 %v247
    %321 = vmatprep.subr.mxu0 0.0
    %322 = vmatpush1.msra.mxu0 %v246
    %323 = vmatprep.subr.mxu0 0.0
    %324 = vmatpush2.msra.mxu0 0.0
    %325 = vmatprep.subr.mxu0 0.0
    %326 = vmatpush2.msra.mxu0 0.0
    %327 = vmatprep.subr.mxu0 0.0
    %328 = vmatpush2.msra.mxu0 0.0
    %329 = vmatprep.subr.mxu0 0.0
    %330 = vmatpush2.msra.mxu0 0.0
    %331 = vmatprep.subr.mxu0 0.0
    %332 = vmatpush2.msra.mxu0 0.0
    %333 = vmatprep.subr.mxu0 0.0
    %334 = vmatpush2.msra.mxu0 0.0
    %335 = vmatprep.subr.mxu0 0.0
    %336 = vmatpush2.msra.mxu0 0.0
    %337 = vmatprep.subr.mxu0 0.0
    %338 = vmatpush2.msra.mxu0 0.0
    %339 = vmatprep.subr.mxu0 0.0
    %340 = vmatpush2.msra.mxu0 0.0
    %341 = vmatprep.subr.mxu0 0.0
    %342 = vmatpush2.msra.mxu0 0.0
    %343 = vmatprep.subr.mxu0 0.0
    %344 = vmatpush2.msra.mxu0 0.0
    %345 = vmatprep.subr.mxu0 0.0
    %346 = vmatpush2.msra.mxu0 0.0
    %347 = vmatprep.subr.mxu0 0.0
    %348 = vmatpush2.msra.mxu0 0.0
    %349 = vmatprep.subr.mxu0 0.0
    %350 = vmatpush2.msra.mxu0 0.0
    %351 = vmatprep.subr.mxu0 0.0
    %352 = vmatpush2.msra.mxu0 0.0
    %353 = vmatprep.subr.mxu0 0.0
    %354 = vmatpush2.msra.mxu0 0.0
    %355 = vmatprep.mubr.f32.mxu0 0.0
    %356 = vmatmul.mubr.f32.gmra.mxu0 %v280
    %v357 = vpop.f32.mrf.mxu0
    %v358 = vadd.f32 %v261, %v357
    %v359 = vpop.f32.mrf.mxu0
    %360 = vmatprep.mubr.f32.mxu0 0.0
    %361 = vmatmul.mubr.f32.gmra.mxu0 %v283
    %v362 = vpop.f32.mrf.mxu0
    %v363 = vadd.f32 %v266, %v362
    %v364 = vpop.f32.mrf.mxu0
    %365 = vmatprep.mubr.f32.mxu0 0.0
    %366 = vmatmul.mubr.f32.gmra.mxu0 %v286
    %v367 = vpop.f32.mrf.mxu0
    %v368 = vadd.f32 %v271, %v367
    %v369 = vpop.f32.mrf.mxu0
    %370 = vmatprep.mubr.f32.mxu0 0.0
    %371 = vmatmul.mubr.f32.gmra.mxu0 %v289
    %v372 = vpop.f32.mrf.mxu0
    %v373 = vadd.f32 %v276, %v372
    %v374 = vpop.f32.mrf.mxu0
    %375 = vdwg.mxu0
    %v376 = vmax.f32 %v358, 0.0
    %v377 = vmax.f32 %v363, 0.0
    %v378 = vmax.f32 %v368, 0.0
    %v379 = vmax.f32 %v373, 0.0
    %v380 = vld [vmem:[#allocation8] sm:$0xff]
    %v381 = vld [vmem:[#allocation8 + $0x8] sm:$0xff]
    %v382 = vld [vmem:[#allocation8 + $0x10] sm:$0xff]
    %v383 = vld [vmem:[#allocation8 + $0x18] sm:$0xff]
    %v384 = vld [vmem:[#allocation8 + $0x20] sm:$0xff]
    %v385 = vld [vmem:[#allocation8 + $0x28] sm:$0xff]
    %v386 = vld [vmem:[#allocation8 + $0x30] sm:$0xff]
    %v387 = vld [vmem:[#allocation8 + $0x38] sm:$0xff]
    %v388 = vld [vmem:[#allocation8 + $0x40] sm:$0xff]
    %v389 = vld [vmem:[#allocation8 + $0x48] sm:$0xff]
    %v390 = vld [vmem:[#allocation8 + $0x50] sm:$0xff]
    %v391 = vld [vmem:[#allocation8 + $0x58] sm:$0xff]
    %v392 = vld [vmem:[%s7] sm:$0xff]
    %v393 = vld [vmem:[%s7 + $0x8] sm:$0xff]
    %v394 = vld [vmem:[%s7 + $0x10] sm:$0xff]
    %v395 = vld [vmem:[%s7 + $0x18] sm:$0xff]
    %v396 = vld [vmem:[%s7 + $0x20] sm:$0xff]
    %v397 = vld [vmem:[%s7 + $0x28] sm:$0xff]
    %v398 = vld [vmem:[%s7 + $0x30] sm:$0xff]
    %v399 = vld [vmem:[%s7 + $0x38] sm:$0xff]
    %v400 = vld [vmem:[#allocation9] sm:$0xff]
    %v401 = vld [vmem:[#allocation9 + $0x8] sm:$0xff]
    %v402 = vld [vmem:[#allocation9 + $0x10] sm:$0xff]
    %v403 = vld [vmem:[#allocation9 + $0x18] sm:$0xff]
    %v404 = vld [vmem:[%s9] sm:$0xff]
    %v405 = vld [vmem:[%s9 + $0x8] sm:$0xff]
    %v406 = vld [vmem:[%s9 + $0x10] sm:$0xff]
    %v407 = vld [vmem:[%s9 + $0x18] sm:$0xff]
    %409 = vset.pattern.permute.xlu0 0
    %410 = vperm.xlu0 %409, %v404
    %v411 = vpop.permute.xlu0 %410
    %414 = vset.pattern.permute.xlu0 0
    %415 = vperm.xlu0 %414, %v405
    %v416 = vpop.permute.xlu0 %415
    %419 = vset.pattern.permute.xlu0 0
    %420 = vperm.xlu0 %419, %v406
    %v421 = vpop.permute.xlu0 %420
    %424 = vset.pattern.permute.xlu0 0
    %425 = vperm.xlu0 %424, %v407
    %v426 = vpop.permute.xlu0 %425
    %v428 = vpack.c.bf16 %v377, %v376
    %v429 = vpack.c.bf16 %v379, %v378
    %v430 = vld [vmem:[%s1] sm:$0xf]
    %v431 = vld [vmem:[%s1 + $0x4] sm:$0xf]
    %v432 = vld [vmem:[%s1 + $0x8] sm:$0xf]
    %v433 = vld [vmem:[%s1 + $0xc] sm:$0xf]
    %v434 = vld [vmem:[%s1 + $0x10] sm:$0xf]
    %v435 = vld [vmem:[%s1 + $0x14] sm:$0xf]
    %v436 = vld [vmem:[%s1 + $0x18] sm:$0xf]
    %v437 = vld [vmem:[%s1 + $0x1c] sm:$0xf]
    %v438 = vld [vmem:[%s1 + $0x20] sm:$0xf]
    %v439 = vld [vmem:[%s1 + $0x24] sm:$0xf]
    %v440 = vld [vmem:[%s1 + $0x28] sm:$0xf]
    %v441 = vld [vmem:[%s1 + $0x2c] sm:$0xf]
    %v442 = vld [vmem:[%s1 + $0x30] sm:$0xf]
    %v443 = vld [vmem:[%s1 + $0x34] sm:$0xf]
    %v444 = vld [vmem:[%s1 + $0x38] sm:$0xf]
    %v445 = vld [vmem:[%s1 + $0x3c] sm:$0xf]
    %v462 = vunpack.c.l.b16 %v430
    %v463 = vunpack.c.l.b16 %v431
    %v464 = vunpack.c.l.b16 %v432
    %v465 = vunpack.c.l.b16 %v433
    %v466 = vunpack.c.l.b16 %v434
    %v467 = vunpack.c.l.b16 %v435
    %v468 = vunpack.c.l.b16 %v436
    %v469 = vunpack.c.l.b16 %v437
    %v470 = vunpack.c.l.b16 %v438
    %v471 = vunpack.c.l.b16 %v439
    %v472 = vunpack.c.l.b16 %v440
    %v473 = vunpack.c.l.b16 %v441
    %v474 = vunpack.c.l.b16 %v442
    %v475 = vunpack.c.l.b16 %v443
    %v476 = vunpack.c.l.b16 %v444
    %v477 = vunpack.c.l.b16 %v445
    %v478 = vpack.c.b16 %v463, %v462
    %v479 = vpack.c.b16 %v465, %v464
    %v480 = vpack.c.b16 %v467, %v466
    %v481 = vpack.c.b16 %v469, %v468
    %v482 = vpack.c.b16 %v471, %v470
    %v483 = vpack.c.b16 %v473, %v472
    %v484 = vpack.c.b16 %v475, %v474
    %v485 = vpack.c.b16 %v477, %v476
    %494 = vmatprep.subr.bf16.mxu0 0
    %495 = vmatpush1.bf16.msra.mxu0 %v485
    %496 = vmatprep.subr.bf16.mxu0 0
    %497 = vmatpush1.bf16.msra.mxu0 %v484
    %498 = vmatprep.subr.bf16.mxu0 0
    %499 = vmatpush1.bf16.msra.mxu0 %v483
    %500 = vmatprep.subr.bf16.mxu0 0
    %501 = vmatpush1.bf16.msra.mxu0 %v482
    %502 = vmatprep.subr.bf16.mxu0 0
    %503 = vmatpush1.bf16.msra.mxu0 %v481
    %504 = vmatprep.subr.bf16.mxu0 0
    %505 = vmatpush1.bf16.msra.mxu0 %v480
    %506 = vmatprep.subr.bf16.mxu0 0
    %507 = vmatpush1.bf16.msra.mxu0 %v479
    %508 = vmatprep.subr.bf16.mxu0 0
    %509 = vmatpush1.bf16.msra.mxu0 %v478
    %510 = vmatprep.subr.bf16.mxu0 0
    %511 = vmatpush2.bf16.msra.mxu0 0
    %512 = vmatprep.subr.bf16.mxu0 0
    %513 = vmatpush2.bf16.msra.mxu0 0
    %514 = vmatprep.subr.bf16.mxu0 0
    %515 = vmatpush2.bf16.msra.mxu0 0
    %516 = vmatprep.subr.bf16.mxu0 0
    %517 = vmatpush2.bf16.msra.mxu0 0
    %518 = vmatprep.subr.bf16.mxu0 0
    %519 = vmatpush2.bf16.msra.mxu0 0
    %520 = vmatprep.subr.bf16.mxu0 0
    %521 = vmatpush2.bf16.msra.mxu0 0
    %522 = vmatprep.subr.bf16.mxu0 0
    %523 = vmatpush2.bf16.msra.mxu0 0
    %524 = vmatprep.subr.bf16.mxu0 0
    %525 = vmatpush2.bf16.msra.mxu0 0
    %526 = vmatprep.mubr.bf16.mxu0 0
    %527 = vmatmul.mubr.bf16.gmra.mxu0 %v428
    %v528 = vpop.f32.mrf.mxu0
    %v529 = vadd.f32 0.0, %v528
    %v530 = vpop.f32.mrf.mxu0
    %v531 = vpop.f32.mrf.mxu0
    %v532 = vadd.f32 0.0, %v531
    %v533 = vpop.f32.mrf.mxu0
    %534 = vmatprep.mubr.bf16.mxu0 0
    %535 = vmatmul.mubr.bf16.gmra.mxu0 %v429
    %v536 = vpop.f32.mrf.mxu0
    %v537 = vadd.f32 0.0, %v536
    %v538 = vpop.f32.mrf.mxu0
    %v539 = vpop.f32.mrf.mxu0
    %v540 = vadd.f32 0.0, %v539
    %v541 = vpop.f32.mrf.mxu0
    %542 = vdwg.mxu0
    %543 = vst [vmem:[#allocation2] sm:$0xff] %v529
    %544 = vst [vmem:[#allocation2 + $0x8] sm:$0xff] %v532
    %545 = vst [vmem:[#allocation2 + $0x10] sm:$0xff] %v537
    %546 = vst [vmem:[#allocation2 + $0x18] sm:$0xff] %v540
    %s547 = scalar_lea.vmem %s1, 64
    %v548 = vld [vmem:[%s547] sm:$0xf]
    %v549 = vld [vmem:[%s547 + $0x4] sm:$0xf]
    %v550 = vld [vmem:[%s547 + $0x8] sm:$0xf]
    %v551 = vld [vmem:[%s547 + $0xc] sm:$0xf]
    %v552 = vld [vmem:[%s547 + $0x10] sm:$0xf]
    %v553 = vld [vmem:[%s547 + $0x14] sm:$0xf]
    %v554 = vld [vmem:[%s547 + $0x18] sm:$0xf]
    %v555 = vld [vmem:[%s547 + $0x1c] sm:$0xf]
    %v556 = vld [vmem:[%s547 + $0x20] sm:$0xf]
    %v557 = vld [vmem:[%s547 + $0x24] sm:$0xf]
    %v558 = vld [vmem:[%s547 + $0x28] sm:$0xf]
    %v559 = vld [vmem:[%s547 + $0x2c] sm:$0xf]
    %v560 = vld [vmem:[%s547 + $0x30] sm:$0xf]
    %v561 = vld [vmem:[%s547 + $0x34] sm:$0xf]
    %v562 = vld [vmem:[%s547 + $0x38] sm:$0xf]
    %v563 = vld [vmem:[%s547 + $0x3c] sm:$0xf]
    %v580 = vunpack.c.l.b16 %v548
    %v581 = vunpack.c.l.b16 %v549
    %v582 = vunpack.c.l.b16 %v550
    %v583 = vunpack.c.l.b16 %v551
    %v584 = vunpack.c.l.b16 %v552
    %v585 = vunpack.c.l.b16 %v553
    %v586 = vunpack.c.l.b16 %v554
    %v587 = vunpack.c.l.b16 %v555
    %v588 = vunpack.c.l.b16 %v556
    %v589 = vunpack.c.l.b16 %v557
    %v590 = vunpack.c.l.b16 %v558
    %v591 = vunpack.c.l.b16 %v559
    %v592 = vunpack.c.l.b16 %v560
    %v593 = vunpack.c.l.b16 %v561
    %v594 = vunpack.c.l.b16 %v562
    %v595 = vunpack.c.l.b16 %v563
    %v596 = vpack.c.b16 %v581, %v580
    %v597 = vpack.c.b16 %v583, %v582
    %v598 = vpack.c.b16 %v585, %v584
    %v599 = vpack.c.b16 %v587, %v586
    %v600 = vpack.c.b16 %v589, %v588
    %v601 = vpack.c.b16 %v591, %v590
    %v602 = vpack.c.b16 %v593, %v592
    %v603 = vpack.c.b16 %v595, %v594
    %612 = vmatprep.subr.bf16.mxu0 0
    %613 = vmatpush1.bf16.msra.mxu0 %v603
    %614 = vmatprep.subr.bf16.mxu0 0
    %615 = vmatpush1.bf16.msra.mxu0 %v602
    %616 = vmatprep.subr.bf16.mxu0 0
    %617 = vmatpush1.bf16.msra.mxu0 %v601
    %618 = vmatprep.subr.bf16.mxu0 0
    %619 = vmatpush1.bf16.msra.mxu0 %v600
    %620 = vmatprep.subr.bf16.mxu0 0
    %621 = vmatpush1.bf16.msra.mxu0 %v599
    %622 = vmatprep.subr.bf16.mxu0 0
    %623 = vmatpush1.bf16.msra.mxu0 %v598
    %624 = vmatprep.subr.bf16.mxu0 0
    %625 = vmatpush1.bf16.msra.mxu0 %v597
    %626 = vmatprep.subr.bf16.mxu0 0
    %627 = vmatpush1.bf16.msra.mxu0 %v596
    %628 = vmatprep.subr.bf16.mxu0 0
    %629 = vmatpush2.bf16.msra.mxu0 0
    %630 = vmatprep.subr.bf16.mxu0 0
    %631 = vmatpush2.bf16.msra.mxu0 0
    %632 = vmatprep.subr.bf16.mxu0 0
    %633 = vmatpush2.bf16.msra.mxu0 0
    %634 = vmatprep.subr.bf16.mxu0 0
    %635 = vmatpush2.bf16.msra.mxu0 0
    %636 = vmatprep.subr.bf16.mxu0 0
    %637 = vmatpush2.bf16.msra.mxu0 0
    %638 = vmatprep.subr.bf16.mxu0 0
    %639 = vmatpush2.bf16.msra.mxu0 0
    %640 = vmatprep.subr.bf16.mxu0 0
    %641 = vmatpush2.bf16.msra.mxu0 0
    %642 = vmatprep.subr.bf16.mxu0 0
    %643 = vmatpush2.bf16.msra.mxu0 0
    %644 = vmatprep.mubr.bf16.mxu0 0
    %645 = vmatmul.mubr.bf16.gmra.mxu0 %v428
    %v646 = vpop.f32.mrf.mxu0
    %v647 = vadd.f32 0.0, %v646
    %v648 = vpop.f32.mrf.mxu0
    %v649 = vpop.f32.mrf.mxu0
    %v650 = vadd.f32 0.0, %v649
    %v651 = vpop.f32.mrf.mxu0
    %652 = vmatprep.mubr.bf16.mxu0 0
    %653 = vmatmul.mubr.bf16.gmra.mxu0 %v429
    %v654 = vpop.f32.mrf.mxu0
    %v655 = vadd.f32 0.0, %v654
    %v656 = vpop.f32.mrf.mxu0
    %v657 = vpop.f32.mrf.mxu0
    %v658 = vadd.f32 0.0, %v657
    %v659 = vpop.f32.mrf.mxu0
    %660 = vdwg.mxu0
    %661 = vst [vmem:[#allocation2 + $0x20] sm:$0xff] %v647
    %662 = vst [vmem:[#allocation2 + $0x28] sm:$0xff] %v650
    %663 = vst [vmem:[#allocation2 + $0x30] sm:$0xff] %v655
    %664 = vst [vmem:[#allocation2 + $0x38] sm:$0xff] %v658
    %s665 = scalar_lea.vmem %s1, 128
    %v666 = vld [vmem:[%s665] sm:$0xf]
    %v667 = vld [vmem:[%s665 + $0x4] sm:$0xf]
    %v668 = vld [vmem:[%s665 + $0x8] sm:$0xf]
    %v669 = vld [vmem:[%s665 + $0xc] sm:$0xf]
    %v670 = vld [vmem:[%s665 + $0x10] sm:$0xf]
    %v671 = vld [vmem:[%s665 + $0x14] sm:$0xf]
    %v672 = vld [vmem:[%s665 + $0x18] sm:$0xf]
    %v673 = vld [vmem:[%s665 + $0x1c] sm:$0xf]
    %v674 = vld [vmem:[%s665 + $0x20] sm:$0xf]
    %v675 = vld [vmem:[%s665 + $0x24] sm:$0xf]
    %v676 = vld [vmem:[%s665 + $0x28] sm:$0xf]
    %v677 = vld [vmem:[%s665 + $0x2c] sm:$0xf]
    %v678 = vld [vmem:[%s665 + $0x30] sm:$0xf]
    %v679 = vld [vmem:[%s665 + $0x34] sm:$0xf]
    %v680 = vld [vmem:[%s665 + $0x38] sm:$0xf]
    %v681 = vld [vmem:[%s665 + $0x3c] sm:$0xf]
    %v698 = vunpack.c.l.b16 %v666
    %v699 = vunpack.c.l.b16 %v667
    %v700 = vunpack.c.l.b16 %v668
    %v701 = vunpack.c.l.b16 %v669
    %v702 = vunpack.c.l.b16 %v670
    %v703 = vunpack.c.l.b16 %v671
    %v704 = vunpack.c.l.b16 %v672
    %v705 = vunpack.c.l.b16 %v673
    %v706 = vunpack.c.l.b16 %v674
    %v707 = vunpack.c.l.b16 %v675
    %v708 = vunpack.c.l.b16 %v676
    %v709 = vunpack.c.l.b16 %v677
    %v710 = vunpack.c.l.b16 %v678
    %v711 = vunpack.c.l.b16 %v679
    %v712 = vunpack.c.l.b16 %v680
    %v713 = vunpack.c.l.b16 %v681
    %v714 = vpack.c.b16 %v699, %v698
    %v715 = vpack.c.b16 %v701, %v700
    %v716 = vpack.c.b16 %v703, %v702
    %v717 = vpack.c.b16 %v705, %v704
    %v718 = vpack.c.b16 %v707, %v706
    %v719 = vpack.c.b16 %v709, %v708
    %v720 = vpack.c.b16 %v711, %v710
    %v721 = vpack.c.b16 %v713, %v712
    %730 = vmatprep.subr.bf16.mxu0 0
    %731 = vmatpush1.bf16.msra.mxu0 %v721
    %732 = vmatprep.subr.bf16.mxu0 0
    %733 = vmatpush1.bf16.msra.mxu0 %v720
    %734 = vmatprep.subr.bf16.mxu0 0
    %735 = vmatpush1.bf16.msra.mxu0 %v719
    %736 = vmatprep.subr.bf16.mxu0 0
    %737 = vmatpush1.bf16.msra.mxu0 %v718
    %738 = vmatprep.subr.bf16.mxu0 0
    %739 = vmatpush1.bf16.msra.mxu0 %v717
    %740 = vmatprep.subr.bf16.mxu0 0
    %741 = vmatpush1.bf16.msra.mxu0 %v716
    %742 = vmatprep.subr.bf16.mxu0 0
    %743 = vmatpush1.bf16.msra.mxu0 %v715
    %744 = vmatprep.subr.bf16.mxu0 0
    %745 = vmatpush1.bf16.msra.mxu0 %v714
    %746 = vmatprep.subr.bf16.mxu0 0
    %747 = vmatpush2.bf16.msra.mxu0 0
    %748 = vmatprep.subr.bf16.mxu0 0
    %749 = vmatpush2.bf16.msra.mxu0 0
    %750 = vmatprep.subr.bf16.mxu0 0
    %751 = vmatpush2.bf16.msra.mxu0 0
    %752 = vmatprep.subr.bf16.mxu0 0
    %753 = vmatpush2.bf16.msra.mxu0 0
    %754 = vmatprep.subr.bf16.mxu0 0
    %755 = vmatpush2.bf16.msra.mxu0 0
    %756 = vmatprep.subr.bf16.mxu0 0
    %757 = vmatpush2.bf16.msra.mxu0 0
    %758 = vmatprep.subr.bf16.mxu0 0
    %759 = vmatpush2.bf16.msra.mxu0 0
    %760 = vmatprep.subr.bf16.mxu0 0
    %761 = vmatpush2.bf16.msra.mxu0 0
    %762 = vmatprep.mubr.bf16.mxu0 0
    %763 = vmatmul.mubr.bf16.gmra.mxu0 %v428
    %v764 = vpop.f32.mrf.mxu0
    %v765 = vadd.f32 0.0, %v764
    %v766 = vpop.f32.mrf.mxu0
    %v767 = vpop.f32.mrf.mxu0
    %v768 = vadd.f32 0.0, %v767
    %v769 = vpop.f32.mrf.mxu0
    %770 = vmatprep.mubr.bf16.mxu0 0
    %771 = vmatmul.mubr.bf16.gmra.mxu0 %v429
    %v772 = vpop.f32.mrf.mxu0
    %v773 = vadd.f32 0.0, %v772
    %v774 = vpop.f32.mrf.mxu0
    %v775 = vpop.f32.mrf.mxu0
    %v776 = vadd.f32 0.0, %v775
    %v777 = vpop.f32.mrf.mxu0
    %778 = vdwg.mxu0
    %779 = vst [vmem:[#allocation2 + $0x40] sm:$0xff] %v765
    %780 = vst [vmem:[#allocation2 + $0x48] sm:$0xff] %v768
    %781 = vst [vmem:[#allocation2 + $0x50] sm:$0xff] %v773
    %782 = vst [vmem:[#allocation2 + $0x58] sm:$0xff] %v776
    %s783 = scalar_lea.vmem %s1, 192
    %v784 = vld [vmem:[%s783] sm:$0xf]
    %v785 = vld [vmem:[%s783 + $0x4] sm:$0xf]
    %v786 = vld [vmem:[%s783 + $0x8] sm:$0xf]
    %v787 = vld [vmem:[%s783 + $0xc] sm:$0xf]
    %v788 = vld [vmem:[%s783 + $0x10] sm:$0xf]
    %v789 = vld [vmem:[%s783 + $0x14] sm:$0xf]
    %v790 = vld [vmem:[%s783 + $0x18] sm:$0xf]
    %v791 = vld [vmem:[%s783 + $0x1c] sm:$0xf]
    %v792 = vld [vmem:[%s783 + $0x20] sm:$0xf]
    %v793 = vld [vmem:[%s783 + $0x24] sm:$0xf]
    %v794 = vld [vmem:[%s783 + $0x28] sm:$0xf]
    %v795 = vld [vmem:[%s783 + $0x2c] sm:$0xf]
    %v796 = vld [vmem:[%s783 + $0x30] sm:$0xf]
    %v797 = vld [vmem:[%s783 + $0x34] sm:$0xf]
    %v798 = vld [vmem:[%s783 + $0x38] sm:$0xf]
    %v799 = vld [vmem:[%s783 + $0x3c] sm:$0xf]
    %v816 = vunpack.c.l.b16 %v784
    %v817 = vunpack.c.l.b16 %v785
    %v818 = vunpack.c.l.b16 %v786
    %v819 = vunpack.c.l.b16 %v787
    %v820 = vunpack.c.l.b16 %v788
    %v821 = vunpack.c.l.b16 %v789
    %v822 = vunpack.c.l.b16 %v790
    %v823 = vunpack.c.l.b16 %v791
    %v824 = vunpack.c.l.b16 %v792
    %v825 = vunpack.c.l.b16 %v793
    %v826 = vunpack.c.l.b16 %v794
    %v827 = vunpack.c.l.b16 %v795
    %v828 = vunpack.c.l.b16 %v796
    %v829 = vunpack.c.l.b16 %v797
    %v830 = vunpack.c.l.b16 %v798
    %v831 = vunpack.c.l.b16 %v799
    %v832 = vpack.c.b16 %v817, %v816
    %v833 = vpack.c.b16 %v819, %v818
    %v834 = vpack.c.b16 %v821, %v820
    %v835 = vpack.c.b16 %v823, %v822
    %v836 = vpack.c.b16 %v825, %v824
    %v837 = vpack.c.b16 %v827, %v826
    %v838 = vpack.c.b16 %v829, %v828
    %v839 = vpack.c.b16 %v831, %v830
    %848 = vmatprep.subr.bf16.mxu0 0
    %849 = vmatpush1.bf16.msra.mxu0 %v839
    %850 = vmatprep.subr.bf16.mxu0 0
    %851 = vmatpush1.bf16.msra.mxu0 %v838
    %852 = vmatprep.subr.bf16.mxu0 0
    %853 = vmatpush1.bf16.msra.mxu0 %v837
    %854 = vmatprep.subr.bf16.mxu0 0
    %855 = vmatpush1.bf16.msra.mxu0 %v836
    %856 = vmatprep.subr.bf16.mxu0 0
    %857 = vmatpush1.bf16.msra.mxu0 %v835
    %858 = vmatprep.subr.bf16.mxu0 0
    %859 = vmatpush1.bf16.msra.mxu0 %v834
    %860 = vmatprep.subr.bf16.mxu0 0
    %861 = vmatpush1.bf16.msra.mxu0 %v833
    %862 = vmatprep.subr.bf16.mxu0 0
    %863 = vmatpush1.bf16.msra.mxu0 %v832
    %864 = vmatprep.subr.bf16.mxu0 0
    %865 = vmatpush2.bf16.msra.mxu0 0
    %866 = vmatprep.subr.bf16.mxu0 0
    %867 = vmatpush2.bf16.msra.mxu0 0
    %868 = vmatprep.subr.bf16.mxu0 0
    %869 = vmatpush2.bf16.msra.mxu0 0
    %870 = vmatprep.subr.bf16.mxu0 0
    %871 = vmatpush2.bf16.msra.mxu0 0
    %872 = vmatprep.subr.bf16.mxu0 0
    %873 = vmatpush2.bf16.msra.mxu0 0
    %874 = vmatprep.subr.bf16.mxu0 0
    %875 = vmatpush2.bf16.msra.mxu0 0
    %876 = vmatprep.subr.bf16.mxu0 0
    %877 = vmatpush2.bf16.msra.mxu0 0
    %878 = vmatprep.subr.bf16.mxu0 0
    %879 = vmatpush2.bf16.msra.mxu0 0
    %880 = vmatprep.mubr.bf16.mxu0 0
    %881 = vmatmul.mubr.bf16.gmra.mxu0 %v428
    %v882 = vpop.f32.mrf.mxu0
    %v883 = vadd.f32 0.0, %v882
    %v884 = vpop.f32.mrf.mxu0
    %v885 = vpop.f32.mrf.mxu0
    %v886 = vadd.f32 0.0, %v885
    %v887 = vpop.f32.mrf.mxu0
    %888 = vmatprep.mubr.bf16.mxu0 0
    %889 = vmatmul.mubr.bf16.gmra.mxu0 %v429
    %v890 = vpop.f32.mrf.mxu0
    %v891 = vadd.f32 0.0, %v890
    %v892 = vpop.f32.mrf.mxu0
    %v893 = vpop.f32.mrf.mxu0
    %v894 = vadd.f32 0.0, %v893
    %v895 = vpop.f32.mrf.mxu0
    %896 = vdwg.mxu0
    %897 = vst [vmem:[#allocation2 + $0x60] sm:$0xff] %v883
    %898 = vst [vmem:[#allocation2 + $0x68] sm:$0xff] %v886
    %899 = vst [vmem:[#allocation2 + $0x70] sm:$0xff] %v891
    %900 = vst [vmem:[#allocation2 + $0x78] sm:$0xff] %v894
    %v901 = vld [vmem:[#allocation2] sm:$0xff]
    %v902 = vld [vmem:[#allocation2 + $0x8] sm:$0xff]
    %v903 = vld [vmem:[#allocation2 + $0x10] sm:$0xff]
    %v904 = vld [vmem:[#allocation2 + $0x18] sm:$0xff]
    %v905 = vld [vmem:[#allocation2 + $0x20] sm:$0xff]
    %v906 = vld [vmem:[#allocation2 + $0x28] sm:$0xff]
    %v907 = vld [vmem:[#allocation2 + $0x30] sm:$0xff]
    %v908 = vld [vmem:[#allocation2 + $0x38] sm:$0xff]
    %v909 = vld [vmem:[#allocation2 + $0x40] sm:$0xff]
    %v910 = vld [vmem:[#allocation2 + $0x48] sm:$0xff]
    %v911 = vld [vmem:[#allocation2 + $0x50] sm:$0xff]
    %v912 = vld [vmem:[#allocation2 + $0x58] sm:$0xff]
    %v913 = vld [vmem:[#allocation2 + $0x60] sm:$0xff]
    %v914 = vld [vmem:[#allocation2 + $0x68] sm:$0xff]
    %v915 = vld [vmem:[#allocation2 + $0x70] sm:$0xff]
    %v916 = vld [vmem:[#allocation2 + $0x78] sm:$0xff]
    %917 = vmatprep.subr.mxu0 0.0
    %918 = vmatpush1.msra.mxu0 %v916
    %919 = vmatprep.subr.mxu0 0.0
    %920 = vmatpush1.msra.mxu0 %v915
    %921 = vmatprep.subr.mxu0 0.0
    %922 = vmatpush1.msra.mxu0 %v914
    %923 = vmatprep.subr.mxu0 0.0
    %924 = vmatpush1.msra.mxu0 %v913
    %925 = vmatprep.subr.mxu0 0.0
    %926 = vmatpush1.msra.mxu0 %v912
    %927 = vmatprep.subr.mxu0 0.0
    %928 = vmatpush1.msra.mxu0 %v911
    %929 = vmatprep.subr.mxu0 0.0
    %930 = vmatpush1.msra.mxu0 %v910
    %931 = vmatprep.subr.mxu0 0.0
    %932 = vmatpush1.msra.mxu0 %v909
    %933 = vmatprep.subr.mxu0 0.0
    %934 = vmatpush1.msra.mxu0 %v908
    %935 = vmatprep.subr.mxu0 0.0
    %936 = vmatpush1.msra.mxu0 %v907
    %937 = vmatprep.subr.mxu0 0.0
    %938 = vmatpush1.msra.mxu0 %v906
    %939 = vmatprep.subr.mxu0 0.0
    %940 = vmatpush1.msra.mxu0 %v905
    %941 = vmatprep.subr.mxu0 0.0
    %942 = vmatpush1.msra.mxu0 %v904
    %943 = vmatprep.subr.mxu0 0.0
    %944 = vmatpush1.msra.mxu0 %v903
    %945 = vmatprep.subr.mxu0 0.0
    %946 = vmatpush1.msra.mxu0 %v902
    %947 = vmatprep.subr.mxu0 0.0
    %948 = vmatpush1.msra.mxu0 %v901
    %949 = vmatprep.subr.mxu0 0.0
    %950 = vmatpush2.msra.mxu0 0.0
    %951 = vmatprep.subr.mxu0 0.0
    %952 = vmatpush2.msra.mxu0 0.0
    %953 = vmatprep.subr.mxu0 0.0
    %954 = vmatpush2.msra.mxu0 0.0
    %955 = vmatprep.subr.mxu0 0.0
    %956 = vmatpush2.msra.mxu0 0.0
    %957 = vmatprep.subr.mxu0 0.0
    %958 = vmatpush2.msra.mxu0 0.0
    %959 = vmatprep.subr.mxu0 0.0
    %960 = vmatpush2.msra.mxu0 0.0
    %961 = vmatprep.subr.mxu0 0.0
    %962 = vmatpush2.msra.mxu0 0.0
    %963 = vmatprep.subr.mxu0 0.0
    %964 = vmatpush2.msra.mxu0 0.0
    %965 = vmatprep.subr.mxu0 0.0
    %966 = vmatpush2.msra.mxu0 0.0
    %967 = vmatprep.subr.mxu0 0.0
    %968 = vmatpush2.msra.mxu0 0.0
    %969 = vmatprep.subr.mxu0 0.0
    %970 = vmatpush2.msra.mxu0 0.0
    %971 = vmatprep.subr.mxu0 0.0
    %972 = vmatpush2.msra.mxu0 0.0
    %973 = vmatprep.subr.mxu0 0.0
    %974 = vmatpush2.msra.mxu0 0.0
    %975 = vmatprep.subr.mxu0 0.0
    %976 = vmatpush2.msra.mxu0 0.0
    %977 = vmatprep.subr.mxu0 0.0
    %978 = vmatpush2.msra.mxu0 0.0
    %979 = vmatprep.subr.mxu0 0.0
    %980 = vmatpush2.msra.mxu0 0.0
    %981 = vmatprep.mubr.f32.mxu0 0.0
    %982 = vmatmul.mubr.f32.gmra.mxu0 %v380
    %v983 = vpop.f32.mrf.mxu0
    %v984 = vadd.f32 0.0, %v983
    %v985 = vpop.f32.mrf.mxu0
    %986 = vmatprep.mubr.f32.mxu0 0.0
    %987 = vmatmul.mubr.f32.gmra.mxu0 %v381
    %v988 = vpop.f32.mrf.mxu0
    %v989 = vadd.f32 0.0, %v988
    %v990 = vpop.f32.mrf.mxu0
    %991 = vmatprep.mubr.f32.mxu0 0.0
    %992 = vmatmul.mubr.f32.gmra.mxu0 %v382
    %v993 = vpop.f32.mrf.mxu0
    %v994 = vadd.f32 0.0, %v993
    %v995 = vpop.f32.mrf.mxu0
    %996 = vmatprep.mubr.f32.mxu0 0.0
    %997 = vmatmul.mubr.f32.gmra.mxu0 %v383
    %v998 = vpop.f32.mrf.mxu0
    %v999 = vadd.f32 0.0, %v998
    %v1000 = vpop.f32.mrf.mxu0
    %1001 = vmatprep.mubr.f32.mxu0 0.0
    %1002 = vmatmul.mubr.f32.gmra.mxu0 %v384
    %v1003 = vpop.f32.mrf.mxu0
    %v1004 = vadd.f32 0.0, %v1003
    %v1005 = vpop.f32.mrf.mxu0
    %1006 = vmatprep.mubr.f32.mxu0 0.0
    %1007 = vmatmul.mubr.f32.gmra.mxu0 %v385
    %v1008 = vpop.f32.mrf.mxu0
    %v1009 = vadd.f32 0.0, %v1008
    %v1010 = vpop.f32.mrf.mxu0
    %1011 = vmatprep.mubr.f32.mxu0 0.0
    %1012 = vmatmul.mubr.f32.gmra.mxu0 %v386
    %v1013 = vpop.f32.mrf.mxu0
    %v1014 = vadd.f32 0.0, %v1013
    %v1015 = vpop.f32.mrf.mxu0
    %1016 = vmatprep.mubr.f32.mxu0 0.0
    %1017 = vmatmul.mubr.f32.gmra.mxu0 %v387
    %v1018 = vpop.f32.mrf.mxu0
    %v1019 = vadd.f32 0.0, %v1018
    %v1020 = vpop.f32.mrf.mxu0
    %1021 = vmatprep.mubr.f32.mxu0 0.0
    %1022 = vmatmul.mubr.f32.gmra.mxu0 %v388
    %v1023 = vpop.f32.mrf.mxu0
    %v1024 = vadd.f32 0.0, %v1023
    %v1025 = vpop.f32.mrf.mxu0
    %1026 = vmatprep.mubr.f32.mxu0 0.0
    %1027 = vmatmul.mubr.f32.gmra.mxu0 %v389
    %v1028 = vpop.f32.mrf.mxu0
    %v1029 = vadd.f32 0.0, %v1028
    %v1030 = vpop.f32.mrf.mxu0
    %1031 = vmatprep.mubr.f32.mxu0 0.0
    %1032 = vmatmul.mubr.f32.gmra.mxu0 %v390
    %v1033 = vpop.f32.mrf.mxu0
    %v1034 = vadd.f32 0.0, %v1033
    %v1035 = vpop.f32.mrf.mxu0
    %1036 = vmatprep.mubr.f32.mxu0 0.0
    %1037 = vmatmul.mubr.f32.gmra.mxu0 %v391
    %v1038 = vpop.f32.mrf.mxu0
    %v1039 = vadd.f32 0.0, %v1038
    %v1040 = vpop.f32.mrf.mxu0
    %1041 = vdwg.mxu0
    %v1043 = vsel %vm278, %v392, 0
    %v1046 = vsel %vm278, %v393, 0
    %v1049 = vsel %vm278, %v394, 0
    %v1052 = vsel %vm278, %v395, 0
    %v1055 = vsel %vm278, %v396, 0
    %v1058 = vsel %vm278, %v397, 0
    %v1061 = vsel %vm278, %v398, 0
    %v1064 = vsel %vm278, %v399, 0
    %1066 = vmatprep.subr.mxu0 0.0
    %1067 = vmatpush1.msra.mxu0 0.0
    %1068 = vmatprep.subr.mxu0 0.0
    %1069 = vmatpush1.msra.mxu0 0.0
    %1070 = vmatprep.subr.mxu0 0.0
    %1071 = vmatpush1.msra.mxu0 0.0
    %1072 = vmatprep.subr.mxu0 0.0
    %1073 = vmatpush1.msra.mxu0 0.0
    %1074 = vmatprep.subr.mxu0 0.0
    %1075 = vmatpush1.msra.mxu0 0.0
    %1076 = vmatprep.subr.mxu0 0.0
    %1077 = vmatpush1.msra.mxu0 0.0
    %1078 = vmatprep.subr.mxu0 0.0
    %1079 = vmatpush1.msra.mxu0 0.0
    %1080 = vmatprep.subr.mxu0 0.0
    %1081 = vmatpush1.msra.mxu0 0.0
    %1082 = vmatprep.subr.mxu0 0.0
    %1083 = vmatpush1.msra.mxu0 0.0
    %1084 = vmatprep.subr.mxu0 0.0
    %1085 = vmatpush1.msra.mxu0 0.0
    %1086 = vmatprep.subr.mxu0 0.0
    %1087 = vmatpush1.msra.mxu0 0.0
    %1088 = vmatprep.subr.mxu0 0.0
    %1089 = vmatpush1.msra.mxu0 0.0
    %1090 = vmatprep.subr.mxu0 0.0
    %1091 = vmatpush1.msra.mxu0 %v379
    %1092 = vmatprep.subr.mxu0 0.0
    %1093 = vmatpush1.msra.mxu0 %v378
    %1094 = vmatprep.subr.mxu0 0.0
    %1095 = vmatpush1.msra.mxu0 %v377
    %1096 = vmatprep.subr.mxu0 0.0
    %1097 = vmatpush1.msra.mxu0 %v376
    %1098 = vmatprep.subr.mxu0 0.0
    %1099 = vmatpush2.msra.mxu0 0.0
    %1100 = vmatprep.subr.mxu0 0.0
    %1101 = vmatpush2.msra.mxu0 0.0
    %1102 = vmatprep.subr.mxu0 0.0
    %1103 = vmatpush2.msra.mxu0 0.0
    %1104 = vmatprep.subr.mxu0 0.0
    %1105 = vmatpush2.msra.mxu0 0.0
    %1106 = vmatprep.subr.mxu0 0.0
    %1107 = vmatpush2.msra.mxu0 0.0
    %1108 = vmatprep.subr.mxu0 0.0
    %1109 = vmatpush2.msra.mxu0 0.0
    %1110 = vmatprep.subr.mxu0 0.0
    %1111 = vmatpush2.msra.mxu0 0.0
    %1112 = vmatprep.subr.mxu0 0.0
    %1113 = vmatpush2.msra.mxu0 0.0
    %1114 = vmatprep.subr.mxu0 0.0
    %1115 = vmatpush2.msra.mxu0 0.0
    %1116 = vmatprep.subr.mxu0 0.0
    %1117 = vmatpush2.msra.mxu0 0.0
    %1118 = vmatprep.subr.mxu0 0.0
    %1119 = vmatpush2.msra.mxu0 0.0
    %1120 = vmatprep.subr.mxu0 0.0
    %1121 = vmatpush2.msra.mxu0 0.0
    %1122 = vmatprep.subr.mxu0 0.0
    %1123 = vmatpush2.msra.mxu0 0.0
    %1124 = vmatprep.subr.mxu0 0.0
    %1125 = vmatpush2.msra.mxu0 0.0
    %1126 = vmatprep.subr.mxu0 0.0
    %1127 = vmatpush2.msra.mxu0 0.0
    %1128 = vmatprep.subr.mxu0 0.0
    %1129 = vmatpush2.msra.mxu0 0.0
    %1130 = vmatprep.mubr.f32.mxu0 0.0
    %1131 = vmatmul.mubr.f32.gmra.mxu0 %v1043
    %v1132 = vpop.f32.mrf.mxu0
    %v1133 = vadd.f32 0.0, %v1132
    %v1134 = vpop.f32.mrf.mxu0
    %1135 = vmatprep.mubr.f32.mxu0 0.0
    %1136 = vmatmul.mubr.f32.gmra.mxu0 %v1046
    %v1137 = vpop.f32.mrf.mxu0
    %v1138 = vadd.f32 0.0, %v1137
    %v1139 = vpop.f32.mrf.mxu0
    %1140 = vmatprep.mubr.f32.mxu0 0.0
    %1141 = vmatmul.mubr.f32.gmra.mxu0 %v1049
    %v1142 = vpop.f32.mrf.mxu0
    %v1143 = vadd.f32 0.0, %v1142
    %v1144 = vpop.f32.mrf.mxu0
    %1145 = vmatprep.mubr.f32.mxu0 0.0
    %1146 = vmatmul.mubr.f32.gmra.mxu0 %v1052
    %v1147 = vpop.f32.mrf.mxu0
    %v1148 = vadd.f32 0.0, %v1147
    %v1149 = vpop.f32.mrf.mxu0
    %1150 = vmatprep.mubr.f32.mxu0 0.0
    %1151 = vmatmul.mubr.f32.gmra.mxu0 %v1055
    %v1152 = vpop.f32.mrf.mxu0
    %v1153 = vadd.f32 0.0, %v1152
    %v1154 = vpop.f32.mrf.mxu0
    %1155 = vmatprep.mubr.f32.mxu0 0.0
    %1156 = vmatmul.mubr.f32.gmra.mxu0 %v1058
    %v1157 = vpop.f32.mrf.mxu0
    %v1158 = vadd.f32 0.0, %v1157
    %v1159 = vpop.f32.mrf.mxu0
    %1160 = vmatprep.mubr.f32.mxu0 0.0
    %1161 = vmatmul.mubr.f32.gmra.mxu0 %v1061
    %v1162 = vpop.f32.mrf.mxu0
    %v1163 = vadd.f32 0.0, %v1162
    %v1164 = vpop.f32.mrf.mxu0
    %1165 = vmatprep.mubr.f32.mxu0 0.0
    %1166 = vmatmul.mubr.f32.gmra.mxu0 %v1064
    %v1167 = vpop.f32.mrf.mxu0
    %v1168 = vadd.f32 0.0, %v1167
    %v1169 = vpop.f32.mrf.mxu0
    %1170 = vdwg.mxu0
    %v1171 = vadd.f32 %v984, %v1133
    %v1172 = vadd.f32 %v989, %v1138
    %v1173 = vadd.f32 %v994, %v1143
    %v1174 = vadd.f32 %v999, %v1148
    %v1175 = vadd.f32 %v1171, %v411
    %v1176 = vadd.f32 %v1172, %v416
    %v1177 = vadd.f32 %v1173, %v421
    %v1178 = vadd.f32 %v1174, %v426
    %v1179 = vxor.u32 %v1175, 2147483648
    %v1180 = vxor.u32 %v1176, 2147483648
    %v1181 = vxor.u32 %v1177, 2147483648
    %v1182 = vxor.u32 %v1178, 2147483648
    %v1183 = vmul.f32 %v1179, 1.442695
    %v1184 = vpow.pop %v1183
    %v1185 = vmul.f32 %v1180, 1.442695
    %v1186 = vpow.pop %v1185
    %v1187 = vmul.f32 %v1181, 1.442695
    %v1188 = vpow.pop %v1187
    %v1189 = vmul.f32 %v1182, 1.442695
    %v1190 = vpow.pop %v1189
    %v1191 = vadd.f32 %v1184, 1.0
    %v1192 = vadd.f32 %v1186, 1.0
    %v1193 = vadd.f32 %v1188, 1.0
    %v1194 = vadd.f32 %v1190, 1.0
    %v1195 = vrcp.pop %v1191
    %v1196 = vmul.f32 1.0, %v1195
    %v1197 = vrcp.pop %v1192
    %v1198 = vmul.f32 1.0, %v1197
    %v1199 = vrcp.pop %v1193
    %v1200 = vmul.f32 1.0, %v1199
    %v1201 = vrcp.pop %v1194
    %v1202 = vmul.f32 1.0, %v1201
    %v1203 = vadd.f32 %v1004, %v1153
    %v1204 = vadd.f32 %v1009, %v1158
    %v1205 = vadd.f32 %v1014, %v1163
    %v1206 = vadd.f32 %v1019, %v1168
    %v1207 = vxor.u32 %v1203, 2147483648
    %v1208 = vxor.u32 %v1204, 2147483648
    %v1209 = vxor.u32 %v1205, 2147483648
    %v1210 = vxor.u32 %v1206, 2147483648
    %v1211 = vmul.f32 %v1207, 1.442695
    %v1212 = vpow.pop %v1211
    %v1213 = vmul.f32 %v1208, 1.442695
    %v1214 = vpow.pop %v1213
    %v1215 = vmul.f32 %v1209, 1.442695
    %v1216 = vpow.pop %v1215
    %v1217 = vmul.f32 %v1210, 1.442695
    %v1218 = vpow.pop %v1217
    %v1219 = vadd.f32 %v1212, 1.0
    %v1220 = vadd.f32 %v1214, 1.0
    %v1221 = vadd.f32 %v1216, 1.0
    %v1222 = vadd.f32 %v1218, 1.0
    %v1223 = vrcp.pop %v1219
    %v1224 = vmul.f32 1.0, %v1223
    %v1225 = vrcp.pop %v1220
    %v1226 = vmul.f32 1.0, %v1225
    %v1227 = vrcp.pop %v1221
    %v1228 = vmul.f32 1.0, %v1227
    %v1229 = vrcp.pop %v1222
    %v1230 = vmul.f32 1.0, %v1229
    %v1231 = vmul.f32 %v1224, %v376
    %v1232 = vmul.f32 %v1226, %v377
    %v1233 = vmul.f32 %v1228, %v378
    %v1234 = vmul.f32 %v1230, %v379
    %v1236 = vsel %vm278, %v400, 0
    %v1239 = vsel %vm278, %v401, 0
    %v1242 = vsel %vm278, %v402, 0
    %v1245 = vsel %vm278, %v403, 0
    %1247 = vmatprep.subr.mxu0 0.0
    %1248 = vmatpush1.msra.mxu0 0.0
    %1249 = vmatprep.subr.mxu0 0.0
    %1250 = vmatpush1.msra.mxu0 0.0
    %1251 = vmatprep.subr.mxu0 0.0
    %1252 = vmatpush1.msra.mxu0 0.0
    %1253 = vmatprep.subr.mxu0 0.0
    %1254 = vmatpush1.msra.mxu0 0.0
    %1255 = vmatprep.subr.mxu0 0.0
    %1256 = vmatpush1.msra.mxu0 0.0
    %1257 = vmatprep.subr.mxu0 0.0
    %1258 = vmatpush1.msra.mxu0 0.0
    %1259 = vmatprep.subr.mxu0 0.0
    %1260 = vmatpush1.msra.mxu0 0.0
    %1261 = vmatprep.subr.mxu0 0.0
    %1262 = vmatpush1.msra.mxu0 0.0
    %1263 = vmatprep.subr.mxu0 0.0
    %1264 = vmatpush1.msra.mxu0 0.0
    %1265 = vmatprep.subr.mxu0 0.0
    %1266 = vmatpush1.msra.mxu0 0.0
    %1267 = vmatprep.subr.mxu0 0.0
    %1268 = vmatpush1.msra.mxu0 0.0
    %1269 = vmatprep.subr.mxu0 0.0
    %1270 = vmatpush1.msra.mxu0 0.0
    %1271 = vmatprep.subr.mxu0 0.0
    %1272 = vmatpush1.msra.mxu0 %v1234
    %1273 = vmatprep.subr.mxu0 0.0
    %1274 = vmatpush1.msra.mxu0 %v1233
    %1275 = vmatprep.subr.mxu0 0.0
    %1276 = vmatpush1.msra.mxu0 %v1232
    %1277 = vmatprep.subr.mxu0 0.0
    %1278 = vmatpush1.msra.mxu0 %v1231
    %1279 = vmatprep.subr.mxu0 0.0
    %1280 = vmatpush2.msra.mxu0 0.0
    %1281 = vmatprep.subr.mxu0 0.0
    %1282 = vmatpush2.msra.mxu0 0.0
    %1283 = vmatprep.subr.mxu0 0.0
    %1284 = vmatpush2.msra.mxu0 0.0
    %1285 = vmatprep.subr.mxu0 0.0
    %1286 = vmatpush2.msra.mxu0 0.0
    %1287 = vmatprep.subr.mxu0 0.0
    %1288 = vmatpush2.msra.mxu0 0.0
    %1289 = vmatprep.subr.mxu0 0.0
    %1290 = vmatpush2.msra.mxu0 0.0
    %1291 = vmatprep.subr.mxu0 0.0
    %1292 = vmatpush2.msra.mxu0 0.0
    %1293 = vmatprep.subr.mxu0 0.0
    %1294 = vmatpush2.msra.mxu0 0.0
    %1295 = vmatprep.subr.mxu0 0.0
    %1296 = vmatpush2.msra.mxu0 0.0
    %1297 = vmatprep.subr.mxu0 0.0
    %1298 = vmatpush2.msra.mxu0 0.0
    %1299 = vmatprep.subr.mxu0 0.0
    %1300 = vmatpush2.msra.mxu0 0.0
    %1301 = vmatprep.subr.mxu0 0.0
    %1302 = vmatpush2.msra.mxu0 0.0
    %1303 = vmatprep.subr.mxu0 0.0
    %1304 = vmatpush2.msra.mxu0 0.0
    %1305 = vmatprep.subr.mxu0 0.0
    %1306 = vmatpush2.msra.mxu0 0.0
    %1307 = vmatprep.subr.mxu0 0.0
    %1308 = vmatpush2.msra.mxu0 0.0
    %1309 = vmatprep.subr.mxu0 0.0
    %1310 = vmatpush2.msra.mxu0 0.0
    %1311 = vmatprep.mubr.f32.mxu0 0.0
    %1312 = vmatmul.mubr.f32.gmra.mxu0 %v1236
    %v1313 = vpop.f32.mrf.mxu0
    %v1314 = vadd.f32 0.0, %v1313
    %v1315 = vpop.f32.mrf.mxu0
    %1316 = vmatprep.mubr.f32.mxu0 0.0
    %1317 = vmatmul.mubr.f32.gmra.mxu0 %v1239
    %v1318 = vpop.f32.mrf.mxu0
    %v1319 = vadd.f32 0.0, %v1318
    %v1320 = vpop.f32.mrf.mxu0
    %1321 = vmatprep.mubr.f32.mxu0 0.0
    %1322 = vmatmul.mubr.f32.gmra.mxu0 %v1242
    %v1323 = vpop.f32.mrf.mxu0
    %v1324 = vadd.f32 0.0, %v1323
    %v1325 = vpop.f32.mrf.mxu0
    %1326 = vmatprep.mubr.f32.mxu0 0.0
    %1327 = vmatmul.mubr.f32.gmra.mxu0 %v1245
    %v1328 = vpop.f32.mrf.mxu0
    %v1329 = vadd.f32 0.0, %v1328
    %v1330 = vpop.f32.mrf.mxu0
    %1331 = vdwg.mxu0
    %v1332 = vadd.f32 %v1024, %v1314
    %v1333 = vadd.f32 %v1029, %v1319
    %v1334 = vadd.f32 %v1034, %v1324
    %v1335 = vadd.f32 %v1039, %v1329
    %v1336 = vtanh.pop %v1332
    %v1337 = vtanh.pop %v1333
    %v1338 = vtanh.pop %v1334
    %v1339 = vtanh.pop %v1335
    %v1340 = vsub.f32 1.0, %v1196
    %v1341 = vsub.f32 1.0, %v1198
    %v1342 = vsub.f32 1.0, %v1200
    %v1343 = vsub.f32 1.0, %v1202
    %v1344 = vmul.f32 %v1340, %v376
    %v1345 = vmul.f32 %v1341, %v377
    %v1346 = vmul.f32 %v1342, %v378
    %v1347 = vmul.f32 %v1343, %v379
    %v1348 = vmul.f32 %v1196, %v1336
    %v1349 = vmul.f32 %v1198, %v1337
    %v1350 = vmul.f32 %v1200, %v1338
    %v1351 = vmul.f32 %v1202, %v1339
    %v1352 = vadd.f32 %v1344, %v1348
    %v1353 = vadd.f32 %v1345, %v1349
    %v1354 = vadd.f32 %v1346, %v1350
    %v1355 = vadd.f32 %v1347, %v1351
    %v1356 = vpack.c.bf16 %v1353, %v1352
    %v1357 = vpack.c.bf16 %v1355, %v1354
    %v1358 = vld [vmem:[%s1] sm:$0xf]
    %v1359 = vld [vmem:[%s1 + $0x4] sm:$0xf]
    %v1360 = vld [vmem:[%s1 + $0x8] sm:$0xf]
    %v1361 = vld [vmem:[%s1 + $0xc] sm:$0xf]
    %v1362 = vld [vmem:[%s1 + $0x10] sm:$0xf]
    %v1363 = vld [vmem:[%s1 + $0x14] sm:$0xf]
    %v1364 = vld [vmem:[%s1 + $0x18] sm:$0xf]
    %v1365 = vld [vmem:[%s1 + $0x1c] sm:$0xf]
    %v1366 = vld [vmem:[%s1 + $0x20] sm:$0xf]
    %v1367 = vld [vmem:[%s1 + $0x24] sm:$0xf]
    %v1368 = vld [vmem:[%s1 + $0x28] sm:$0xf]
    %v1369 = vld [vmem:[%s1 + $0x2c] sm:$0xf]
    %v1370 = vld [vmem:[%s1 + $0x30] sm:$0xf]
    %v1371 = vld [vmem:[%s1 + $0x34] sm:$0xf]
    %v1372 = vld [vmem:[%s1 + $0x38] sm:$0xf]
    %v1373 = vld [vmem:[%s1 + $0x3c] sm:$0xf]
    %v1390 = vunpack.c.l.b16 %v1358
    %v1391 = vunpack.c.l.b16 %v1359
    %v1392 = vunpack.c.l.b16 %v1360
    %v1393 = vunpack.c.l.b16 %v1361
    %v1394 = vunpack.c.l.b16 %v1362
    %v1395 = vunpack.c.l.b16 %v1363
    %v1396 = vunpack.c.l.b16 %v1364
    %v1397 = vunpack.c.l.b16 %v1365
    %v1398 = vunpack.c.l.b16 %v1366
    %v1399 = vunpack.c.l.b16 %v1367
    %v1400 = vunpack.c.l.b16 %v1368
    %v1401 = vunpack.c.l.b16 %v1369
    %v1402 = vunpack.c.l.b16 %v1370
    %v1403 = vunpack.c.l.b16 %v1371
    %v1404 = vunpack.c.l.b16 %v1372
    %v1405 = vunpack.c.l.b16 %v1373
    %v1406 = vpack.c.b16 %v1391, %v1390
    %v1407 = vpack.c.b16 %v1393, %v1392
    %v1408 = vpack.c.b16 %v1395, %v1394
    %v1409 = vpack.c.b16 %v1397, %v1396
    %v1410 = vpack.c.b16 %v1399, %v1398
    %v1411 = vpack.c.b16 %v1401, %v1400
    %v1412 = vpack.c.b16 %v1403, %v1402
    %v1413 = vpack.c.b16 %v1405, %v1404
    %1422 = vmatprep.subr.bf16.mxu0 0
    %1423 = vmatpush1.bf16.msra.mxu0 %v1413
    %1424 = vmatprep.subr.bf16.mxu0 0
    %1425 = vmatpush1.bf16.msra.mxu0 %v1412
    %1426 = vmatprep.subr.bf16.mxu0 0
    %1427 = vmatpush1.bf16.msra.mxu0 %v1411
    %1428 = vmatprep.subr.bf16.mxu0 0
    %1429 = vmatpush1.bf16.msra.mxu0 %v1410
    %1430 = vmatprep.subr.bf16.mxu0 0
    %1431 = vmatpush1.bf16.msra.mxu0 %v1409
    %1432 = vmatprep.subr.bf16.mxu0 0
    %1433 = vmatpush1.bf16.msra.mxu0 %v1408
    %1434 = vmatprep.subr.bf16.mxu0 0
    %1435 = vmatpush1.bf16.msra.mxu0 %v1407
    %1436 = vmatprep.subr.bf16.mxu0 0
    %1437 = vmatpush1.bf16.msra.mxu0 %v1406
    %1438 = vmatprep.subr.bf16.mxu0 0
    %1439 = vmatpush2.bf16.msra.mxu0 0
    %1440 = vmatprep.subr.bf16.mxu0 0
    %1441 = vmatpush2.bf16.msra.mxu0 0
    %1442 = vmatprep.subr.bf16.mxu0 0
    %1443 = vmatpush2.bf16.msra.mxu0 0
    %1444 = vmatprep.subr.bf16.mxu0 0
    %1445 = vmatpush2.bf16.msra.mxu0 0
    %1446 = vmatprep.subr.bf16.mxu0 0
    %1447 = vmatpush2.bf16.msra.mxu0 0
    %1448 = vmatprep.subr.bf16.mxu0 0
    %1449 = vmatpush2.bf16.msra.mxu0 0
    %1450 = vmatprep.subr.bf16.mxu0 0
    %1451 = vmatpush2.bf16.msra.mxu0 0
    %1452 = vmatprep.subr.bf16.mxu0 0
    %1453 = vmatpush2.bf16.msra.mxu0 0
    %1454 = vmatprep.mubr.bf16.mxu0 0
    %1455 = vmatmul.mubr.bf16.gmra.mxu0 %v1356
    %v1456 = vpop.f32.mrf.mxu0
    %v1457 = vadd.f32 0.0, %v1456
    %v1458 = vpop.f32.mrf.mxu0
    %v1459 = vpop.f32.mrf.mxu0
    %v1460 = vadd.f32 0.0, %v1459
    %v1461 = vpop.f32.mrf.mxu0
    %1462 = vmatprep.mubr.bf16.mxu0 0
    %1463 = vmatmul.mubr.bf16.gmra.mxu0 %v1357
    %v1464 = vpop.f32.mrf.mxu0
    %v1465 = vadd.f32 0.0, %v1464
    %v1466 = vpop.f32.mrf.mxu0
    %v1467 = vpop.f32.mrf.mxu0
    %v1468 = vadd.f32 0.0, %v1467
    %v1469 = vpop.f32.mrf.mxu0
    %1470 = vdwg.mxu0
    %1471 = vst [vmem:[#allocation2] sm:$0xff] %v1457
    %1472 = vst [vmem:[#allocation2 + $0x8] sm:$0xff] %v1460
    %1473 = vst [vmem:[#allocation2 + $0x10] sm:$0xff] %v1465
    %1474 = vst [vmem:[#allocation2 + $0x18] sm:$0xff] %v1468
    %v1475 = vld [vmem:[%s547] sm:$0xf]
    %v1476 = vld [vmem:[%s547 + $0x4] sm:$0xf]
    %v1477 = vld [vmem:[%s547 + $0x8] sm:$0xf]
    %v1478 = vld [vmem:[%s547 + $0xc] sm:$0xf]
    %v1479 = vld [vmem:[%s547 + $0x10] sm:$0xf]
    %v1480 = vld [vmem:[%s547 + $0x14] sm:$0xf]
    %v1481 = vld [vmem:[%s547 + $0x18] sm:$0xf]
    %v1482 = vld [vmem:[%s547 + $0x1c] sm:$0xf]
    %v1483 = vld [vmem:[%s547 + $0x20] sm:$0xf]
    %v1484 = vld [vmem:[%s547 + $0x24] sm:$0xf]
    %v1485 = vld [vmem:[%s547 + $0x28] sm:$0xf]
    %v1486 = vld [vmem:[%s547 + $0x2c] sm:$0xf]
    %v1487 = vld [vmem:[%s547 + $0x30] sm:$0xf]
    %v1488 = vld [vmem:[%s547 + $0x34] sm:$0xf]
    %v1489 = vld [vmem:[%s547 + $0x38] sm:$0xf]
    %v1490 = vld [vmem:[%s547 + $0x3c] sm:$0xf]
    %v1507 = vunpack.c.l.b16 %v1475
    %v1508 = vunpack.c.l.b16 %v1476
    %v1509 = vunpack.c.l.b16 %v1477
    %v1510 = vunpack.c.l.b16 %v1478
    %v1511 = vunpack.c.l.b16 %v1479
    %v1512 = vunpack.c.l.b16 %v1480
    %v1513 = vunpack.c.l.b16 %v1481
    %v1514 = vunpack.c.l.b16 %v1482
    %v1515 = vunpack.c.l.b16 %v1483
    %v1516 = vunpack.c.l.b16 %v1484
    %v1517 = vunpack.c.l.b16 %v1485
    %v1518 = vunpack.c.l.b16 %v1486
    %v1519 = vunpack.c.l.b16 %v1487
    %v1520 = vunpack.c.l.b16 %v1488
    %v1521 = vunpack.c.l.b16 %v1489
    %v1522 = vunpack.c.l.b16 %v1490
    %v1523 = vpack.c.b16 %v1508, %v1507
    %v1524 = vpack.c.b16 %v1510, %v1509
    %v1525 = vpack.c.b16 %v1512, %v1511
    %v1526 = vpack.c.b16 %v1514, %v1513
    %v1527 = vpack.c.b16 %v1516, %v1515
    %v1528 = vpack.c.b16 %v1518, %v1517
    %v1529 = vpack.c.b16 %v1520, %v1519
    %v1530 = vpack.c.b16 %v1522, %v1521
    %1539 = vmatprep.subr.bf16.mxu0 0
    %1540 = vmatpush1.bf16.msra.mxu0 %v1530
    %1541 = vmatprep.subr.bf16.mxu0 0
    %1542 = vmatpush1.bf16.msra.mxu0 %v1529
    %1543 = vmatprep.subr.bf16.mxu0 0
    %1544 = vmatpush1.bf16.msra.mxu0 %v1528
    %1545 = vmatprep.subr.bf16.mxu0 0
    %1546 = vmatpush1.bf16.msra.mxu0 %v1527
    %1547 = vmatprep.subr.bf16.mxu0 0
    %1548 = vmatpush1.bf16.msra.mxu0 %v1526
    %1549 = vmatprep.subr.bf16.mxu0 0
    %1550 = vmatpush1.bf16.msra.mxu0 %v1525
    %1551 = vmatprep.subr.bf16.mxu0 0
    %1552 = vmatpush1.bf16.msra.mxu0 %v1524
    %1553 = vmatprep.subr.bf16.mxu0 0
    %1554 = vmatpush1.bf16.msra.mxu0 %v1523
    %1555 = vmatprep.subr.bf16.mxu0 0
    %1556 = vmatpush2.bf16.msra.mxu0 0
    %1557 = vmatprep.subr.bf16.mxu0 0
    %1558 = vmatpush2.bf16.msra.mxu0 0
    %1559 = vmatprep.subr.bf16.mxu0 0
    %1560 = vmatpush2.bf16.msra.mxu0 0
    %1561 = vmatprep.subr.bf16.mxu0 0
    %1562 = vmatpush2.bf16.msra.mxu0 0
    %1563 = vmatprep.subr.bf16.mxu0 0
    %1564 = vmatpush2.bf16.msra.mxu0 0
    %1565 = vmatprep.subr.bf16.mxu0 0
    %1566 = vmatpush2.bf16.msra.mxu0 0
    %1567 = vmatprep.subr.bf16.mxu0 0
    %1568 = vmatpush2.bf16.msra.mxu0 0
    %1569 = vmatprep.subr.bf16.mxu0 0
    %1570 = vmatpush2.bf16.msra.mxu0 0
    %1571 = vmatprep.mubr.bf16.mxu0 0
    %1572 = vmatmul.mubr.bf16.gmra.mxu0 %v1356
    %v1573 = vpop.f32.mrf.mxu0
    %v1574 = vadd.f32 0.0, %v1573
    %v1575 = vpop.f32.mrf.mxu0
    %v1576 = vpop.f32.mrf.mxu0
    %v1577 = vadd.f32 0.0, %v1576
    %v1578 = vpop.f32.mrf.mxu0
    %1579 = vmatprep.mubr.bf16.mxu0 0
    %1580 = vmatmul.mubr.bf16.gmra.mxu0 %v1357
    %v1581 = vpop.f32.mrf.mxu0
    %v1582 = vadd.f32 0.0, %v1581
    %v1583 = vpop.f32.mrf.mxu0
    %v1584 = vpop.f32.mrf.mxu0
    %v1585 = vadd.f32 0.0, %v1584
    %v1586 = vpop.f32.mrf.mxu0
    %1587 = vdwg.mxu0
    %1588 = vst [vmem:[#allocation2 + $0x20] sm:$0xff] %v1574
    %1589 = vst [vmem:[#allocation2 + $0x28] sm:$0xff] %v1577
    %1590 = vst [vmem:[#allocation2 + $0x30] sm:$0xff] %v1582
    %1591 = vst [vmem:[#allocation2 + $0x38] sm:$0xff] %v1585
    %v1592 = vld [vmem:[%s665] sm:$0xf]
    %v1593 = vld [vmem:[%s665 + $0x4] sm:$0xf]
    %v1594 = vld [vmem:[%s665 + $0x8] sm:$0xf]
    %v1595 = vld [vmem:[%s665 + $0xc] sm:$0xf]
    %v1596 = vld [vmem:[%s665 + $0x10] sm:$0xf]
    %v1597 = vld [vmem:[%s665 + $0x14] sm:$0xf]
    %v1598 = vld [vmem:[%s665 + $0x18] sm:$0xf]
    %v1599 = vld [vmem:[%s665 + $0x1c] sm:$0xf]
    %v1600 = vld [vmem:[%s665 + $0x20] sm:$0xf]
    %v1601 = vld [vmem:[%s665 + $0x24] sm:$0xf]
    %v1602 = vld [vmem:[%s665 + $0x28] sm:$0xf]
    %v1603 = vld [vmem:[%s665 + $0x2c] sm:$0xf]
    %v1604 = vld [vmem:[%s665 + $0x30] sm:$0xf]
    %v1605 = vld [vmem:[%s665 + $0x34] sm:$0xf]
    %v1606 = vld [vmem:[%s665 + $0x38] sm:$0xf]
    %v1607 = vld [vmem:[%s665 + $0x3c] sm:$0xf]
    %v1624 = vunpack.c.l.b16 %v1592
    %v1625 = vunpack.c.l.b16 %v1593
    %v1626 = vunpack.c.l.b16 %v1594
    %v1627 = vunpack.c.l.b16 %v1595
    %v1628 = vunpack.c.l.b16 %v1596
    %v1629 = vunpack.c.l.b16 %v1597
    %v1630 = vunpack.c.l.b16 %v1598
    %v1631 = vunpack.c.l.b16 %v1599
    %v1632 = vunpack.c.l.b16 %v1600
    %v1633 = vunpack.c.l.b16 %v1601
    %v1634 = vunpack.c.l.b16 %v1602
    %v1635 = vunpack.c.l.b16 %v1603
    %v1636 = vunpack.c.l.b16 %v1604
    %v1637 = vunpack.c.l.b16 %v1605
    %v1638 = vunpack.c.l.b16 %v1606
    %v1639 = vunpack.c.l.b16 %v1607
    %v1640 = vpack.c.b16 %v1625, %v1624
    %v1641 = vpack.c.b16 %v1627, %v1626
    %v1642 = vpack.c.b16 %v1629, %v1628
    %v1643 = vpack.c.b16 %v1631, %v1630
    %v1644 = vpack.c.b16 %v1633, %v1632
    %v1645 = vpack.c.b16 %v1635, %v1634
    %v1646 = vpack.c.b16 %v1637, %v1636
    %v1647 = vpack.c.b16 %v1639, %v1638
    %1656 = vmatprep.subr.bf16.mxu0 0
    %1657 = vmatpush1.bf16.msra.mxu0 %v1647
    %1658 = vmatprep.subr.bf16.mxu0 0
    %1659 = vmatpush1.bf16.msra.mxu0 %v1646
    %1660 = vmatprep.subr.bf16.mxu0 0
    %1661 = vmatpush1.bf16.msra.mxu0 %v1645
    %1662 = vmatprep.subr.bf16.mxu0 0
    %1663 = vmatpush1.bf16.msra.mxu0 %v1644
    %1664 = vmatprep.subr.bf16.mxu0 0
    %1665 = vmatpush1.bf16.msra.mxu0 %v1643
    %1666 = vmatprep.subr.bf16.mxu0 0
    %1667 = vmatpush1.bf16.msra.mxu0 %v1642
    %1668 = vmatprep.subr.bf16.mxu0 0
    %1669 = vmatpush1.bf16.msra.mxu0 %v1641
    %1670 = vmatprep.subr.bf16.mxu0 0
    %1671 = vmatpush1.bf16.msra.mxu0 %v1640
    %1672 = vmatprep.subr.bf16.mxu0 0
    %1673 = vmatpush2.bf16.msra.mxu0 0
    %1674 = vmatprep.subr.bf16.mxu0 0
    %1675 = vmatpush2.bf16.msra.mxu0 0
    %1676 = vmatprep.subr.bf16.mxu0 0
    %1677 = vmatpush2.bf16.msra.mxu0 0
    %1678 = vmatprep.subr.bf16.mxu0 0
    %1679 = vmatpush2.bf16.msra.mxu0 0
    %1680 = vmatprep.subr.bf16.mxu0 0
    %1681 = vmatpush2.bf16.msra.mxu0 0
    %1682 = vmatprep.subr.bf16.mxu0 0
    %1683 = vmatpush2.bf16.msra.mxu0 0
    %1684 = vmatprep.subr.bf16.mxu0 0
    %1685 = vmatpush2.bf16.msra.mxu0 0
    %1686 = vmatprep.subr.bf16.mxu0 0
    %1687 = vmatpush2.bf16.msra.mxu0 0
    %1688 = vmatprep.mubr.bf16.mxu0 0
    %1689 = vmatmul.mubr.bf16.gmra.mxu0 %v1356
    %v1690 = vpop.f32.mrf.mxu0
    %v1691 = vadd.f32 0.0, %v1690
    %v1692 = vpop.f32.mrf.mxu0
    %v1693 = vpop.f32.mrf.mxu0
    %v1694 = vadd.f32 0.0, %v1693
    %v1695 = vpop.f32.mrf.mxu0
    %1696 = vmatprep.mubr.bf16.mxu0 0
    %1697 = vmatmul.mubr.bf16.gmra.mxu0 %v1357
    %v1698 = vpop.f32.mrf.mxu0
    %v1699 = vadd.f32 0.0, %v1698
    %v1700 = vpop.f32.mrf.mxu0
    %v1701 = vpop.f32.mrf.mxu0
    %v1702 = vadd.f32 0.0, %v1701
    %v1703 = vpop.f32.mrf.mxu0
    %1704 = vdwg.mxu0
    %1705 = vst [vmem:[#allocation2 + $0x40] sm:$0xff] %v1691
    %1706 = vst [vmem:[#allocation2 + $0x48] sm:$0xff] %v1694
    %1707 = vst [vmem:[#allocation2 + $0x50] sm:$0xff] %v1699
    %1708 = vst [vmem:[#allocation2 + $0x58] sm:$0xff] %v1702
    %v1709 = vld [vmem:[%s783] sm:$0xf]
    %v1710 = vld [vmem:[%s783 + $0x4] sm:$0xf]
    %v1711 = vld [vmem:[%s783 + $0x8] sm:$0xf]
    %v1712 = vld [vmem:[%s783 + $0xc] sm:$0xf]
    %v1713 = vld [vmem:[%s783 + $0x10] sm:$0xf]
    %v1714 = vld [vmem:[%s783 + $0x14] sm:$0xf]
    %v1715 = vld [vmem:[%s783 + $0x18] sm:$0xf]
    %v1716 = vld [vmem:[%s783 + $0x1c] sm:$0xf]
    %v1717 = vld [vmem:[%s783 + $0x20] sm:$0xf]
    %v1718 = vld [vmem:[%s783 + $0x24] sm:$0xf]
    %v1719 = vld [vmem:[%s783 + $0x28] sm:$0xf]
    %v1720 = vld [vmem:[%s783 + $0x2c] sm:$0xf]
    %v1721 = vld [vmem:[%s783 + $0x30] sm:$0xf]
    %v1722 = vld [vmem:[%s783 + $0x34] sm:$0xf]
    %v1723 = vld [vmem:[%s783 + $0x38] sm:$0xf]
    %v1724 = vld [vmem:[%s783 + $0x3c] sm:$0xf]
    %v1741 = vunpack.c.l.b16 %v1709
    %v1742 = vunpack.c.l.b16 %v1710
    %v1743 = vunpack.c.l.b16 %v1711
    %v1744 = vunpack.c.l.b16 %v1712
    %v1745 = vunpack.c.l.b16 %v1713
    %v1746 = vunpack.c.l.b16 %v1714
    %v1747 = vunpack.c.l.b16 %v1715
    %v1748 = vunpack.c.l.b16 %v1716
    %v1749 = vunpack.c.l.b16 %v1717
    %v1750 = vunpack.c.l.b16 %v1718
    %v1751 = vunpack.c.l.b16 %v1719
    %v1752 = vunpack.c.l.b16 %v1720
    %v1753 = vunpack.c.l.b16 %v1721
    %v1754 = vunpack.c.l.b16 %v1722
    %v1755 = vunpack.c.l.b16 %v1723
    %v1756 = vunpack.c.l.b16 %v1724
    %v1757 = vpack.c.b16 %v1742, %v1741
    %v1758 = vpack.c.b16 %v1744, %v1743
    %v1759 = vpack.c.b16 %v1746, %v1745
    %v1760 = vpack.c.b16 %v1748, %v1747
    %v1761 = vpack.c.b16 %v1750, %v1749
    %v1762 = vpack.c.b16 %v1752, %v1751
    %v1763 = vpack.c.b16 %v1754, %v1753
    %v1764 = vpack.c.b16 %v1756, %v1755
    %1773 = vmatprep.subr.bf16.mxu0 0
    %1774 = vmatpush1.bf16.msra.mxu0 %v1764
    %1775 = vmatprep.subr.bf16.mxu0 0
    %1776 = vmatpush1.bf16.msra.mxu0 %v1763
    %1777 = vmatprep.subr.bf16.mxu0 0
    %1778 = vmatpush1.bf16.msra.mxu0 %v1762
    %1779 = vmatprep.subr.bf16.mxu0 0
    %1780 = vmatpush1.bf16.msra.mxu0 %v1761
    %1781 = vmatprep.subr.bf16.mxu0 0
    %1782 = vmatpush1.bf16.msra.mxu0 %v1760
    %1783 = vmatprep.subr.bf16.mxu0 0
    %1784 = vmatpush1.bf16.msra.mxu0 %v1759
    %1785 = vmatprep.subr.bf16.mxu0 0
    %1786 = vmatpush1.bf16.msra.mxu0 %v1758
    %1787 = vmatprep.subr.bf16.mxu0 0
    %1788 = vmatpush1.bf16.msra.mxu0 %v1757
    %1789 = vmatprep.subr.bf16.mxu0 0
    %1790 = vmatpush2.bf16.msra.mxu0 0
    %1791 = vmatprep.subr.bf16.mxu0 0
    %1792 = vmatpush2.bf16.msra.mxu0 0
    %1793 = vmatprep.subr.bf16.mxu0 0
    %1794 = vmatpush2.bf16.msra.mxu0 0
    %1795 = vmatprep.subr.bf16.mxu0 0
    %1796 = vmatpush2.bf16.msra.mxu0 0
    %1797 = vmatprep.subr.bf16.mxu0 0
    %1798 = vmatpush2.bf16.msra.mxu0 0
    %1799 = vmatprep.subr.bf16.mxu0 0
    %1800 = vmatpush2.bf16.msra.mxu0 0
    %1801 = vmatprep.subr.bf16.mxu0 0
    %1802 = vmatpush2.bf16.msra.mxu0 0
    %1803 = vmatprep.subr.bf16.mxu0 0
    %1804 = vmatpush2.bf16.msra.mxu0 0
    %1805 = vmatprep.mubr.bf16.mxu0 0
    %1806 = vmatmul.mubr.bf16.gmra.mxu0 %v1356
    %v1807 = vpop.f32.mrf.mxu0
    %v1808 = vadd.f32 0.0, %v1807
    %v1809 = vpop.f32.mrf.mxu0
    %v1810 = vpop.f32.mrf.mxu0
    %v1811 = vadd.f32 0.0, %v1810
    %v1812 = vpop.f32.mrf.mxu0
    %1813 = vmatprep.mubr.bf16.mxu0 0
    %1814 = vmatmul.mubr.bf16.gmra.mxu0 %v1357
    %v1815 = vpop.f32.mrf.mxu0
    %v1816 = vadd.f32 0.0, %v1815
    %v1817 = vpop.f32.mrf.mxu0
    %v1818 = vpop.f32.mrf.mxu0
    %v1819 = vadd.f32 0.0, %v1818
    %v1820 = vpop.f32.mrf.mxu0
    %1821 = vdwg.mxu0
    %1822 = vst [vmem:[#allocation2 + $0x60] sm:$0xff] %v1808
    %1823 = vst [vmem:[#allocation2 + $0x68] sm:$0xff] %v1811
    %1824 = vst [vmem:[#allocation2 + $0x70] sm:$0xff] %v1816
    %1825 = vst [vmem:[#allocation2 + $0x78] sm:$0xff] %v1819
    %v1826 = vld [vmem:[#allocation2] sm:$0xff]
    %v1827 = vld [vmem:[#allocation2 + $0x8] sm:$0xff]
    %v1828 = vld [vmem:[#allocation2 + $0x10] sm:$0xff]
    %v1829 = vld [vmem:[#allocation2 + $0x18] sm:$0xff]
    %v1830 = vld [vmem:[#allocation2 + $0x20] sm:$0xff]
    %v1831 = vld [vmem:[#allocation2 + $0x28] sm:$0xff]
    %v1832 = vld [vmem:[#allocation2 + $0x30] sm:$0xff]
    %v1833 = vld [vmem:[#allocation2 + $0x38] sm:$0xff]
    %v1834 = vld [vmem:[#allocation2 + $0x40] sm:$0xff]
    %v1835 = vld [vmem:[#allocation2 + $0x48] sm:$0xff]
    %v1836 = vld [vmem:[#allocation2 + $0x50] sm:$0xff]
    %v1837 = vld [vmem:[#allocation2 + $0x58] sm:$0xff]
    %v1838 = vld [vmem:[#allocation2 + $0x60] sm:$0xff]
    %v1839 = vld [vmem:[#allocation2 + $0x68] sm:$0xff]
    %v1840 = vld [vmem:[#allocation2 + $0x70] sm:$0xff]
    %v1841 = vld [vmem:[#allocation2 + $0x78] sm:$0xff]
    %1842 = vmatprep.subr.mxu0 0.0
    %1843 = vmatpush1.msra.mxu0 %v1841
    %1844 = vmatprep.subr.mxu0 0.0
    %1845 = vmatpush1.msra.mxu0 %v1840
    %1846 = vmatprep.subr.mxu0 0.0
    %1847 = vmatpush1.msra.mxu0 %v1839
    %1848 = vmatprep.subr.mxu0 0.0
    %1849 = vmatpush1.msra.mxu0 %v1838
    %1850 = vmatprep.subr.mxu0 0.0
    %1851 = vmatpush1.msra.mxu0 %v1837
    %1852 = vmatprep.subr.mxu0 0.0
    %1853 = vmatpush1.msra.mxu0 %v1836
    %1854 = vmatprep.subr.mxu0 0.0
    %1855 = vmatpush1.msra.mxu0 %v1835
    %1856 = vmatprep.subr.mxu0 0.0
    %1857 = vmatpush1.msra.mxu0 %v1834
    %1858 = vmatprep.subr.mxu0 0.0
    %1859 = vmatpush1.msra.mxu0 %v1833
    %1860 = vmatprep.subr.mxu0 0.0
    %1861 = vmatpush1.msra.mxu0 %v1832
    %1862 = vmatprep.subr.mxu0 0.0
    %1863 = vmatpush1.msra.mxu0 %v1831
    %1864 = vmatprep.subr.mxu0 0.0
    %1865 = vmatpush1.msra.mxu0 %v1830
    %1866 = vmatprep.subr.mxu0 0.0
    %1867 = vmatpush1.msra.mxu0 %v1829
    %1868 = vmatprep.subr.mxu0 0.0
    %1869 = vmatpush1.msra.mxu0 %v1828
    %1870 = vmatprep.subr.mxu0 0.0
    %1871 = vmatpush1.msra.mxu0 %v1827
    %1872 = vmatprep.subr.mxu0 0.0
    %1873 = vmatpush1.msra.mxu0 %v1826
    %1874 = vmatprep.subr.mxu0 0.0
    %1875 = vmatpush2.msra.mxu0 0.0
    %1876 = vmatprep.subr.mxu0 0.0
    %1877 = vmatpush2.msra.mxu0 0.0
    %1878 = vmatprep.subr.mxu0 0.0
    %1879 = vmatpush2.msra.mxu0 0.0
    %1880 = vmatprep.subr.mxu0 0.0
    %1881 = vmatpush2.msra.mxu0 0.0
    %1882 = vmatprep.subr.mxu0 0.0
    %1883 = vmatpush2.msra.mxu0 0.0
    %1884 = vmatprep.subr.mxu0 0.0
    %1885 = vmatpush2.msra.mxu0 0.0
    %1886 = vmatprep.subr.mxu0 0.0
    %1887 = vmatpush2.msra.mxu0 0.0
    %1888 = vmatprep.subr.mxu0 0.0
    %1889 = vmatpush2.msra.mxu0 0.0
    %1890 = vmatprep.subr.mxu0 0.0
    %1891 = vmatpush2.msra.mxu0 0.0
    %1892 = vmatprep.subr.mxu0 0.0
    %1893 = vmatpush2.msra.mxu0 0.0
    %1894 = vmatprep.subr.mxu0 0.0
    %1895 = vmatpush2.msra.mxu0 0.0
    %1896 = vmatprep.subr.mxu0 0.0
    %1897 = vmatpush2.msra.mxu0 0.0
    %1898 = vmatprep.subr.mxu0 0.0
    %1899 = vmatpush2.msra.mxu0 0.0
    %1900 = vmatprep.subr.mxu0 0.0
    %1901 = vmatpush2.msra.mxu0 0.0
    %1902 = vmatprep.subr.mxu0 0.0
    %1903 = vmatpush2.msra.mxu0 0.0
    %1904 = vmatprep.subr.mxu0 0.0
    %1905 = vmatpush2.msra.mxu0 0.0
    %1906 = vmatprep.mubr.f32.mxu0 0.0
    %1907 = vmatmul.mubr.f32.gmra.mxu0 %v380
    %v1908 = vpop.f32.mrf.mxu0
    %v1909 = vadd.f32 0.0, %v1908
    %v1910 = vpop.f32.mrf.mxu0
    %1911 = vmatprep.mubr.f32.mxu0 0.0
    %1912 = vmatmul.mubr.f32.gmra.mxu0 %v381
    %v1913 = vpop.f32.mrf.mxu0
    %v1914 = vadd.f32 0.0, %v1913
    %v1915 = vpop.f32.mrf.mxu0
    %1916 = vmatprep.mubr.f32.mxu0 0.0
    %1917 = vmatmul.mubr.f32.gmra.mxu0 %v382
    %v1918 = vpop.f32.mrf.mxu0
    %v1919 = vadd.f32 0.0, %v1918
    %v1920 = vpop.f32.mrf.mxu0
    %1921 = vmatprep.mubr.f32.mxu0 0.0
    %1922 = vmatmul.mubr.f32.gmra.mxu0 %v383
    %v1923 = vpop.f32.mrf.mxu0
    %v1924 = vadd.f32 0.0, %v1923
    %v1925 = vpop.f32.mrf.mxu0
    %1926 = vmatprep.mubr.f32.mxu0 0.0
    %1927 = vmatmul.mubr.f32.gmra.mxu0 %v384
    %v1928 = vpop.f32.mrf.mxu0
    %v1929 = vadd.f32 0.0, %v1928
    %v1930 = vpop.f32.mrf.mxu0
    %1931 = vmatprep.mubr.f32.mxu0 0.0
    %1932 = vmatmul.mubr.f32.gmra.mxu0 %v385
    %v1933 = vpop.f32.mrf.mxu0
    %v1934 = vadd.f32 0.0, %v1933
    %v1935 = vpop.f32.mrf.mxu0
    %1936 = vmatprep.mubr.f32.mxu0 0.0
    %1937 = vmatmul.mubr.f32.gmra.mxu0 %v386
    %v1938 = vpop.f32.mrf.mxu0
    %v1939 = vadd.f32 0.0, %v1938
    %v1940 = vpop.f32.mrf.mxu0
    %1941 = vmatprep.mubr.f32.mxu0 0.0
    %1942 = vmatmul.mubr.f32.gmra.mxu0 %v387
    %v1943 = vpop.f32.mrf.mxu0
    %v1944 = vadd.f32 0.0, %v1943
    %v1945 = vpop.f32.mrf.mxu0
    %1946 = vmatprep.mubr.f32.mxu0 0.0
    %1947 = vmatmul.mubr.f32.gmra.mxu0 %v388
    %v1948 = vpop.f32.mrf.mxu0
    %v1949 = vadd.f32 0.0, %v1948
    %v1950 = vpop.f32.mrf.mxu0
    %1951 = vmatprep.mubr.f32.mxu0 0.0
    %1952 = vmatmul.mubr.f32.gmra.mxu0 %v389
    %v1953 = vpop.f32.mrf.mxu0
    %v1954 = vadd.f32 0.0, %v1953
    %v1955 = vpop.f32.mrf.mxu0
    %1956 = vmatprep.mubr.f32.mxu0 0.0
    %1957 = vmatmul.mubr.f32.gmra.mxu0 %v390
    %v1958 = vpop.f32.mrf.mxu0
    %v1959 = vadd.f32 0.0, %v1958
    %v1960 = vpop.f32.mrf.mxu0
    %1961 = vmatprep.mubr.f32.mxu0 0.0
    %1962 = vmatmul.mubr.f32.gmra.mxu0 %v391
    %v1963 = vpop.f32.mrf.mxu0
    %v1964 = vadd.f32 0.0, %v1963
    %v1965 = vpop.f32.mrf.mxu0
    %1966 = vdwg.mxu0
    %1967 = vmatprep.subr.mxu0 0.0
    %1968 = vmatpush1.msra.mxu0 0.0
    %1969 = vmatprep.subr.mxu0 0.0
    %1970 = vmatpush1.msra.mxu0 0.0
    %1971 = vmatprep.subr.mxu0 0.0
    %1972 = vmatpush1.msra.mxu0 0.0
    %1973 = vmatprep.subr.mxu0 0.0
    %1974 = vmatpush1.msra.mxu0 0.0
    %1975 = vmatprep.subr.mxu0 0.0
    %1976 = vmatpush1.msra.mxu0 0.0
    %1977 = vmatprep.subr.mxu0 0.0
    %1978 = vmatpush1.msra.mxu0 0.0
    %1979 = vmatprep.subr.mxu0 0.0
    %1980 = vmatpush1.msra.mxu0 0.0
    %1981 = vmatprep.subr.mxu0 0.0
    %1982 = vmatpush1.msra.mxu0 0.0
    %1983 = vmatprep.subr.mxu0 0.0
    %1984 = vmatpush1.msra.mxu0 0.0
    %1985 = vmatprep.subr.mxu0 0.0
    %1986 = vmatpush1.msra.mxu0 0.0
    %1987 = vmatprep.subr.mxu0 0.0
    %1988 = vmatpush1.msra.mxu0 0.0
    %1989 = vmatprep.subr.mxu0 0.0
    %1990 = vmatpush1.msra.mxu0 0.0
    %1991 = vmatprep.subr.mxu0 0.0
    %1992 = vmatpush1.msra.mxu0 %v1355
    %1993 = vmatprep.subr.mxu0 0.0
    %1994 = vmatpush1.msra.mxu0 %v1354
    %1995 = vmatprep.subr.mxu0 0.0
    %1996 = vmatpush1.msra.mxu0 %v1353
    %1997 = vmatprep.subr.mxu0 0.0
    %1998 = vmatpush1.msra.mxu0 %v1352
    %1999 = vmatprep.subr.mxu0 0.0
    %2000 = vmatpush2.msra.mxu0 0.0
    %2001 = vmatprep.subr.mxu0 0.0
    %2002 = vmatpush2.msra.mxu0 0.0
    %2003 = vmatprep.subr.mxu0 0.0
    %2004 = vmatpush2.msra.mxu0 0.0
    %2005 = vmatprep.subr.mxu0 0.0
    %2006 = vmatpush2.msra.mxu0 0.0
    %2007 = vmatprep.subr.mxu0 0.0
    %2008 = vmatpush2.msra.mxu0 0.0
    %2009 = vmatprep.subr.mxu0 0.0
    %2010 = vmatpush2.msra.mxu0 0.0
    %2011 = vmatprep.subr.mxu0 0.0
    %2012 = vmatpush2.msra.mxu0 0.0
    %2013 = vmatprep.subr.mxu0 0.0
    %2014 = vmatpush2.msra.mxu0 0.0
    %2015 = vmatprep.subr.mxu0 0.0
    %2016 = vmatpush2.msra.mxu0 0.0
    %2017 = vmatprep.subr.mxu0 0.0
    %2018 = vmatpush2.msra.mxu0 0.0
    %2019 = vmatprep.subr.mxu0 0.0
    %2020 = vmatpush2.msra.mxu0 0.0
    %2021 = vmatprep.subr.mxu0 0.0
    %2022 = vmatpush2.msra.mxu0 0.0
    %2023 = vmatprep.subr.mxu0 0.0
    %2024 = vmatpush2.msra.mxu0 0.0
    %2025 = vmatprep.subr.mxu0 0.0
    %2026 = vmatpush2.msra.mxu0 0.0
    %2027 = vmatprep.subr.mxu0 0.0
    %2028 = vmatpush2.msra.mxu0 0.0
    %2029 = vmatprep.subr.mxu0 0.0
    %2030 = vmatpush2.msra.mxu0 0.0
    %2031 = vmatprep.mubr.f32.mxu0 0.0
    %2032 = vmatmul.mubr.f32.gmra.mxu0 %v1043
    %v2033 = vpop.f32.mrf.mxu0
    %v2034 = vadd.f32 0.0, %v2033
    %v2035 = vpop.f32.mrf.mxu0
    %2036 = vmatprep.mubr.f32.mxu0 0.0
    %2037 = vmatmul.mubr.f32.gmra.mxu0 %v1046
    %v2038 = vpop.f32.mrf.mxu0
    %v2039 = vadd.f32 0.0, %v2038
    %v2040 = vpop.f32.mrf.mxu0
    %2041 = vmatprep.mubr.f32.mxu0 0.0
    %2042 = vmatmul.mubr.f32.gmra.mxu0 %v1049
    %v2043 = vpop.f32.mrf.mxu0
    %v2044 = vadd.f32 0.0, %v2043
    %v2045 = vpop.f32.mrf.mxu0
    %2046 = vmatprep.mubr.f32.mxu0 0.0
    %2047 = vmatmul.mubr.f32.gmra.mxu0 %v1052
    %v2048 = vpop.f32.mrf.mxu0
    %v2049 = vadd.f32 0.0, %v2048
    %v2050 = vpop.f32.mrf.mxu0
    %2051 = vmatprep.mubr.f32.mxu0 0.0
    %2052 = vmatmul.mubr.f32.gmra.mxu0 %v1055
    %v2053 = vpop.f32.mrf.mxu0
    %v2054 = vadd.f32 0.0, %v2053
    %v2055 = vpop.f32.mrf.mxu0
    %2056 = vmatprep.mubr.f32.mxu0 0.0
    %2057 = vmatmul.mubr.f32.gmra.mxu0 %v1058
    %v2058 = vpop.f32.mrf.mxu0
    %v2059 = vadd.f32 0.0, %v2058
    %v2060 = vpop.f32.mrf.mxu0
    %2061 = vmatprep.mubr.f32.mxu0 0.0
    %2062 = vmatmul.mubr.f32.gmra.mxu0 %v1061
    %v2063 = vpop.f32.mrf.mxu0
    %v2064 = vadd.f32 0.0, %v2063
    %v2065 = vpop.f32.mrf.mxu0
    %2066 = vmatprep.mubr.f32.mxu0 0.0
    %2067 = vmatmul.mubr.f32.gmra.mxu0 %v1064
    %v2068 = vpop.f32.mrf.mxu0
    %v2069 = vadd.f32 0.0, %v2068
    %v2070 = vpop.f32.mrf.mxu0
    %2071 = vdwg.mxu0
    %v2072 = vadd.f32 %v1909, %v2034
    %v2073 = vadd.f32 %v1914, %v2039
    %v2074 = vadd.f32 %v1919, %v2044
    %v2075 = vadd.f32 %v1924, %v2049
    %v2076 = vadd.f32 %v2072, %v411
    %v2077 = vadd.f32 %v2073, %v416
    %v2078 = vadd.f32 %v2074, %v421
    %v2079 = vadd.f32 %v2075, %v426
    %v2080 = vxor.u32 %v2076, 2147483648
    %v2081 = vxor.u32 %v2077, 2147483648
    %v2082 = vxor.u32 %v2078, 2147483648
    %v2083 = vxor.u32 %v2079, 2147483648
    %v2084 = vmul.f32 %v2080, 1.442695
    %v2085 = vpow.pop %v2084
    %v2086 = vmul.f32 %v2081, 1.442695
    %v2087 = vpow.pop %v2086
    %v2088 = vmul.f32 %v2082, 1.442695
    %v2089 = vpow.pop %v2088
    %v2090 = vmul.f32 %v2083, 1.442695
    %v2091 = vpow.pop %v2090
    %v2092 = vadd.f32 %v2085, 1.0
    %v2093 = vadd.f32 %v2087, 1.0
    %v2094 = vadd.f32 %v2089, 1.0
    %v2095 = vadd.f32 %v2091, 1.0
    %v2096 = vrcp.pop %v2092
    %v2097 = vmul.f32 1.0, %v2096
    %v2098 = vrcp.pop %v2093
    %v2099 = vmul.f32 1.0, %v2098
    %v2100 = vrcp.pop %v2094
    %v2101 = vmul.f32 1.0, %v2100
    %v2102 = vrcp.pop %v2095
    %v2103 = vmul.f32 1.0, %v2102
    %v2104 = vadd.f32 %v1929, %v2054
    %v2105 = vadd.f32 %v1934, %v2059
    %v2106 = vadd.f32 %v1939, %v2064
    %v2107 = vadd.f32 %v1944, %v2069
    %v2108 = vxor.u32 %v2104, 2147483648
    %v2109 = vxor.u32 %v2105, 2147483648
    %v2110 = vxor.u32 %v2106, 2147483648
    %v2111 = vxor.u32 %v2107, 2147483648
    %v2112 = vmul.f32 %v2108, 1.442695
    %v2113 = vpow.pop %v2112
    %v2114 = vmul.f32 %v2109, 1.442695
    %v2115 = vpow.pop %v2114
    %v2116 = vmul.f32 %v2110, 1.442695
    %v2117 = vpow.pop %v2116
    %v2118 = vmul.f32 %v2111, 1.442695
    %v2119 = vpow.pop %v2118
    %v2120 = vadd.f32 %v2113, 1.0
    %v2121 = vadd.f32 %v2115, 1.0
    %v2122 = vadd.f32 %v2117, 1.0
    %v2123 = vadd.f32 %v2119, 1.0
    %v2124 = vrcp.pop %v2120
    %v2125 = vmul.f32 1.0, %v2124
    %v2126 = vrcp.pop %v2121
    %v2127 = vmul.f32 1.0, %v2126
    %v2128 = vrcp.pop %v2122
    %v2129 = vmul.f32 1.0, %v2128
    %v2130 = vrcp.pop %v2123
    %v2131 = vmul.f32 1.0, %v2130
    %v2132 = vmul.f32 %v2125, %v1352
    %v2133 = vmul.f32 %v2127, %v1353
    %v2134 = vmul.f32 %v2129, %v1354
    %v2135 = vmul.f32 %v2131, %v1355
    %2136 = vmatprep.subr.mxu0 0.0
    %2137 = vmatpush1.msra.mxu0 0.0
    %2138 = vmatprep.subr.mxu0 0.0
    %2139 = vmatpush1.msra.mxu0 0.0
    %2140 = vmatprep.subr.mxu0 0.0
    %2141 = vmatpush1.msra.mxu0 0.0
    %2142 = vmatprep.subr.mxu0 0.0
    %2143 = vmatpush1.msra.mxu0 0.0
    %2144 = vmatprep.subr.mxu0 0.0
    %2145 = vmatpush1.msra.mxu0 0.0
    %2146 = vmatprep.subr.mxu0 0.0
    %2147 = vmatpush1.msra.mxu0 0.0
    %2148 = vmatprep.subr.mxu0 0.0
    %2149 = vmatpush1.msra.mxu0 0.0
    %2150 = vmatprep.subr.mxu0 0.0
    %2151 = vmatpush1.msra.mxu0 0.0
    %2152 = vmatprep.subr.mxu0 0.0
    %2153 = vmatpush1.msra.mxu0 0.0
    %2154 = vmatprep.subr.mxu0 0.0
    %2155 = vmatpush1.msra.mxu0 0.0
    %2156 = vmatprep.subr.mxu0 0.0
    %2157 = vmatpush1.msra.mxu0 0.0
    %2158 = vmatprep.subr.mxu0 0.0
    %2159 = vmatpush1.msra.mxu0 0.0
    %2160 = vmatprep.subr.mxu0 0.0
    %2161 = vmatpush1.msra.mxu0 %v2135
    %2162 = vmatprep.subr.mxu0 0.0
    %2163 = vmatpush1.msra.mxu0 %v2134
    %2164 = vmatprep.subr.mxu0 0.0
    %2165 = vmatpush1.msra.mxu0 %v2133
    %2166 = vmatprep.subr.mxu0 0.0
    %2167 = vmatpush1.msra.mxu0 %v2132
    %2168 = vmatprep.subr.mxu0 0.0
    %2169 = vmatpush2.msra.mxu0 0.0
    %2170 = vmatprep.subr.mxu0 0.0
    %2171 = vmatpush2.msra.mxu0 0.0
    %2172 = vmatprep.subr.mxu0 0.0
    %2173 = vmatpush2.msra.mxu0 0.0
    %2174 = vmatprep.subr.mxu0 0.0
    %2175 = vmatpush2.msra.mxu0 0.0
    %2176 = vmatprep.subr.mxu0 0.0
    %2177 = vmatpush2.msra.mxu0 0.0
    %2178 = vmatprep.subr.mxu0 0.0
    %2179 = vmatpush2.msra.mxu0 0.0
    %2180 = vmatprep.subr.mxu0 0.0
    %2181 = vmatpush2.msra.mxu0 0.0
    %2182 = vmatprep.subr.mxu0 0.0
    %2183 = vmatpush2.msra.mxu0 0.0
    %2184 = vmatprep.subr.mxu0 0.0
    %2185 = vmatpush2.msra.mxu0 0.0
    %2186 = vmatprep.subr.mxu0 0.0
    %2187 = vmatpush2.msra.mxu0 0.0
    %2188 = vmatprep.subr.mxu0 0.0
    %2189 = vmatpush2.msra.mxu0 0.0
    %2190 = vmatprep.subr.mxu0 0.0
    %2191 = vmatpush2.msra.mxu0 0.0
    %2192 = vmatprep.subr.mxu0 0.0
    %2193 = vmatpush2.msra.mxu0 0.0
    %2194 = vmatprep.subr.mxu0 0.0
    %2195 = vmatpush2.msra.mxu0 0.0
    %2196 = vmatprep.subr.mxu0 0.0
    %2197 = vmatpush2.msra.mxu0 0.0
    %2198 = vmatprep.subr.mxu0 0.0
    %2199 = vmatpush2.msra.mxu0 0.0
    %2200 = vmatprep.mubr.f32.mxu0 0.0
    %2201 = vmatmul.mubr.f32.gmra.mxu0 %v1236
    %v2202 = vpop.f32.mrf.mxu0
    %v2203 = vadd.f32 0.0, %v2202
    %v2204 = vpop.f32.mrf.mxu0
    %2205 = vmatprep.mubr.f32.mxu0 0.0
    %2206 = vmatmul.mubr.f32.gmra.mxu0 %v1239
    %v2207 = vpop.f32.mrf.mxu0
    %v2208 = vadd.f32 0.0, %v2207
    %v2209 = vpop.f32.mrf.mxu0
    %2210 = vmatprep.mubr.f32.mxu0 0.0
    %2211 = vmatmul.mubr.f32.gmra.mxu0 %v1242
    %v2212 = vpop.f32.mrf.mxu0
    %v2213 = vadd.f32 0.0, %v2212
    %v2214 = vpop.f32.mrf.mxu0
    %2215 = vmatprep.mubr.f32.mxu0 0.0
    %2216 = vmatmul.mubr.f32.gmra.mxu0 %v1245
    %v2217 = vpop.f32.mrf.mxu0
    %v2218 = vadd.f32 0.0, %v2217
    %v2219 = vpop.f32.mrf.mxu0
    %2220 = vdwg.mxu0
    %v2221 = vadd.f32 %v1949, %v2203
    %v2222 = vadd.f32 %v1954, %v2208
    %v2223 = vadd.f32 %v1959, %v2213
    %v2224 = vadd.f32 %v1964, %v2218
    %v2225 = vtanh.pop %v2221
    %v2226 = vtanh.pop %v2222
    %v2227 = vtanh.pop %v2223
    %v2228 = vtanh.pop %v2224
    %v2229 = vsub.f32 1.0, %v2097
    %v2230 = vsub.f32 1.0, %v2099
    %v2231 = vsub.f32 1.0, %v2101
    %v2232 = vsub.f32 1.0, %v2103
    %v2233 = vmul.f32 %v2229, %v1352
    %v2234 = vmul.f32 %v2230, %v1353
    %v2235 = vmul.f32 %v2231, %v1354
    %v2236 = vmul.f32 %v2232, %v1355
    %v2237 = vmul.f32 %v2097, %v2225
    %v2238 = vmul.f32 %v2099, %v2226
    %v2239 = vmul.f32 %v2101, %v2227
    %v2240 = vmul.f32 %v2103, %v2228
    %v2241 = vadd.f32 %v2233, %v2237
    %v2242 = vadd.f32 %v2234, %v2238
    %v2243 = vadd.f32 %v2235, %v2239
    %v2244 = vadd.f32 %v2236, %v2240
    %v2245 = vpack.c.bf16 %v2242, %v2241
    %v2246 = vpack.c.bf16 %v2244, %v2243
    %v2247 = vld [vmem:[%s1] sm:$0xf]
    %v2248 = vld [vmem:[%s1 + $0x4] sm:$0xf]
    %v2249 = vld [vmem:[%s1 + $0x8] sm:$0xf]
    %v2250 = vld [vmem:[%s1 + $0xc] sm:$0xf]
    %v2251 = vld [vmem:[%s1 + $0x10] sm:$0xf]
    %v2252 = vld [vmem:[%s1 + $0x14] sm:$0xf]
    %v2253 = vld [vmem:[%s1 + $0x18] sm:$0xf]
    %v2254 = vld [vmem:[%s1 + $0x1c] sm:$0xf]
    %v2255 = vld [vmem:[%s1 + $0x20] sm:$0xf]
    %v2256 = vld [vmem:[%s1 + $0x24] sm:$0xf]
    %v2257 = vld [vmem:[%s1 + $0x28] sm:$0xf]
    %v2258 = vld [vmem:[%s1 + $0x2c] sm:$0xf]
    %v2259 = vld [vmem:[%s1 + $0x30] sm:$0xf]
    %v2260 = vld [vmem:[%s1 + $0x34] sm:$0xf]
    %v2261 = vld [vmem:[%s1 + $0x38] sm:$0xf]
    %v2262 = vld [vmem:[%s1 + $0x3c] sm:$0xf]
    %v2279 = vunpack.c.l.b16 %v2247
    %v2280 = vunpack.c.l.b16 %v2248
    %v2281 = vunpack.c.l.b16 %v2249
    %v2282 = vunpack.c.l.b16 %v2250
    %v2283 = vunpack.c.l.b16 %v2251
    %v2284 = vunpack.c.l.b16 %v2252
    %v2285 = vunpack.c.l.b16 %v2253
    %v2286 = vunpack.c.l.b16 %v2254
    %v2287 = vunpack.c.l.b16 %v2255
    %v2288 = vunpack.c.l.b16 %v2256
    %v2289 = vunpack.c.l.b16 %v2257
    %v2290 = vunpack.c.l.b16 %v2258
    %v2291 = vunpack.c.l.b16 %v2259
    %v2292 = vunpack.c.l.b16 %v2260
    %v2293 = vunpack.c.l.b16 %v2261
    %v2294 = vunpack.c.l.b16 %v2262
    %v2295 = vpack.c.b16 %v2280, %v2279
    %v2296 = vpack.c.b16 %v2282, %v2281
    %v2297 = vpack.c.b16 %v2284, %v2283
    %v2298 = vpack.c.b16 %v2286, %v2285
    %v2299 = vpack.c.b16 %v2288, %v2287
    %v2300 = vpack.c.b16 %v2290, %v2289
    %v2301 = vpack.c.b16 %v2292, %v2291
    %v2302 = vpack.c.b16 %v2294, %v2293
    %2311 = vmatprep.subr.bf16.mxu0 0
    %2312 = vmatpush1.bf16.msra.mxu0 %v2302
    %2313 = vmatprep.subr.bf16.mxu0 0
    %2314 = vmatpush1.bf16.msra.mxu0 %v2301
    %2315 = vmatprep.subr.bf16.mxu0 0
    %2316 = vmatpush1.bf16.msra.mxu0 %v2300
    %2317 = vmatprep.subr.bf16.mxu0 0
    %2318 = vmatpush1.bf16.msra.mxu0 %v2299
    %2319 = vmatprep.subr.bf16.mxu0 0
    %2320 = vmatpush1.bf16.msra.mxu0 %v2298
    %2321 = vmatprep.subr.bf16.mxu0 0
    %2322 = vmatpush1.bf16.msra.mxu0 %v2297
    %2323 = vmatprep.subr.bf16.mxu0 0
    %2324 = vmatpush1.bf16.msra.mxu0 %v2296
    %2325 = vmatprep.subr.bf16.mxu0 0
    %2326 = vmatpush1.bf16.msra.mxu0 %v2295
    %2327 = vmatprep.subr.bf16.mxu0 0
    %2328 = vmatpush2.bf16.msra.mxu0 0
    %2329 = vmatprep.subr.bf16.mxu0 0
    %2330 = vmatpush2.bf16.msra.mxu0 0
    %2331 = vmatprep.subr.bf16.mxu0 0
    %2332 = vmatpush2.bf16.msra.mxu0 0
    %2333 = vmatprep.subr.bf16.mxu0 0
    %2334 = vmatpush2.bf16.msra.mxu0 0
    %2335 = vmatprep.subr.bf16.mxu0 0
    %2336 = vmatpush2.bf16.msra.mxu0 0
    %2337 = vmatprep.subr.bf16.mxu0 0
    %2338 = vmatpush2.bf16.msra.mxu0 0
    %2339 = vmatprep.subr.bf16.mxu0 0
    %2340 = vmatpush2.bf16.msra.mxu0 0
    %2341 = vmatprep.subr.bf16.mxu0 0
    %2342 = vmatpush2.bf16.msra.mxu0 0
    %2343 = vmatprep.mubr.bf16.mxu0 0
    %2344 = vmatmul.mubr.bf16.gmra.mxu0 %v2245
    %v2345 = vpop.f32.mrf.mxu0
    %v2346 = vadd.f32 0.0, %v2345
    %v2347 = vpop.f32.mrf.mxu0
    %v2348 = vpop.f32.mrf.mxu0
    %v2349 = vadd.f32 0.0, %v2348
    %v2350 = vpop.f32.mrf.mxu0
    %2351 = vmatprep.mubr.bf16.mxu0 0
    %2352 = vmatmul.mubr.bf16.gmra.mxu0 %v2246
    %v2353 = vpop.f32.mrf.mxu0
    %v2354 = vadd.f32 0.0, %v2353
    %v2355 = vpop.f32.mrf.mxu0
    %v2356 = vpop.f32.mrf.mxu0
    %v2357 = vadd.f32 0.0, %v2356
    %v2358 = vpop.f32.mrf.mxu0
    %2359 = vdwg.mxu0
    %2360 = vst [vmem:[#allocation2] sm:$0xff] %v2346
    %2361 = vst [vmem:[#allocation2 + $0x8] sm:$0xff] %v2349
    %2362 = vst [vmem:[#allocation2 + $0x10] sm:$0xff] %v2354
    %2363 = vst [vmem:[#allocation2 + $0x18] sm:$0xff] %v2357
    %v2364 = vld [vmem:[%s547] sm:$0xf]
    %v2365 = vld [vmem:[%s547 + $0x4] sm:$0xf]
    %v2366 = vld [vmem:[%s547 + $0x8] sm:$0xf]
    %v2367 = vld [vmem:[%s547 + $0xc] sm:$0xf]
    %v2368 = vld [vmem:[%s547 + $0x10] sm:$0xf]
    %v2369 = vld [vmem:[%s547 + $0x14] sm:$0xf]
    %v2370 = vld [vmem:[%s547 + $0x18] sm:$0xf]
    %v2371 = vld [vmem:[%s547 + $0x1c] sm:$0xf]
    %v2372 = vld [vmem:[%s547 + $0x20] sm:$0xf]
    %v2373 = vld [vmem:[%s547 + $0x24] sm:$0xf]
    %v2374 = vld [vmem:[%s547 + $0x28] sm:$0xf]
    %v2375 = vld [vmem:[%s547 + $0x2c] sm:$0xf]
    %v2376 = vld [vmem:[%s547 + $0x30] sm:$0xf]
    %v2377 = vld [vmem:[%s547 + $0x34] sm:$0xf]
    %v2378 = vld [vmem:[%s547 + $0x38] sm:$0xf]
    %v2379 = vld [vmem:[%s547 + $0x3c] sm:$0xf]
    %v2396 = vunpack.c.l.b16 %v2364
    %v2397 = vunpack.c.l.b16 %v2365
    %v2398 = vunpack.c.l.b16 %v2366
    %v2399 = vunpack.c.l.b16 %v2367
    %v2400 = vunpack.c.l.b16 %v2368
    %v2401 = vunpack.c.l.b16 %v2369
    %v2402 = vunpack.c.l.b16 %v2370
    %v2403 = vunpack.c.l.b16 %v2371
    %v2404 = vunpack.c.l.b16 %v2372
    %v2405 = vunpack.c.l.b16 %v2373
    %v2406 = vunpack.c.l.b16 %v2374
    %v2407 = vunpack.c.l.b16 %v2375
    %v2408 = vunpack.c.l.b16 %v2376
    %v2409 = vunpack.c.l.b16 %v2377
    %v2410 = vunpack.c.l.b16 %v2378
    %v2411 = vunpack.c.l.b16 %v2379
    %v2412 = vpack.c.b16 %v2397, %v2396
    %v2413 = vpack.c.b16 %v2399, %v2398
    %v2414 = vpack.c.b16 %v2401, %v2400
    %v2415 = vpack.c.b16 %v2403, %v2402
    %v2416 = vpack.c.b16 %v2405, %v2404
    %v2417 = vpack.c.b16 %v2407, %v2406
    %v2418 = vpack.c.b16 %v2409, %v2408
    %v2419 = vpack.c.b16 %v2411, %v2410
    %2428 = vmatprep.subr.bf16.mxu0 0
    %2429 = vmatpush1.bf16.msra.mxu0 %v2419
    %2430 = vmatprep.subr.bf16.mxu0 0
    %2431 = vmatpush1.bf16.msra.mxu0 %v2418
    %2432 = vmatprep.subr.bf16.mxu0 0
    %2433 = vmatpush1.bf16.msra.mxu0 %v2417
    %2434 = vmatprep.subr.bf16.mxu0 0
    %2435 = vmatpush1.bf16.msra.mxu0 %v2416
    %2436 = vmatprep.subr.bf16.mxu0 0
    %2437 = vmatpush1.bf16.msra.mxu0 %v2415
    %2438 = vmatprep.subr.bf16.mxu0 0
    %2439 = vmatpush1.bf16.msra.mxu0 %v2414
    %2440 = vmatprep.subr.bf16.mxu0 0
    %2441 = vmatpush1.bf16.msra.mxu0 %v2413
    %2442 = vmatprep.subr.bf16.mxu0 0
    %2443 = vmatpush1.bf16.msra.mxu0 %v2412
    %2444 = vmatprep.subr.bf16.mxu0 0
    %2445 = vmatpush2.bf16.msra.mxu0 0
    %2446 = vmatprep.subr.bf16.mxu0 0
    %2447 = vmatpush2.bf16.msra.mxu0 0
    %2448 = vmatprep.subr.bf16.mxu0 0
    %2449 = vmatpush2.bf16.msra.mxu0 0
    %2450 = vmatprep.subr.bf16.mxu0 0
    %2451 = vmatpush2.bf16.msra.mxu0 0
    %2452 = vmatprep.subr.bf16.mxu0 0
    %2453 = vmatpush2.bf16.msra.mxu0 0
    %2454 = vmatprep.subr.bf16.mxu0 0
    %2455 = vmatpush2.bf16.msra.mxu0 0
    %2456 = vmatprep.subr.bf16.mxu0 0
    %2457 = vmatpush2.bf16.msra.mxu0 0
    %2458 = vmatprep.subr.bf16.mxu0 0
    %2459 = vmatpush2.bf16.msra.mxu0 0
    %2460 = vmatprep.mubr.bf16.mxu0 0
    %2461 = vmatmul.mubr.bf16.gmra.mxu0 %v2245
    %v2462 = vpop.f32.mrf.mxu0
    %v2463 = vadd.f32 0.0, %v2462
    %v2464 = vpop.f32.mrf.mxu0
    %v2465 = vpop.f32.mrf.mxu0
    %v2466 = vadd.f32 0.0, %v2465
    %v2467 = vpop.f32.mrf.mxu0
    %2468 = vmatprep.mubr.bf16.mxu0 0
    %2469 = vmatmul.mubr.bf16.gmra.mxu0 %v2246
    %v2470 = vpop.f32.mrf.mxu0
    %v2471 = vadd.f32 0.0, %v2470
    %v2472 = vpop.f32.mrf.mxu0
    %v2473 = vpop.f32.mrf.mxu0
    %v2474 = vadd.f32 0.0, %v2473
    %v2475 = vpop.f32.mrf.mxu0
    %2476 = vdwg.mxu0
    %2477 = vst [vmem:[#allocation2 + $0x20] sm:$0xff] %v2463
    %2478 = vst [vmem:[#allocation2 + $0x28] sm:$0xff] %v2466
    %2479 = vst [vmem:[#allocation2 + $0x30] sm:$0xff] %v2471
    %2480 = vst [vmem:[#allocation2 + $0x38] sm:$0xff] %v2474
    %v2481 = vld [vmem:[%s665] sm:$0xf]
    %v2482 = vld [vmem:[%s665 + $0x4] sm:$0xf]
    %v2483 = vld [vmem:[%s665 + $0x8] sm:$0xf]
    %v2484 = vld [vmem:[%s665 + $0xc] sm:$0xf]
    %v2485 = vld [vmem:[%s665 + $0x10] sm:$0xf]
    %v2486 = vld [vmem:[%s665 + $0x14] sm:$0xf]
    %v2487 = vld [vmem:[%s665 + $0x18] sm:$0xf]
    %v2488 = vld [vmem:[%s665 + $0x1c] sm:$0xf]
    %v2489 = vld [vmem:[%s665 + $0x20] sm:$0xf]
    %v2490 = vld [vmem:[%s665 + $0x24] sm:$0xf]
    %v2491 = vld [vmem:[%s665 + $0x28] sm:$0xf]
    %v2492 = vld [vmem:[%s665 + $0x2c] sm:$0xf]
    %v2493 = vld [vmem:[%s665 + $0x30] sm:$0xf]
    %v2494 = vld [vmem:[%s665 + $0x34] sm:$0xf]
    %v2495 = vld [vmem:[%s665 + $0x38] sm:$0xf]
    %v2496 = vld [vmem:[%s665 + $0x3c] sm:$0xf]
    %v2513 = vunpack.c.l.b16 %v2481
    %v2514 = vunpack.c.l.b16 %v2482
    %v2515 = vunpack.c.l.b16 %v2483
    %v2516 = vunpack.c.l.b16 %v2484
    %v2517 = vunpack.c.l.b16 %v2485
    %v2518 = vunpack.c.l.b16 %v2486
    %v2519 = vunpack.c.l.b16 %v2487
    %v2520 = vunpack.c.l.b16 %v2488
    %v2521 = vunpack.c.l.b16 %v2489
    %v2522 = vunpack.c.l.b16 %v2490
    %v2523 = vunpack.c.l.b16 %v2491
    %v2524 = vunpack.c.l.b16 %v2492
    %v2525 = vunpack.c.l.b16 %v2493
    %v2526 = vunpack.c.l.b16 %v2494
    %v2527 = vunpack.c.l.b16 %v2495
    %v2528 = vunpack.c.l.b16 %v2496
    %v2529 = vpack.c.b16 %v2514, %v2513
    %v2530 = vpack.c.b16 %v2516, %v2515
    %v2531 = vpack.c.b16 %v2518, %v2517
    %v2532 = vpack.c.b16 %v2520, %v2519
    %v2533 = vpack.c.b16 %v2522, %v2521
    %v2534 = vpack.c.b16 %v2524, %v2523
    %v2535 = vpack.c.b16 %v2526, %v2525
    %v2536 = vpack.c.b16 %v2528, %v2527
    %2545 = vmatprep.subr.bf16.mxu0 0
    %2546 = vmatpush1.bf16.msra.mxu0 %v2536
    %2547 = vmatprep.subr.bf16.mxu0 0
    %2548 = vmatpush1.bf16.msra.mxu0 %v2535
    %2549 = vmatprep.subr.bf16.mxu0 0
    %2550 = vmatpush1.bf16.msra.mxu0 %v2534
    %2551 = vmatprep.subr.bf16.mxu0 0
    %2552 = vmatpush1.bf16.msra.mxu0 %v2533
    %2553 = vmatprep.subr.bf16.mxu0 0
    %2554 = vmatpush1.bf16.msra.mxu0 %v2532
    %2555 = vmatprep.subr.bf16.mxu0 0
    %2556 = vmatpush1.bf16.msra.mxu0 %v2531
    %2557 = vmatprep.subr.bf16.mxu0 0
    %2558 = vmatpush1.bf16.msra.mxu0 %v2530
    %2559 = vmatprep.subr.bf16.mxu0 0
    %2560 = vmatpush1.bf16.msra.mxu0 %v2529
    %2561 = vmatprep.subr.bf16.mxu0 0
    %2562 = vmatpush2.bf16.msra.mxu0 0
    %2563 = vmatprep.subr.bf16.mxu0 0
    %2564 = vmatpush2.bf16.msra.mxu0 0
    %2565 = vmatprep.subr.bf16.mxu0 0
    %2566 = vmatpush2.bf16.msra.mxu0 0
    %2567 = vmatprep.subr.bf16.mxu0 0
    %2568 = vmatpush2.bf16.msra.mxu0 0
    %2569 = vmatprep.subr.bf16.mxu0 0
    %2570 = vmatpush2.bf16.msra.mxu0 0
    %2571 = vmatprep.subr.bf16.mxu0 0
    %2572 = vmatpush2.bf16.msra.mxu0 0
    %2573 = vmatprep.subr.bf16.mxu0 0
    %2574 = vmatpush2.bf16.msra.mxu0 0
    %2575 = vmatprep.subr.bf16.mxu0 0
    %2576 = vmatpush2.bf16.msra.mxu0 0
    %2577 = vmatprep.mubr.bf16.mxu0 0
    %2578 = vmatmul.mubr.bf16.gmra.mxu0 %v2245
    %v2579 = vpop.f32.mrf.mxu0
    %v2580 = vadd.f32 0.0, %v2579
    %v2581 = vpop.f32.mrf.mxu0
    %v2582 = vpop.f32.mrf.mxu0
    %v2583 = vadd.f32 0.0, %v2582
    %v2584 = vpop.f32.mrf.mxu0
    %2585 = vmatprep.mubr.bf16.mxu0 0
    %2586 = vmatmul.mubr.bf16.gmra.mxu0 %v2246
    %v2587 = vpop.f32.mrf.mxu0
    %v2588 = vadd.f32 0.0, %v2587
    %v2589 = vpop.f32.mrf.mxu0
    %v2590 = vpop.f32.mrf.mxu0
    %v2591 = vadd.f32 0.0, %v2590
    %v2592 = vpop.f32.mrf.mxu0
    %2593 = vdwg.mxu0
    %2594 = vst [vmem:[#allocation2 + $0x40] sm:$0xff] %v2580
    %2595 = vst [vmem:[#allocation2 + $0x48] sm:$0xff] %v2583
    %2596 = vst [vmem:[#allocation2 + $0x50] sm:$0xff] %v2588
    %2597 = vst [vmem:[#allocation2 + $0x58] sm:$0xff] %v2591
    %v2598 = vld [vmem:[%s783] sm:$0xf]
    %v2599 = vld [vmem:[%s783 + $0x4] sm:$0xf]
    %v2600 = vld [vmem:[%s783 + $0x8] sm:$0xf]
    %v2601 = vld [vmem:[%s783 + $0xc] sm:$0xf]
    %v2602 = vld [vmem:[%s783 + $0x10] sm:$0xf]
    %v2603 = vld [vmem:[%s783 + $0x14] sm:$0xf]
    %v2604 = vld [vmem:[%s783 + $0x18] sm:$0xf]
    %v2605 = vld [vmem:[%s783 + $0x1c] sm:$0xf]
    %v2606 = vld [vmem:[%s783 + $0x20] sm:$0xf]
    %v2607 = vld [vmem:[%s783 + $0x24] sm:$0xf]
    %v2608 = vld [vmem:[%s783 + $0x28] sm:$0xf]
    %v2609 = vld [vmem:[%s783 + $0x2c] sm:$0xf]
    %v2610 = vld [vmem:[%s783 + $0x30] sm:$0xf]
    %v2611 = vld [vmem:[%s783 + $0x34] sm:$0xf]
    %v2612 = vld [vmem:[%s783 + $0x38] sm:$0xf]
    %v2613 = vld [vmem:[%s783 + $0x3c] sm:$0xf]
    %v2630 = vunpack.c.l.b16 %v2598
    %v2631 = vunpack.c.l.b16 %v2599
    %v2632 = vunpack.c.l.b16 %v2600
    %v2633 = vunpack.c.l.b16 %v2601
    %v2634 = vunpack.c.l.b16 %v2602
    %v2635 = vunpack.c.l.b16 %v2603
    %v2636 = vunpack.c.l.b16 %v2604
    %v2637 = vunpack.c.l.b16 %v2605
    %v2638 = vunpack.c.l.b16 %v2606
    %v2639 = vunpack.c.l.b16 %v2607
    %v2640 = vunpack.c.l.b16 %v2608
    %v2641 = vunpack.c.l.b16 %v2609
    %v2642 = vunpack.c.l.b16 %v2610
    %v2643 = vunpack.c.l.b16 %v2611
    %v2644 = vunpack.c.l.b16 %v2612
    %v2645 = vunpack.c.l.b16 %v2613
    %v2646 = vpack.c.b16 %v2631, %v2630
    %v2647 = vpack.c.b16 %v2633, %v2632
    %v2648 = vpack.c.b16 %v2635, %v2634
    %v2649 = vpack.c.b16 %v2637, %v2636
    %v2650 = vpack.c.b16 %v2639, %v2638
    %v2651 = vpack.c.b16 %v2641, %v2640
    %v2652 = vpack.c.b16 %v2643, %v2642
    %v2653 = vpack.c.b16 %v2645, %v2644
    %2662 = vmatprep.subr.bf16.mxu0 0
    %2663 = vmatpush1.bf16.msra.mxu0 %v2653
    %2664 = vmatprep.subr.bf16.mxu0 0
    %2665 = vmatpush1.bf16.msra.mxu0 %v2652
    %2666 = vmatprep.subr.bf16.mxu0 0
    %2667 = vmatpush1.bf16.msra.mxu0 %v2651
    %2668 = vmatprep.subr.bf16.mxu0 0
    %2669 = vmatpush1.bf16.msra.mxu0 %v2650
    %2670 = vmatprep.subr.bf16.mxu0 0
    %2671 = vmatpush1.bf16.msra.mxu0 %v2649
    %2672 = vmatprep.subr.bf16.mxu0 0
    %2673 = vmatpush1.bf16.msra.mxu0 %v2648
    %2674 = vmatprep.subr.bf16.mxu0 0
    %2675 = vmatpush1.bf16.msra.mxu0 %v2647
    %2676 = vmatprep.subr.bf16.mxu0 0
    %2677 = vmatpush1.bf16.msra.mxu0 %v2646
    %2678 = vmatprep.subr.bf16.mxu0 0
    %2679 = vmatpush2.bf16.msra.mxu0 0
    %2680 = vmatprep.subr.bf16.mxu0 0
    %2681 = vmatpush2.bf16.msra.mxu0 0
    %2682 = vmatprep.subr.bf16.mxu0 0
    %2683 = vmatpush2.bf16.msra.mxu0 0
    %2684 = vmatprep.subr.bf16.mxu0 0
    %2685 = vmatpush2.bf16.msra.mxu0 0
    %2686 = vmatprep.subr.bf16.mxu0 0
    %2687 = vmatpush2.bf16.msra.mxu0 0
    %2688 = vmatprep.subr.bf16.mxu0 0
    %2689 = vmatpush2.bf16.msra.mxu0 0
    %2690 = vmatprep.subr.bf16.mxu0 0
    %2691 = vmatpush2.bf16.msra.mxu0 0
    %2692 = vmatprep.subr.bf16.mxu0 0
    %2693 = vmatpush2.bf16.msra.mxu0 0
    %2694 = vmatprep.mubr.bf16.mxu0 0
    %2695 = vmatmul.mubr.bf16.gmra.mxu0 %v2245
    %v2696 = vpop.f32.mrf.mxu0
    %v2697 = vadd.f32 0.0, %v2696
    %v2698 = vpop.f32.mrf.mxu0
    %v2699 = vpop.f32.mrf.mxu0
    %v2700 = vadd.f32 0.0, %v2699
    %v2701 = vpop.f32.mrf.mxu0
    %2702 = vmatprep.mubr.bf16.mxu0 0
    %2703 = vmatmul.mubr.bf16.gmra.mxu0 %v2246
    %v2704 = vpop.f32.mrf.mxu0
    %v2705 = vadd.f32 0.0, %v2704
    %v2706 = vpop.f32.mrf.mxu0
    %v2707 = vpop.f32.mrf.mxu0
    %v2708 = vadd.f32 0.0, %v2707
    %v2709 = vpop.f32.mrf.mxu0
    %2710 = vdwg.mxu0
    %2711 = vst [vmem:[#allocation2 + $0x60] sm:$0xff] %v2697
    %2712 = vst [vmem:[#allocation2 + $0x68] sm:$0xff] %v2700
    %2713 = vst [vmem:[#allocation2 + $0x70] sm:$0xff] %v2705
    %2714 = vst [vmem:[#allocation2 + $0x78] sm:$0xff] %v2708
    %v2715 = vld [vmem:[#allocation2] sm:$0xff]
    %v2716 = vld [vmem:[#allocation2 + $0x8] sm:$0xff]
    %v2717 = vld [vmem:[#allocation2 + $0x10] sm:$0xff]
    %v2718 = vld [vmem:[#allocation2 + $0x18] sm:$0xff]
    %v2719 = vld [vmem:[#allocation2 + $0x20] sm:$0xff]
    %v2720 = vld [vmem:[#allocation2 + $0x28] sm:$0xff]
    %v2721 = vld [vmem:[#allocation2 + $0x30] sm:$0xff]
    %v2722 = vld [vmem:[#allocation2 + $0x38] sm:$0xff]
    %v2723 = vld [vmem:[#allocation2 + $0x40] sm:$0xff]
    %v2724 = vld [vmem:[#allocation2 + $0x48] sm:$0xff]
    %v2725 = vld [vmem:[#allocation2 + $0x50] sm:$0xff]
    %v2726 = vld [vmem:[#allocation2 + $0x58] sm:$0xff]
    %v2727 = vld [vmem:[#allocation2 + $0x60] sm:$0xff]
    %v2728 = vld [vmem:[#allocation2 + $0x68] sm:$0xff]
    %v2729 = vld [vmem:[#allocation2 + $0x70] sm:$0xff]
    %v2730 = vld [vmem:[#allocation2 + $0x78] sm:$0xff]
    %2731 = vmatprep.subr.mxu0 0.0
    %2732 = vmatpush1.msra.mxu0 %v2730
    %2733 = vmatprep.subr.mxu0 0.0
    %2734 = vmatpush1.msra.mxu0 %v2729
    %2735 = vmatprep.subr.mxu0 0.0
    %2736 = vmatpush1.msra.mxu0 %v2728
    %2737 = vmatprep.subr.mxu0 0.0
    %2738 = vmatpush1.msra.mxu0 %v2727
    %2739 = vmatprep.subr.mxu0 0.0
    %2740 = vmatpush1.msra.mxu0 %v2726
    %2741 = vmatprep.subr.mxu0 0.0
    %2742 = vmatpush1.msra.mxu0 %v2725
    %2743 = vmatprep.subr.mxu0 0.0
    %2744 = vmatpush1.msra.mxu0 %v2724
    %2745 = vmatprep.subr.mxu0 0.0
    %2746 = vmatpush1.msra.mxu0 %v2723
    %2747 = vmatprep.subr.mxu0 0.0
    %2748 = vmatpush1.msra.mxu0 %v2722
    %2749 = vmatprep.subr.mxu0 0.0
    %2750 = vmatpush1.msra.mxu0 %v2721
    %2751 = vmatprep.subr.mxu0 0.0
    %2752 = vmatpush1.msra.mxu0 %v2720
    %2753 = vmatprep.subr.mxu0 0.0
    %2754 = vmatpush1.msra.mxu0 %v2719
    %2755 = vmatprep.subr.mxu0 0.0
    %2756 = vmatpush1.msra.mxu0 %v2718
    %2757 = vmatprep.subr.mxu0 0.0
    %2758 = vmatpush1.msra.mxu0 %v2717
    %2759 = vmatprep.subr.mxu0 0.0
    %2760 = vmatpush1.msra.mxu0 %v2716
    %2761 = vmatprep.subr.mxu0 0.0
    %2762 = vmatpush1.msra.mxu0 %v2715
    %2763 = vmatprep.subr.mxu0 0.0
    %2764 = vmatpush2.msra.mxu0 0.0
    %2765 = vmatprep.subr.mxu0 0.0
    %2766 = vmatpush2.msra.mxu0 0.0
    %2767 = vmatprep.subr.mxu0 0.0
    %2768 = vmatpush2.msra.mxu0 0.0
    %2769 = vmatprep.subr.mxu0 0.0
    %2770 = vmatpush2.msra.mxu0 0.0
    %2771 = vmatprep.subr.mxu0 0.0
    %2772 = vmatpush2.msra.mxu0 0.0
    %2773 = vmatprep.subr.mxu0 0.0
    %2774 = vmatpush2.msra.mxu0 0.0
    %2775 = vmatprep.subr.mxu0 0.0
    %2776 = vmatpush2.msra.mxu0 0.0
    %2777 = vmatprep.subr.mxu0 0.0
    %2778 = vmatpush2.msra.mxu0 0.0
    %2779 = vmatprep.subr.mxu0 0.0
    %2780 = vmatpush2.msra.mxu0 0.0
    %2781 = vmatprep.subr.mxu0 0.0
    %2782 = vmatpush2.msra.mxu0 0.0
    %2783 = vmatprep.subr.mxu0 0.0
    %2784 = vmatpush2.msra.mxu0 0.0
    %2785 = vmatprep.subr.mxu0 0.0
    %2786 = vmatpush2.msra.mxu0 0.0
    %2787 = vmatprep.subr.mxu0 0.0
    %2788 = vmatpush2.msra.mxu0 0.0
    %2789 = vmatprep.subr.mxu0 0.0
    %2790 = vmatpush2.msra.mxu0 0.0
    %2791 = vmatprep.subr.mxu0 0.0
    %2792 = vmatpush2.msra.mxu0 0.0
    %2793 = vmatprep.subr.mxu0 0.0
    %2794 = vmatpush2.msra.mxu0 0.0
    %2795 = vmatprep.mubr.f32.mxu0 0.0
    %2796 = vmatmul.mubr.f32.gmra.mxu0 %v380
    %v2797 = vpop.f32.mrf.mxu0
    %v2798 = vadd.f32 0.0, %v2797
    %v2799 = vpop.f32.mrf.mxu0
    %2800 = vmatprep.mubr.f32.mxu0 0.0
    %2801 = vmatmul.mubr.f32.gmra.mxu0 %v381
    %v2802 = vpop.f32.mrf.mxu0
    %v2803 = vadd.f32 0.0, %v2802
    %v2804 = vpop.f32.mrf.mxu0
    %2805 = vmatprep.mubr.f32.mxu0 0.0
    %2806 = vmatmul.mubr.f32.gmra.mxu0 %v382
    %v2807 = vpop.f32.mrf.mxu0
    %v2808 = vadd.f32 0.0, %v2807
    %v2809 = vpop.f32.mrf.mxu0
    %2810 = vmatprep.mubr.f32.mxu0 0.0
    %2811 = vmatmul.mubr.f32.gmra.mxu0 %v383
    %v2812 = vpop.f32.mrf.mxu0
    %v2813 = vadd.f32 0.0, %v2812
    %v2814 = vpop.f32.mrf.mxu0
    %2815 = vmatprep.mubr.f32.mxu0 0.0
    %2816 = vmatmul.mubr.f32.gmra.mxu0 %v384
    %v2817 = vpop.f32.mrf.mxu0
    %v2818 = vadd.f32 0.0, %v2817
    %v2819 = vpop.f32.mrf.mxu0
    %2820 = vmatprep.mubr.f32.mxu0 0.0
    %2821 = vmatmul.mubr.f32.gmra.mxu0 %v385
    %v2822 = vpop.f32.mrf.mxu0
    %v2823 = vadd.f32 0.0, %v2822
    %v2824 = vpop.f32.mrf.mxu0
    %2825 = vmatprep.mubr.f32.mxu0 0.0
    %2826 = vmatmul.mubr.f32.gmra.mxu0 %v386
    %v2827 = vpop.f32.mrf.mxu0
    %v2828 = vadd.f32 0.0, %v2827
    %v2829 = vpop.f32.mrf.mxu0
    %2830 = vmatprep.mubr.f32.mxu0 0.0
    %2831 = vmatmul.mubr.f32.gmra.mxu0 %v387
    %v2832 = vpop.f32.mrf.mxu0
    %v2833 = vadd.f32 0.0, %v2832
    %v2834 = vpop.f32.mrf.mxu0
    %2835 = vmatprep.mubr.f32.mxu0 0.0
    %2836 = vmatmul.mubr.f32.gmra.mxu0 %v388
    %v2837 = vpop.f32.mrf.mxu0
    %v2838 = vadd.f32 0.0, %v2837
    %v2839 = vpop.f32.mrf.mxu0
    %2840 = vmatprep.mubr.f32.mxu0 0.0
    %2841 = vmatmul.mubr.f32.gmra.mxu0 %v389
    %v2842 = vpop.f32.mrf.mxu0
    %v2843 = vadd.f32 0.0, %v2842
    %v2844 = vpop.f32.mrf.mxu0
    %2845 = vmatprep.mubr.f32.mxu0 0.0
    %2846 = vmatmul.mubr.f32.gmra.mxu0 %v390
    %v2847 = vpop.f32.mrf.mxu0
    %v2848 = vadd.f32 0.0, %v2847
    %v2849 = vpop.f32.mrf.mxu0
    %2850 = vmatprep.mubr.f32.mxu0 0.0
    %2851 = vmatmul.mubr.f32.gmra.mxu0 %v391
    %v2852 = vpop.f32.mrf.mxu0
    %v2853 = vadd.f32 0.0, %v2852
    %v2854 = vpop.f32.mrf.mxu0
    %2855 = vdwg.mxu0
    %2856 = vmatprep.subr.mxu0 0.0
    %2857 = vmatpush1.msra.mxu0 0.0
    %2858 = vmatprep.subr.mxu0 0.0
    %2859 = vmatpush1.msra.mxu0 0.0
    %2860 = vmatprep.subr.mxu0 0.0
    %2861 = vmatpush1.msra.mxu0 0.0
    %2862 = vmatprep.subr.mxu0 0.0
    %2863 = vmatpush1.msra.mxu0 0.0
    %2864 = vmatprep.subr.mxu0 0.0
    %2865 = vmatpush1.msra.mxu0 0.0
    %2866 = vmatprep.subr.mxu0 0.0
    %2867 = vmatpush1.msra.mxu0 0.0
    %2868 = vmatprep.subr.mxu0 0.0
    %2869 = vmatpush1.msra.mxu0 0.0
    %2870 = vmatprep.subr.mxu0 0.0
    %2871 = vmatpush1.msra.mxu0 0.0
    %2872 = vmatprep.subr.mxu0 0.0
    %2873 = vmatpush1.msra.mxu0 0.0
    %2874 = vmatprep.subr.mxu0 0.0
    %2875 = vmatpush1.msra.mxu0 0.0
    %2876 = vmatprep.subr.mxu0 0.0
    %2877 = vmatpush1.msra.mxu0 0.0
    %2878 = vmatprep.subr.mxu0 0.0
    %2879 = vmatpush1.msra.mxu0 0.0
    %2880 = vmatprep.subr.mxu0 0.0
    %2881 = vmatpush1.msra.mxu0 %v2244
    %2882 = vmatprep.subr.mxu0 0.0
    %2883 = vmatpush1.msra.mxu0 %v2243
    %2884 = vmatprep.subr.mxu0 0.0
    %2885 = vmatpush1.msra.mxu0 %v2242
    %2886 = vmatprep.subr.mxu0 0.0
    %2887 = vmatpush1.msra.mxu0 %v2241
    %2888 = vmatprep.subr.mxu0 0.0
    %2889 = vmatpush2.msra.mxu0 0.0
    %2890 = vmatprep.subr.mxu0 0.0
    %2891 = vmatpush2.msra.mxu0 0.0
    %2892 = vmatprep.subr.mxu0 0.0
    %2893 = vmatpush2.msra.mxu0 0.0
    %2894 = vmatprep.subr.mxu0 0.0
    %2895 = vmatpush2.msra.mxu0 0.0
    %2896 = vmatprep.subr.mxu0 0.0
    %2897 = vmatpush2.msra.mxu0 0.0
    %2898 = vmatprep.subr.mxu0 0.0
    %2899 = vmatpush2.msra.mxu0 0.0
    %2900 = vmatprep.subr.mxu0 0.0
    %2901 = vmatpush2.msra.mxu0 0.0
    %2902 = vmatprep.subr.mxu0 0.0
    %2903 = vmatpush2.msra.mxu0 0.0
    %2904 = vmatprep.subr.mxu0 0.0
    %2905 = vmatpush2.msra.mxu0 0.0
    %2906 = vmatprep.subr.mxu0 0.0
    %2907 = vmatpush2.msra.mxu0 0.0
    %2908 = vmatprep.subr.mxu0 0.0
    %2909 = vmatpush2.msra.mxu0 0.0
    %2910 = vmatprep.subr.mxu0 0.0
    %2911 = vmatpush2.msra.mxu0 0.0
    %2912 = vmatprep.subr.mxu0 0.0
    %2913 = vmatpush2.msra.mxu0 0.0
    %2914 = vmatprep.subr.mxu0 0.0
    %2915 = vmatpush2.msra.mxu0 0.0
    %2916 = vmatprep.subr.mxu0 0.0
    %2917 = vmatpush2.msra.mxu0 0.0
    %2918 = vmatprep.subr.mxu0 0.0
    %2919 = vmatpush2.msra.mxu0 0.0
    %2920 = vmatprep.mubr.f32.mxu0 0.0
    %2921 = vmatmul.mubr.f32.gmra.mxu0 %v1043
    %v2922 = vpop.f32.mrf.mxu0
    %v2923 = vadd.f32 0.0, %v2922
    %v2924 = vpop.f32.mrf.mxu0
    %2925 = vmatprep.mubr.f32.mxu0 0.0
    %2926 = vmatmul.mubr.f32.gmra.mxu0 %v1046
    %v2927 = vpop.f32.mrf.mxu0
    %v2928 = vadd.f32 0.0, %v2927
    %v2929 = vpop.f32.mrf.mxu0
    %2930 = vmatprep.mubr.f32.mxu0 0.0
    %2931 = vmatmul.mubr.f32.gmra.mxu0 %v1049
    %v2932 = vpop.f32.mrf.mxu0
    %v2933 = vadd.f32 0.0, %v2932
    %v2934 = vpop.f32.mrf.mxu0
    %2935 = vmatprep.mubr.f32.mxu0 0.0
    %2936 = vmatmul.mubr.f32.gmra.mxu0 %v1052
    %v2937 = vpop.f32.mrf.mxu0
    %v2938 = vadd.f32 0.0, %v2937
    %v2939 = vpop.f32.mrf.mxu0
    %2940 = vmatprep.mubr.f32.mxu0 0.0
    %2941 = vmatmul.mubr.f32.gmra.mxu0 %v1055
    %v2942 = vpop.f32.mrf.mxu0
    %v2943 = vadd.f32 0.0, %v2942
    %v2944 = vpop.f32.mrf.mxu0
    %2945 = vmatprep.mubr.f32.mxu0 0.0
    %2946 = vmatmul.mubr.f32.gmra.mxu0 %v1058
    %v2947 = vpop.f32.mrf.mxu0
    %v2948 = vadd.f32 0.0, %v2947
    %v2949 = vpop.f32.mrf.mxu0
    %2950 = vmatprep.mubr.f32.mxu0 0.0
    %2951 = vmatmul.mubr.f32.gmra.mxu0 %v1061
    %v2952 = vpop.f32.mrf.mxu0
    %v2953 = vadd.f32 0.0, %v2952
    %v2954 = vpop.f32.mrf.mxu0
    %2955 = vmatprep.mubr.f32.mxu0 0.0
    %2956 = vmatmul.mubr.f32.gmra.mxu0 %v1064
    %v2957 = vpop.f32.mrf.mxu0
    %v2958 = vadd.f32 0.0, %v2957
    %v2959 = vpop.f32.mrf.mxu0
    %2960 = vdwg.mxu0
    %v2961 = vadd.f32 %v2798, %v2923
    %v2962 = vadd.f32 %v2803, %v2928
    %v2963 = vadd.f32 %v2808, %v2933
    %v2964 = vadd.f32 %v2813, %v2938
    %v2965 = vadd.f32 %v2961, %v411
    %v2966 = vadd.f32 %v2962, %v416
    %v2967 = vadd.f32 %v2963, %v421
    %v2968 = vadd.f32 %v2964, %v426
    %v2969 = vxor.u32 %v2965, 2147483648
    %v2970 = vxor.u32 %v2966, 2147483648
    %v2971 = vxor.u32 %v2967, 2147483648
    %v2972 = vxor.u32 %v2968, 2147483648
    %v2973 = vmul.f32 %v2969, 1.442695
    %v2974 = vpow.pop %v2973
    %v2975 = vmul.f32 %v2970, 1.442695
    %v2976 = vpow.pop %v2975
    %v2977 = vmul.f32 %v2971, 1.442695
    %v2978 = vpow.pop %v2977
    %v2979 = vmul.f32 %v2972, 1.442695
    %v2980 = vpow.pop %v2979
    %v2981 = vadd.f32 %v2974, 1.0
    %v2982 = vadd.f32 %v2976, 1.0
    %v2983 = vadd.f32 %v2978, 1.0
    %v2984 = vadd.f32 %v2980, 1.0
    %v2985 = vrcp.pop %v2981
    %v2986 = vmul.f32 1.0, %v2985
    %v2987 = vrcp.pop %v2982
    %v2988 = vmul.f32 1.0, %v2987
    %v2989 = vrcp.pop %v2983
    %v2990 = vmul.f32 1.0, %v2989
    %v2991 = vrcp.pop %v2984
    %v2992 = vmul.f32 1.0, %v2991
    %v2993 = vadd.f32 %v2818, %v2943
    %v2994 = vadd.f32 %v2823, %v2948
    %v2995 = vadd.f32 %v2828, %v2953
    %v2996 = vadd.f32 %v2833, %v2958
    %v2997 = vxor.u32 %v2993, 2147483648
    %v2998 = vxor.u32 %v2994, 2147483648
    %v2999 = vxor.u32 %v2995, 2147483648
    %v3000 = vxor.u32 %v2996, 2147483648
    %v3001 = vmul.f32 %v2997, 1.442695
    %v3002 = vpow.pop %v3001
    %v3003 = vmul.f32 %v2998, 1.442695
    %v3004 = vpow.pop %v3003
    %v3005 = vmul.f32 %v2999, 1.442695
    %v3006 = vpow.pop %v3005
    %v3007 = vmul.f32 %v3000, 1.442695
    %v3008 = vpow.pop %v3007
    %v3009 = vadd.f32 %v3002, 1.0
    %v3010 = vadd.f32 %v3004, 1.0
    %v3011 = vadd.f32 %v3006, 1.0
    %v3012 = vadd.f32 %v3008, 1.0
    %v3013 = vrcp.pop %v3009
    %v3014 = vmul.f32 1.0, %v3013
    %v3015 = vrcp.pop %v3010
    %v3016 = vmul.f32 1.0, %v3015
    %v3017 = vrcp.pop %v3011
    %v3018 = vmul.f32 1.0, %v3017
    %v3019 = vrcp.pop %v3012
    %v3020 = vmul.f32 1.0, %v3019
    %v3021 = vmul.f32 %v3014, %v2241
    %v3022 = vmul.f32 %v3016, %v2242
    %v3023 = vmul.f32 %v3018, %v2243
    %v3024 = vmul.f32 %v3020, %v2244
    %3025 = vmatprep.subr.mxu0 0.0
    %3026 = vmatpush1.msra.mxu0 0.0
    %3027 = vmatprep.subr.mxu0 0.0
    %3028 = vmatpush1.msra.mxu0 0.0
    %3029 = vmatprep.subr.mxu0 0.0
    %3030 = vmatpush1.msra.mxu0 0.0
    %3031 = vmatprep.subr.mxu0 0.0
    %3032 = vmatpush1.msra.mxu0 0.0
    %3033 = vmatprep.subr.mxu0 0.0
    %3034 = vmatpush1.msra.mxu0 0.0
    %3035 = vmatprep.subr.mxu0 0.0
    %3036 = vmatpush1.msra.mxu0 0.0
    %3037 = vmatprep.subr.mxu0 0.0
    %3038 = vmatpush1.msra.mxu0 0.0
    %3039 = vmatprep.subr.mxu0 0.0
    %3040 = vmatpush1.msra.mxu0 0.0
    %3041 = vmatprep.subr.mxu0 0.0
    %3042 = vmatpush1.msra.mxu0 0.0
    %3043 = vmatprep.subr.mxu0 0.0
    %3044 = vmatpush1.msra.mxu0 0.0
    %3045 = vmatprep.subr.mxu0 0.0
    %3046 = vmatpush1.msra.mxu0 0.0
    %3047 = vmatprep.subr.mxu0 0.0
    %3048 = vmatpush1.msra.mxu0 0.0
    %3049 = vmatprep.subr.mxu0 0.0
    %3050 = vmatpush1.msra.mxu0 %v3024
    %3051 = vmatprep.subr.mxu0 0.0
    %3052 = vmatpush1.msra.mxu0 %v3023
    %3053 = vmatprep.subr.mxu0 0.0
    %3054 = vmatpush1.msra.mxu0 %v3022
    %3055 = vmatprep.subr.mxu0 0.0
    %3056 = vmatpush1.msra.mxu0 %v3021
    %3057 = vmatprep.subr.mxu0 0.0
    %3058 = vmatpush2.msra.mxu0 0.0
    %3059 = vmatprep.subr.mxu0 0.0
    %3060 = vmatpush2.msra.mxu0 0.0
    %3061 = vmatprep.subr.mxu0 0.0
    %3062 = vmatpush2.msra.mxu0 0.0
    %3063 = vmatprep.subr.mxu0 0.0
    %3064 = vmatpush2.msra.mxu0 0.0
    %3065 = vmatprep.subr.mxu0 0.0
    %3066 = vmatpush2.msra.mxu0 0.0
    %3067 = vmatprep.subr.mxu0 0.0
    %3068 = vmatpush2.msra.mxu0 0.0
    %3069 = vmatprep.subr.mxu0 0.0
    %3070 = vmatpush2.msra.mxu0 0.0
    %3071 = vmatprep.subr.mxu0 0.0
    %3072 = vmatpush2.msra.mxu0 0.0
    %3073 = vmatprep.subr.mxu0 0.0
    %3074 = vmatpush2.msra.mxu0 0.0
    %3075 = vmatprep.subr.mxu0 0.0
    %3076 = vmatpush2.msra.mxu0 0.0
    %3077 = vmatprep.subr.mxu0 0.0
    %3078 = vmatpush2.msra.mxu0 0.0
    %3079 = vmatprep.subr.mxu0 0.0
    %3080 = vmatpush2.msra.mxu0 0.0
    %3081 = vmatprep.subr.mxu0 0.0
    %3082 = vmatpush2.msra.mxu0 0.0
    %3083 = vmatprep.subr.mxu0 0.0
    %3084 = vmatpush2.msra.mxu0 0.0
    %3085 = vmatprep.subr.mxu0 0.0
    %3086 = vmatpush2.msra.mxu0 0.0
    %3087 = vmatprep.subr.mxu0 0.0
    %3088 = vmatpush2.msra.mxu0 0.0
    %3089 = vmatprep.mubr.f32.mxu0 0.0
    %3090 = vmatmul.mubr.f32.gmra.mxu0 %v1236
    %v3091 = vpop.f32.mrf.mxu0
    %v3092 = vadd.f32 0.0, %v3091
    %v3093 = vpop.f32.mrf.mxu0
    %3094 = vmatprep.mubr.f32.mxu0 0.0
    %3095 = vmatmul.mubr.f32.gmra.mxu0 %v1239
    %v3096 = vpop.f32.mrf.mxu0
    %v3097 = vadd.f32 0.0, %v3096
    %v3098 = vpop.f32.mrf.mxu0
    %3099 = vmatprep.mubr.f32.mxu0 0.0
    %3100 = vmatmul.mubr.f32.gmra.mxu0 %v1242
    %v3101 = vpop.f32.mrf.mxu0
    %v3102 = vadd.f32 0.0, %v3101
    %v3103 = vpop.f32.mrf.mxu0
    %3104 = vmatprep.mubr.f32.mxu0 0.0
    %3105 = vmatmul.mubr.f32.gmra.mxu0 %v1245
    %v3106 = vpop.f32.mrf.mxu0
    %v3107 = vadd.f32 0.0, %v3106
    %v3108 = vpop.f32.mrf.mxu0
    %3109 = vdwg.mxu0
    %v3110 = vadd.f32 %v2838, %v3092
    %v3111 = vadd.f32 %v2843, %v3097
    %v3112 = vadd.f32 %v2848, %v3102
    %v3113 = vadd.f32 %v2853, %v3107
    %v3114 = vtanh.pop %v3110
    %v3115 = vtanh.pop %v3111
    %v3116 = vtanh.pop %v3112
    %v3117 = vtanh.pop %v3113
    %v3118 = vsub.f32 1.0, %v2986
    %v3119 = vsub.f32 1.0, %v2988
    %v3120 = vsub.f32 1.0, %v2990
    %v3121 = vsub.f32 1.0, %v2992
    %v3122 = vmul.f32 %v3118, %v2241
    %v3123 = vmul.f32 %v3119, %v2242
    %v3124 = vmul.f32 %v3120, %v2243
    %v3125 = vmul.f32 %v3121, %v2244
    %v3126 = vmul.f32 %v2986, %v3114
    %v3127 = vmul.f32 %v2988, %v3115
    %v3128 = vmul.f32 %v2990, %v3116
    %v3129 = vmul.f32 %v2992, %v3117
    %v3130 = vadd.f32 %v3122, %v3126
    %v3131 = vadd.f32 %v3123, %v3127
    %v3132 = vadd.f32 %v3124, %v3128
    %v3133 = vadd.f32 %v3125, %v3129
    %v3134 = vpack.c.bf16 %v3131, %v3130
    %v3135 = vpack.c.bf16 %v3133, %v3132
    %v3136 = vld [vmem:[%s1] sm:$0xf]
    %v3137 = vld [vmem:[%s1 + $0x4] sm:$0xf]
    %v3138 = vld [vmem:[%s1 + $0x8] sm:$0xf]
    %v3139 = vld [vmem:[%s1 + $0xc] sm:$0xf]
    %v3140 = vld [vmem:[%s1 + $0x10] sm:$0xf]
    %v3141 = vld [vmem:[%s1 + $0x14] sm:$0xf]
    %v3142 = vld [vmem:[%s1 + $0x18] sm:$0xf]
    %v3143 = vld [vmem:[%s1 + $0x1c] sm:$0xf]
    %v3144 = vld [vmem:[%s1 + $0x20] sm:$0xf]
    %v3145 = vld [vmem:[%s1 + $0x24] sm:$0xf]
    %v3146 = vld [vmem:[%s1 + $0x28] sm:$0xf]
    %v3147 = vld [vmem:[%s1 + $0x2c] sm:$0xf]
    %v3148 = vld [vmem:[%s1 + $0x30] sm:$0xf]
    %v3149 = vld [vmem:[%s1 + $0x34] sm:$0xf]
    %v3150 = vld [vmem:[%s1 + $0x38] sm:$0xf]
    %v3151 = vld [vmem:[%s1 + $0x3c] sm:$0xf]
    %v3168 = vunpack.c.l.b16 %v3136
    %v3169 = vunpack.c.l.b16 %v3137
    %v3170 = vunpack.c.l.b16 %v3138
    %v3171 = vunpack.c.l.b16 %v3139
    %v3172 = vunpack.c.l.b16 %v3140
    %v3173 = vunpack.c.l.b16 %v3141
    %v3174 = vunpack.c.l.b16 %v3142
    %v3175 = vunpack.c.l.b16 %v3143
    %v3176 = vunpack.c.l.b16 %v3144
    %v3177 = vunpack.c.l.b16 %v3145
    %v3178 = vunpack.c.l.b16 %v3146
    %v3179 = vunpack.c.l.b16 %v3147
    %v3180 = vunpack.c.l.b16 %v3148
    %v3181 = vunpack.c.l.b16 %v3149
    %v3182 = vunpack.c.l.b16 %v3150
    %v3183 = vunpack.c.l.b16 %v3151
    %v3184 = vpack.c.b16 %v3169, %v3168
    %v3185 = vpack.c.b16 %v3171, %v3170
    %v3186 = vpack.c.b16 %v3173, %v3172
    %v3187 = vpack.c.b16 %v3175, %v3174
    %v3188 = vpack.c.b16 %v3177, %v3176
    %v3189 = vpack.c.b16 %v3179, %v3178
    %v3190 = vpack.c.b16 %v3181, %v3180
    %v3191 = vpack.c.b16 %v3183, %v3182
    %3200 = vmatprep.subr.bf16.mxu0 0
    %3201 = vmatpush1.bf16.msra.mxu0 %v3191
    %3202 = vmatprep.subr.bf16.mxu0 0
    %3203 = vmatpush1.bf16.msra.mxu0 %v3190
    %3204 = vmatprep.subr.bf16.mxu0 0
    %3205 = vmatpush1.bf16.msra.mxu0 %v3189
    %3206 = vmatprep.subr.bf16.mxu0 0
    %3207 = vmatpush1.bf16.msra.mxu0 %v3188
    %3208 = vmatprep.subr.bf16.mxu0 0
    %3209 = vmatpush1.bf16.msra.mxu0 %v3187
    %3210 = vmatprep.subr.bf16.mxu0 0
    %3211 = vmatpush1.bf16.msra.mxu0 %v3186
    %3212 = vmatprep.subr.bf16.mxu0 0
    %3213 = vmatpush1.bf16.msra.mxu0 %v3185
    %3214 = vmatprep.subr.bf16.mxu0 0
    %3215 = vmatpush1.bf16.msra.mxu0 %v3184
    %3216 = vmatprep.subr.bf16.mxu0 0
    %3217 = vmatpush2.bf16.msra.mxu0 0
    %3218 = vmatprep.subr.bf16.mxu0 0
    %3219 = vmatpush2.bf16.msra.mxu0 0
    %3220 = vmatprep.subr.bf16.mxu0 0
    %3221 = vmatpush2.bf16.msra.mxu0 0
    %3222 = vmatprep.subr.bf16.mxu0 0
    %3223 = vmatpush2.bf16.msra.mxu0 0
    %3224 = vmatprep.subr.bf16.mxu0 0
    %3225 = vmatpush2.bf16.msra.mxu0 0
    %3226 = vmatprep.subr.bf16.mxu0 0
    %3227 = vmatpush2.bf16.msra.mxu0 0
    %3228 = vmatprep.subr.bf16.mxu0 0
    %3229 = vmatpush2.bf16.msra.mxu0 0
    %3230 = vmatprep.subr.bf16.mxu0 0
    %3231 = vmatpush2.bf16.msra.mxu0 0
    %3232 = vmatprep.mubr.bf16.mxu0 0
    %3233 = vmatmul.mubr.bf16.gmra.mxu0 %v3134
    %v3234 = vpop.f32.mrf.mxu0
    %v3235 = vadd.f32 0.0, %v3234
    %v3236 = vpop.f32.mrf.mxu0
    %v3237 = vpop.f32.mrf.mxu0
    %v3238 = vadd.f32 0.0, %v3237
    %v3239 = vpop.f32.mrf.mxu0
    %3240 = vmatprep.mubr.bf16.mxu0 0
    %3241 = vmatmul.mubr.bf16.gmra.mxu0 %v3135
    %v3242 = vpop.f32.mrf.mxu0
    %v3243 = vadd.f32 0.0, %v3242
    %v3244 = vpop.f32.mrf.mxu0
    %v3245 = vpop.f32.mrf.mxu0
    %v3246 = vadd.f32 0.0, %v3245
    %v3247 = vpop.f32.mrf.mxu0
    %3248 = vdwg.mxu0
    %3249 = vst [vmem:[#allocation2] sm:$0xff] %v3235
    %3250 = vst [vmem:[#allocation2 + $0x8] sm:$0xff] %v3238
    %3251 = vst [vmem:[#allocation2 + $0x10] sm:$0xff] %v3243
    %3252 = vst [vmem:[#allocation2 + $0x18] sm:$0xff] %v3246
    %v3253 = vld [vmem:[%s547] sm:$0xf]
    %v3254 = vld [vmem:[%s547 + $0x4] sm:$0xf]
    %v3255 = vld [vmem:[%s547 + $0x8] sm:$0xf]
    %v3256 = vld [vmem:[%s547 + $0xc] sm:$0xf]
    %v3257 = vld [vmem:[%s547 + $0x10] sm:$0xf]
    %v3258 = vld [vmem:[%s547 + $0x14] sm:$0xf]
    %v3259 = vld [vmem:[%s547 + $0x18] sm:$0xf]
    %v3260 = vld [vmem:[%s547 + $0x1c] sm:$0xf]
    %v3261 = vld [vmem:[%s547 + $0x20] sm:$0xf]
    %v3262 = vld [vmem:[%s547 + $0x24] sm:$0xf]
    %v3263 = vld [vmem:[%s547 + $0x28] sm:$0xf]
    %v3264 = vld [vmem:[%s547 + $0x2c] sm:$0xf]
    %v3265 = vld [vmem:[%s547 + $0x30] sm:$0xf]
    %v3266 = vld [vmem:[%s547 + $0x34] sm:$0xf]
    %v3267 = vld [vmem:[%s547 + $0x38] sm:$0xf]
    %v3268 = vld [vmem:[%s547 + $0x3c] sm:$0xf]
    %v3285 = vunpack.c.l.b16 %v3253
    %v3286 = vunpack.c.l.b16 %v3254
    %v3287 = vunpack.c.l.b16 %v3255
    %v3288 = vunpack.c.l.b16 %v3256
    %v3289 = vunpack.c.l.b16 %v3257
    %v3290 = vunpack.c.l.b16 %v3258
    %v3291 = vunpack.c.l.b16 %v3259
    %v3292 = vunpack.c.l.b16 %v3260
    %v3293 = vunpack.c.l.b16 %v3261
    %v3294 = vunpack.c.l.b16 %v3262
    %v3295 = vunpack.c.l.b16 %v3263
    %v3296 = vunpack.c.l.b16 %v3264
    %v3297 = vunpack.c.l.b16 %v3265
    %v3298 = vunpack.c.l.b16 %v3266
    %v3299 = vunpack.c.l.b16 %v3267
    %v3300 = vunpack.c.l.b16 %v3268
    %v3301 = vpack.c.b16 %v3286, %v3285
    %v3302 = vpack.c.b16 %v3288, %v3287
    %v3303 = vpack.c.b16 %v3290, %v3289
    %v3304 = vpack.c.b16 %v3292, %v3291
    %v3305 = vpack.c.b16 %v3294, %v3293
    %v3306 = vpack.c.b16 %v3296, %v3295
    %v3307 = vpack.c.b16 %v3298, %v3297
    %v3308 = vpack.c.b16 %v3300, %v3299
    %3317 = vmatprep.subr.bf16.mxu0 0
    %3318 = vmatpush1.bf16.msra.mxu0 %v3308
    %3319 = vmatprep.subr.bf16.mxu0 0
    %3320 = vmatpush1.bf16.msra.mxu0 %v3307
    %3321 = vmatprep.subr.bf16.mxu0 0
    %3322 = vmatpush1.bf16.msra.mxu0 %v3306
    %3323 = vmatprep.subr.bf16.mxu0 0
    %3324 = vmatpush1.bf16.msra.mxu0 %v3305
    %3325 = vmatprep.subr.bf16.mxu0 0
    %3326 = vmatpush1.bf16.msra.mxu0 %v3304
    %3327 = vmatprep.subr.bf16.mxu0 0
    %3328 = vmatpush1.bf16.msra.mxu0 %v3303
    %3329 = vmatprep.subr.bf16.mxu0 0
    %3330 = vmatpush1.bf16.msra.mxu0 %v3302
    %3331 = vmatprep.subr.bf16.mxu0 0
    %3332 = vmatpush1.bf16.msra.mxu0 %v3301
    %3333 = vmatprep.subr.bf16.mxu0 0
    %3334 = vmatpush2.bf16.msra.mxu0 0
    %3335 = vmatprep.subr.bf16.mxu0 0
    %3336 = vmatpush2.bf16.msra.mxu0 0
    %3337 = vmatprep.subr.bf16.mxu0 0
    %3338 = vmatpush2.bf16.msra.mxu0 0
    %3339 = vmatprep.subr.bf16.mxu0 0
    %3340 = vmatpush2.bf16.msra.mxu0 0
    %3341 = vmatprep.subr.bf16.mxu0 0
    %3342 = vmatpush2.bf16.msra.mxu0 0
    %3343 = vmatprep.subr.bf16.mxu0 0
    %3344 = vmatpush2.bf16.msra.mxu0 0
    %3345 = vmatprep.subr.bf16.mxu0 0
    %3346 = vmatpush2.bf16.msra.mxu0 0
    %3347 = vmatprep.subr.bf16.mxu0 0
    %3348 = vmatpush2.bf16.msra.mxu0 0
    %3349 = vmatprep.mubr.bf16.mxu0 0
    %3350 = vmatmul.mubr.bf16.gmra.mxu0 %v3134
    %v3351 = vpop.f32.mrf.mxu0
    %v3352 = vadd.f32 0.0, %v3351
    %v3353 = vpop.f32.mrf.mxu0
    %v3354 = vpop.f32.mrf.mxu0
    %v3355 = vadd.f32 0.0, %v3354
    %v3356 = vpop.f32.mrf.mxu0
    %3357 = vmatprep.mubr.bf16.mxu0 0
    %3358 = vmatmul.mubr.bf16.gmra.mxu0 %v3135
    %v3359 = vpop.f32.mrf.mxu0
    %v3360 = vadd.f32 0.0, %v3359
    %v3361 = vpop.f32.mrf.mxu0
    %v3362 = vpop.f32.mrf.mxu0
    %v3363 = vadd.f32 0.0, %v3362
    %v3364 = vpop.f32.mrf.mxu0
    %3365 = vdwg.mxu0
    %3366 = vst [vmem:[#allocation2 + $0x20] sm:$0xff] %v3352
    %3367 = vst [vmem:[#allocation2 + $0x28] sm:$0xff] %v3355
    %3368 = vst [vmem:[#allocation2 + $0x30] sm:$0xff] %v3360
    %3369 = vst [vmem:[#allocation2 + $0x38] sm:$0xff] %v3363
    %v3370 = vld [vmem:[%s665] sm:$0xf]
    %v3371 = vld [vmem:[%s665 + $0x4] sm:$0xf]
    %v3372 = vld [vmem:[%s665 + $0x8] sm:$0xf]
    %v3373 = vld [vmem:[%s665 + $0xc] sm:$0xf]
    %v3374 = vld [vmem:[%s665 + $0x10] sm:$0xf]
    %v3375 = vld [vmem:[%s665 + $0x14] sm:$0xf]
    %v3376 = vld [vmem:[%s665 + $0x18] sm:$0xf]
    %v3377 = vld [vmem:[%s665 + $0x1c] sm:$0xf]
    %v3378 = vld [vmem:[%s665 + $0x20] sm:$0xf]
    %v3379 = vld [vmem:[%s665 + $0x24] sm:$0xf]
    %v3380 = vld [vmem:[%s665 + $0x28] sm:$0xf]
    %v3381 = vld [vmem:[%s665 + $0x2c] sm:$0xf]
    %v3382 = vld [vmem:[%s665 + $0x30] sm:$0xf]
    %v3383 = vld [vmem:[%s665 + $0x34] sm:$0xf]
    %v3384 = vld [vmem:[%s665 + $0x38] sm:$0xf]
    %v3385 = vld [vmem:[%s665 + $0x3c] sm:$0xf]
    %v3402 = vunpack.c.l.b16 %v3370
    %v3403 = vunpack.c.l.b16 %v3371
    %v3404 = vunpack.c.l.b16 %v3372
    %v3405 = vunpack.c.l.b16 %v3373
    %v3406 = vunpack.c.l.b16 %v3374
    %v3407 = vunpack.c.l.b16 %v3375
    %v3408 = vunpack.c.l.b16 %v3376
    %v3409 = vunpack.c.l.b16 %v3377
    %v3410 = vunpack.c.l.b16 %v3378
    %v3411 = vunpack.c.l.b16 %v3379
    %v3412 = vunpack.c.l.b16 %v3380
    %v3413 = vunpack.c.l.b16 %v3381
    %v3414 = vunpack.c.l.b16 %v3382
    %v3415 = vunpack.c.l.b16 %v3383
    %v3416 = vunpack.c.l.b16 %v3384
    %v3417 = vunpack.c.l.b16 %v3385
    %v3418 = vpack.c.b16 %v3403, %v3402
    %v3419 = vpack.c.b16 %v3405, %v3404
    %v3420 = vpack.c.b16 %v3407, %v3406
    %v3421 = vpack.c.b16 %v3409, %v3408
    %v3422 = vpack.c.b16 %v3411, %v3410
    %v3423 = vpack.c.b16 %v3413, %v3412
    %v3424 = vpack.c.b16 %v3415, %v3414
    %v3425 = vpack.c.b16 %v3417, %v3416
    %3434 = vmatprep.subr.bf16.mxu0 0
    %3435 = vmatpush1.bf16.msra.mxu0 %v3425
    %3436 = vmatprep.subr.bf16.mxu0 0
    %3437 = vmatpush1.bf16.msra.mxu0 %v3424
    %3438 = vmatprep.subr.bf16.mxu0 0
    %3439 = vmatpush1.bf16.msra.mxu0 %v3423
    %3440 = vmatprep.subr.bf16.mxu0 0
    %3441 = vmatpush1.bf16.msra.mxu0 %v3422
    %3442 = vmatprep.subr.bf16.mxu0 0
    %3443 = vmatpush1.bf16.msra.mxu0 %v3421
    %3444 = vmatprep.subr.bf16.mxu0 0
    %3445 = vmatpush1.bf16.msra.mxu0 %v3420
    %3446 = vmatprep.subr.bf16.mxu0 0
    %3447 = vmatpush1.bf16.msra.mxu0 %v3419
    %3448 = vmatprep.subr.bf16.mxu0 0
    %3449 = vmatpush1.bf16.msra.mxu0 %v3418
    %3450 = vmatprep.subr.bf16.mxu0 0
    %3451 = vmatpush2.bf16.msra.mxu0 0
    %3452 = vmatprep.subr.bf16.mxu0 0
    %3453 = vmatpush2.bf16.msra.mxu0 0
    %3454 = vmatprep.subr.bf16.mxu0 0
    %3455 = vmatpush2.bf16.msra.mxu0 0
    %3456 = vmatprep.subr.bf16.mxu0 0
    %3457 = vmatpush2.bf16.msra.mxu0 0
    %3458 = vmatprep.subr.bf16.mxu0 0
    %3459 = vmatpush2.bf16.msra.mxu0 0
    %3460 = vmatprep.subr.bf16.mxu0 0
    %3461 = vmatpush2.bf16.msra.mxu0 0
    %3462 = vmatprep.subr.bf16.mxu0 0
    %3463 = vmatpush2.bf16.msra.mxu0 0
    %3464 = vmatprep.subr.bf16.mxu0 0
    %3465 = vmatpush2.bf16.msra.mxu0 0
    %3466 = vmatprep.mubr.bf16.mxu0 0
    %3467 = vmatmul.mubr.bf16.gmra.mxu0 %v3134
    %v3468 = vpop.f32.mrf.mxu0
    %v3469 = vadd.f32 0.0, %v3468
    %v3470 = vpop.f32.mrf.mxu0
    %v3471 = vpop.f32.mrf.mxu0
    %v3472 = vadd.f32 0.0, %v3471
    %v3473 = vpop.f32.mrf.mxu0
    %3474 = vmatprep.mubr.bf16.mxu0 0
    %3475 = vmatmul.mubr.bf16.gmra.mxu0 %v3135
    %v3476 = vpop.f32.mrf.mxu0
    %v3477 = vadd.f32 0.0, %v3476
    %v3478 = vpop.f32.mrf.mxu0
    %v3479 = vpop.f32.mrf.mxu0
    %v3480 = vadd.f32 0.0, %v3479
    %v3481 = vpop.f32.mrf.mxu0
    %3482 = vdwg.mxu0
    %3483 = vst [vmem:[#allocation2 + $0x40] sm:$0xff] %v3469
    %3484 = vst [vmem:[#allocation2 + $0x48] sm:$0xff] %v3472
    %3485 = vst [vmem:[#allocation2 + $0x50] sm:$0xff] %v3477
    %3486 = vst [vmem:[#allocation2 + $0x58] sm:$0xff] %v3480
    %v3487 = vld [vmem:[%s783] sm:$0xf]
    %v3488 = vld [vmem:[%s783 + $0x4] sm:$0xf]
    %v3489 = vld [vmem:[%s783 + $0x8] sm:$0xf]
    %v3490 = vld [vmem:[%s783 + $0xc] sm:$0xf]
    %v3491 = vld [vmem:[%s783 + $0x10] sm:$0xf]
    %v3492 = vld [vmem:[%s783 + $0x14] sm:$0xf]
    %v3493 = vld [vmem:[%s783 + $0x18] sm:$0xf]
    %v3494 = vld [vmem:[%s783 + $0x1c] sm:$0xf]
    %v3495 = vld [vmem:[%s783 + $0x20] sm:$0xf]
    %v3496 = vld [vmem:[%s783 + $0x24] sm:$0xf]
    %v3497 = vld [vmem:[%s783 + $0x28] sm:$0xf]
    %v3498 = vld [vmem:[%s783 + $0x2c] sm:$0xf]
    %v3499 = vld [vmem:[%s783 + $0x30] sm:$0xf]
    %v3500 = vld [vmem:[%s783 + $0x34] sm:$0xf]
    %v3501 = vld [vmem:[%s783 + $0x38] sm:$0xf]
    %v3502 = vld [vmem:[%s783 + $0x3c] sm:$0xf]
    %v3519 = vunpack.c.l.b16 %v3487
    %v3520 = vunpack.c.l.b16 %v3488
    %v3521 = vunpack.c.l.b16 %v3489
    %v3522 = vunpack.c.l.b16 %v3490
    %v3523 = vunpack.c.l.b16 %v3491
    %v3524 = vunpack.c.l.b16 %v3492
    %v3525 = vunpack.c.l.b16 %v3493
    %v3526 = vunpack.c.l.b16 %v3494
    %v3527 = vunpack.c.l.b16 %v3495
    %v3528 = vunpack.c.l.b16 %v3496
    %v3529 = vunpack.c.l.b16 %v3497
    %v3530 = vunpack.c.l.b16 %v3498
    %v3531 = vunpack.c.l.b16 %v3499
    %v3532 = vunpack.c.l.b16 %v3500
    %v3533 = vunpack.c.l.b16 %v3501
    %v3534 = vunpack.c.l.b16 %v3502
    %v3535 = vpack.c.b16 %v3520, %v3519
    %v3536 = vpack.c.b16 %v3522, %v3521
    %v3537 = vpack.c.b16 %v3524, %v3523
    %v3538 = vpack.c.b16 %v3526, %v3525
    %v3539 = vpack.c.b16 %v3528, %v3527
    %v3540 = vpack.c.b16 %v3530, %v3529
    %v3541 = vpack.c.b16 %v3532, %v3531
    %v3542 = vpack.c.b16 %v3534, %v3533
    %3551 = vmatprep.subr.bf16.mxu0 0
    %3552 = vmatpush1.bf16.msra.mxu0 %v3542
    %3553 = vmatprep.subr.bf16.mxu0 0
    %3554 = vmatpush1.bf16.msra.mxu0 %v3541
    %3555 = vmatprep.subr.bf16.mxu0 0
    %3556 = vmatpush1.bf16.msra.mxu0 %v3540
    %3557 = vmatprep.subr.bf16.mxu0 0
    %3558 = vmatpush1.bf16.msra.mxu0 %v3539
    %3559 = vmatprep.subr.bf16.mxu0 0
    %3560 = vmatpush1.bf16.msra.mxu0 %v3538
    %3561 = vmatprep.subr.bf16.mxu0 0
    %3562 = vmatpush1.bf16.msra.mxu0 %v3537
    %3563 = vmatprep.subr.bf16.mxu0 0
    %3564 = vmatpush1.bf16.msra.mxu0 %v3536
    %3565 = vmatprep.subr.bf16.mxu0 0
    %3566 = vmatpush1.bf16.msra.mxu0 %v3535
    %3567 = vmatprep.subr.bf16.mxu0 0
    %3568 = vmatpush2.bf16.msra.mxu0 0
    %3569 = vmatprep.subr.bf16.mxu0 0
    %3570 = vmatpush2.bf16.msra.mxu0 0
    %3571 = vmatprep.subr.bf16.mxu0 0
    %3572 = vmatpush2.bf16.msra.mxu0 0
    %3573 = vmatprep.subr.bf16.mxu0 0
    %3574 = vmatpush2.bf16.msra.mxu0 0
    %3575 = vmatprep.subr.bf16.mxu0 0
    %3576 = vmatpush2.bf16.msra.mxu0 0
    %3577 = vmatprep.subr.bf16.mxu0 0
    %3578 = vmatpush2.bf16.msra.mxu0 0
    %3579 = vmatprep.subr.bf16.mxu0 0
    %3580 = vmatpush2.bf16.msra.mxu0 0
    %3581 = vmatprep.subr.bf16.mxu0 0
    %3582 = vmatpush2.bf16.msra.mxu0 0
    %3583 = vmatprep.mubr.bf16.mxu0 0
    %3584 = vmatmul.mubr.bf16.gmra.mxu0 %v3134
    %v3585 = vpop.f32.mrf.mxu0
    %v3586 = vadd.f32 0.0, %v3585
    %v3587 = vpop.f32.mrf.mxu0
    %v3588 = vpop.f32.mrf.mxu0
    %v3589 = vadd.f32 0.0, %v3588
    %v3590 = vpop.f32.mrf.mxu0
    %3591 = vmatprep.mubr.bf16.mxu0 0
    %3592 = vmatmul.mubr.bf16.gmra.mxu0 %v3135
    %v3593 = vpop.f32.mrf.mxu0
    %v3594 = vadd.f32 0.0, %v3593
    %v3595 = vpop.f32.mrf.mxu0
    %v3596 = vpop.f32.mrf.mxu0
    %v3597 = vadd.f32 0.0, %v3596
    %v3598 = vpop.f32.mrf.mxu0
    %3599 = vdwg.mxu0
    %3600 = vst [vmem:[#allocation2 + $0x60] sm:$0xff] %v3586
    %3601 = vst [vmem:[#allocation2 + $0x68] sm:$0xff] %v3589
    %3602 = vst [vmem:[#allocation2 + $0x70] sm:$0xff] %v3594
    %3603 = vst [vmem:[#allocation2 + $0x78] sm:$0xff] %v3597
    %v3604 = vld [vmem:[#allocation2] sm:$0xff]
    %v3605 = vld [vmem:[#allocation2 + $0x8] sm:$0xff]
    %v3606 = vld [vmem:[#allocation2 + $0x10] sm:$0xff]
    %v3607 = vld [vmem:[#allocation2 + $0x18] sm:$0xff]
    %v3608 = vld [vmem:[#allocation2 + $0x20] sm:$0xff]
    %v3609 = vld [vmem:[#allocation2 + $0x28] sm:$0xff]
    %v3610 = vld [vmem:[#allocation2 + $0x30] sm:$0xff]
    %v3611 = vld [vmem:[#allocation2 + $0x38] sm:$0xff]
    %v3612 = vld [vmem:[#allocation2 + $0x40] sm:$0xff]
    %v3613 = vld [vmem:[#allocation2 + $0x48] sm:$0xff]
    %v3614 = vld [vmem:[#allocation2 + $0x50] sm:$0xff]
    %v3615 = vld [vmem:[#allocation2 + $0x58] sm:$0xff]
    %v3616 = vld [vmem:[#allocation2 + $0x60] sm:$0xff]
    %v3617 = vld [vmem:[#allocation2 + $0x68] sm:$0xff]
    %v3618 = vld [vmem:[#allocation2 + $0x70] sm:$0xff]
    %v3619 = vld [vmem:[#allocation2 + $0x78] sm:$0xff]
    %3620 = vmatprep.subr.mxu0 0.0
    %3621 = vmatpush1.msra.mxu0 %v3619
    %3622 = vmatprep.subr.mxu0 0.0
    %3623 = vmatpush1.msra.mxu0 %v3618
    %3624 = vmatprep.subr.mxu0 0.0
    %3625 = vmatpush1.msra.mxu0 %v3617
    %3626 = vmatprep.subr.mxu0 0.0
    %3627 = vmatpush1.msra.mxu0 %v3616
    %3628 = vmatprep.subr.mxu0 0.0
    %3629 = vmatpush1.msra.mxu0 %v3615
    %3630 = vmatprep.subr.mxu0 0.0
    %3631 = vmatpush1.msra.mxu0 %v3614
    %3632 = vmatprep.subr.mxu0 0.0
    %3633 = vmatpush1.msra.mxu0 %v3613
    %3634 = vmatprep.subr.mxu0 0.0
    %3635 = vmatpush1.msra.mxu0 %v3612
    %3636 = vmatprep.subr.mxu0 0.0
    %3637 = vmatpush1.msra.mxu0 %v3611
    %3638 = vmatprep.subr.mxu0 0.0
    %3639 = vmatpush1.msra.mxu0 %v3610
    %3640 = vmatprep.subr.mxu0 0.0
    %3641 = vmatpush1.msra.mxu0 %v3609
    %3642 = vmatprep.subr.mxu0 0.0
    %3643 = vmatpush1.msra.mxu0 %v3608
    %3644 = vmatprep.subr.mxu0 0.0
    %3645 = vmatpush1.msra.mxu0 %v3607
    %3646 = vmatprep.subr.mxu0 0.0
    %3647 = vmatpush1.msra.mxu0 %v3606
    %3648 = vmatprep.subr.mxu0 0.0
    %3649 = vmatpush1.msra.mxu0 %v3605
    %3650 = vmatprep.subr.mxu0 0.0
    %3651 = vmatpush1.msra.mxu0 %v3604
    %3652 = vmatprep.subr.mxu0 0.0
    %3653 = vmatpush2.msra.mxu0 0.0
    %3654 = vmatprep.subr.mxu0 0.0
    %3655 = vmatpush2.msra.mxu0 0.0
    %3656 = vmatprep.subr.mxu0 0.0
    %3657 = vmatpush2.msra.mxu0 0.0
    %3658 = vmatprep.subr.mxu0 0.0
    %3659 = vmatpush2.msra.mxu0 0.0
    %3660 = vmatprep.subr.mxu0 0.0
    %3661 = vmatpush2.msra.mxu0 0.0
    %3662 = vmatprep.subr.mxu0 0.0
    %3663 = vmatpush2.msra.mxu0 0.0
    %3664 = vmatprep.subr.mxu0 0.0
    %3665 = vmatpush2.msra.mxu0 0.0
    %3666 = vmatprep.subr.mxu0 0.0
    %3667 = vmatpush2.msra.mxu0 0.0
    %3668 = vmatprep.subr.mxu0 0.0
    %3669 = vmatpush2.msra.mxu0 0.0
    %3670 = vmatprep.subr.mxu0 0.0
    %3671 = vmatpush2.msra.mxu0 0.0
    %3672 = vmatprep.subr.mxu0 0.0
    %3673 = vmatpush2.msra.mxu0 0.0
    %3674 = vmatprep.subr.mxu0 0.0
    %3675 = vmatpush2.msra.mxu0 0.0
    %3676 = vmatprep.subr.mxu0 0.0
    %3677 = vmatpush2.msra.mxu0 0.0
    %3678 = vmatprep.subr.mxu0 0.0
    %3679 = vmatpush2.msra.mxu0 0.0
    %3680 = vmatprep.subr.mxu0 0.0
    %3681 = vmatpush2.msra.mxu0 0.0
    %3682 = vmatprep.subr.mxu0 0.0
    %3683 = vmatpush2.msra.mxu0 0.0
    %3684 = vmatprep.mubr.f32.mxu0 0.0
    %3685 = vmatmul.mubr.f32.gmra.mxu0 %v380
    %v3686 = vpop.f32.mrf.mxu0
    %v3687 = vadd.f32 0.0, %v3686
    %v3688 = vpop.f32.mrf.mxu0
    %3689 = vmatprep.mubr.f32.mxu0 0.0
    %3690 = vmatmul.mubr.f32.gmra.mxu0 %v381
    %v3691 = vpop.f32.mrf.mxu0
    %v3692 = vadd.f32 0.0, %v3691
    %v3693 = vpop.f32.mrf.mxu0
    %3694 = vmatprep.mubr.f32.mxu0 0.0
    %3695 = vmatmul.mubr.f32.gmra.mxu0 %v382
    %v3696 = vpop.f32.mrf.mxu0
    %v3697 = vadd.f32 0.0, %v3696
    %v3698 = vpop.f32.mrf.mxu0
    %3699 = vmatprep.mubr.f32.mxu0 0.0
    %3700 = vmatmul.mubr.f32.gmra.mxu0 %v383
    %v3701 = vpop.f32.mrf.mxu0
    %v3702 = vadd.f32 0.0, %v3701
    %v3703 = vpop.f32.mrf.mxu0
    %3704 = vmatprep.mubr.f32.mxu0 0.0
    %3705 = vmatmul.mubr.f32.gmra.mxu0 %v384
    %v3706 = vpop.f32.mrf.mxu0
    %v3707 = vadd.f32 0.0, %v3706
    %v3708 = vpop.f32.mrf.mxu0
    %3709 = vmatprep.mubr.f32.mxu0 0.0
    %3710 = vmatmul.mubr.f32.gmra.mxu0 %v385
    %v3711 = vpop.f32.mrf.mxu0
    %v3712 = vadd.f32 0.0, %v3711
    %v3713 = vpop.f32.mrf.mxu0
    %3714 = vmatprep.mubr.f32.mxu0 0.0
    %3715 = vmatmul.mubr.f32.gmra.mxu0 %v386
    %v3716 = vpop.f32.mrf.mxu0
    %v3717 = vadd.f32 0.0, %v3716
    %v3718 = vpop.f32.mrf.mxu0
    %3719 = vmatprep.mubr.f32.mxu0 0.0
    %3720 = vmatmul.mubr.f32.gmra.mxu0 %v387
    %v3721 = vpop.f32.mrf.mxu0
    %v3722 = vadd.f32 0.0, %v3721
    %v3723 = vpop.f32.mrf.mxu0
    %3724 = vmatprep.mubr.f32.mxu0 0.0
    %3725 = vmatmul.mubr.f32.gmra.mxu0 %v388
    %v3726 = vpop.f32.mrf.mxu0
    %v3727 = vadd.f32 0.0, %v3726
    %v3728 = vpop.f32.mrf.mxu0
    %3729 = vmatprep.mubr.f32.mxu0 0.0
    %3730 = vmatmul.mubr.f32.gmra.mxu0 %v389
    %v3731 = vpop.f32.mrf.mxu0
    %v3732 = vadd.f32 0.0, %v3731
    %v3733 = vpop.f32.mrf.mxu0
    %3734 = vmatprep.mubr.f32.mxu0 0.0
    %3735 = vmatmul.mubr.f32.gmra.mxu0 %v390
    %v3736 = vpop.f32.mrf.mxu0
    %v3737 = vadd.f32 0.0, %v3736
    %v3738 = vpop.f32.mrf.mxu0
    %3739 = vmatprep.mubr.f32.mxu0 0.0
    %3740 = vmatmul.mubr.f32.gmra.mxu0 %v391
    %v3741 = vpop.f32.mrf.mxu0
    %v3742 = vadd.f32 0.0, %v3741
    %v3743 = vpop.f32.mrf.mxu0
    %3744 = vdwg.mxu0
    %3745 = vmatprep.subr.mxu0 0.0
    %3746 = vmatpush1.msra.mxu0 0.0
    %3747 = vmatprep.subr.mxu0 0.0
    %3748 = vmatpush1.msra.mxu0 0.0
    %3749 = vmatprep.subr.mxu0 0.0
    %3750 = vmatpush1.msra.mxu0 0.0
    %3751 = vmatprep.subr.mxu0 0.0
    %3752 = vmatpush1.msra.mxu0 0.0
    %3753 = vmatprep.subr.mxu0 0.0
    %3754 = vmatpush1.msra.mxu0 0.0
    %3755 = vmatprep.subr.mxu0 0.0
    %3756 = vmatpush1.msra.mxu0 0.0
    %3757 = vmatprep.subr.mxu0 0.0
    %3758 = vmatpush1.msra.mxu0 0.0
    %3759 = vmatprep.subr.mxu0 0.0
    %3760 = vmatpush1.msra.mxu0 0.0
    %3761 = vmatprep.subr.mxu0 0.0
    %3762 = vmatpush1.msra.mxu0 0.0
    %3763 = vmatprep.subr.mxu0 0.0
    %3764 = vmatpush1.msra.mxu0 0.0
    %3765 = vmatprep.subr.mxu0 0.0
    %3766 = vmatpush1.msra.mxu0 0.0
    %3767 = vmatprep.subr.mxu0 0.0
    %3768 = vmatpush1.msra.mxu0 0.0
    %3769 = vmatprep.subr.mxu0 0.0
    %3770 = vmatpush1.msra.mxu0 %v3133
    %3771 = vmatprep.subr.mxu0 0.0
    %3772 = vmatpush1.msra.mxu0 %v3132
    %3773 = vmatprep.subr.mxu0 0.0
    %3774 = vmatpush1.msra.mxu0 %v3131
    %3775 = vmatprep.subr.mxu0 0.0
    %3776 = vmatpush1.msra.mxu0 %v3130
    %3777 = vmatprep.subr.mxu0 0.0
    %3778 = vmatpush2.msra.mxu0 0.0
    %3779 = vmatprep.subr.mxu0 0.0
    %3780 = vmatpush2.msra.mxu0 0.0
    %3781 = vmatprep.subr.mxu0 0.0
    %3782 = vmatpush2.msra.mxu0 0.0
    %3783 = vmatprep.subr.mxu0 0.0
    %3784 = vmatpush2.msra.mxu0 0.0
    %3785 = vmatprep.subr.mxu0 0.0
    %3786 = vmatpush2.msra.mxu0 0.0
    %3787 = vmatprep.subr.mxu0 0.0
    %3788 = vmatpush2.msra.mxu0 0.0
    %3789 = vmatprep.subr.mxu0 0.0
    %3790 = vmatpush2.msra.mxu0 0.0
    %3791 = vmatprep.subr.mxu0 0.0
    %3792 = vmatpush2.msra.mxu0 0.0
    %3793 = vmatprep.subr.mxu0 0.0
    %3794 = vmatpush2.msra.mxu0 0.0
    %3795 = vmatprep.subr.mxu0 0.0
    %3796 = vmatpush2.msra.mxu0 0.0
    %3797 = vmatprep.subr.mxu0 0.0
    %3798 = vmatpush2.msra.mxu0 0.0
    %3799 = vmatprep.subr.mxu0 0.0
    %3800 = vmatpush2.msra.mxu0 0.0
    %3801 = vmatprep.subr.mxu0 0.0
    %3802 = vmatpush2.msra.mxu0 0.0
    %3803 = vmatprep.subr.mxu0 0.0
    %3804 = vmatpush2.msra.mxu0 0.0
    %3805 = vmatprep.subr.mxu0 0.0
    %3806 = vmatpush2.msra.mxu0 0.0
    %3807 = vmatprep.subr.mxu0 0.0
    %3808 = vmatpush2.msra.mxu0 0.0
    %3809 = vmatprep.mubr.f32.mxu0 0.0
    %3810 = vmatmul.mubr.f32.gmra.mxu0 %v1043
    %v3811 = vpop.f32.mrf.mxu0
    %v3812 = vadd.f32 0.0, %v3811
    %v3813 = vpop.f32.mrf.mxu0
    %3814 = vmatprep.mubr.f32.mxu0 0.0
    %3815 = vmatmul.mubr.f32.gmra.mxu0 %v1046
    %v3816 = vpop.f32.mrf.mxu0
    %v3817 = vadd.f32 0.0, %v3816
    %v3818 = vpop.f32.mrf.mxu0
    %3819 = vmatprep.mubr.f32.mxu0 0.0
    %3820 = vmatmul.mubr.f32.gmra.mxu0 %v1049
    %v3821 = vpop.f32.mrf.mxu0
    %v3822 = vadd.f32 0.0, %v3821
    %v3823 = vpop.f32.mrf.mxu0
    %3824 = vmatprep.mubr.f32.mxu0 0.0
    %3825 = vmatmul.mubr.f32.gmra.mxu0 %v1052
    %v3826 = vpop.f32.mrf.mxu0
    %v3827 = vadd.f32 0.0, %v3826
    %v3828 = vpop.f32.mrf.mxu0
    %3829 = vmatprep.mubr.f32.mxu0 0.0
    %3830 = vmatmul.mubr.f32.gmra.mxu0 %v1055
    %v3831 = vpop.f32.mrf.mxu0
    %v3832 = vadd.f32 0.0, %v3831
    %v3833 = vpop.f32.mrf.mxu0
    %3834 = vmatprep.mubr.f32.mxu0 0.0
    %3835 = vmatmul.mubr.f32.gmra.mxu0 %v1058
    %v3836 = vpop.f32.mrf.mxu0
    %v3837 = vadd.f32 0.0, %v3836
    %v3838 = vpop.f32.mrf.mxu0
    %3839 = vmatprep.mubr.f32.mxu0 0.0
    %3840 = vmatmul.mubr.f32.gmra.mxu0 %v1061
    %v3841 = vpop.f32.mrf.mxu0
    %v3842 = vadd.f32 0.0, %v3841
    %v3843 = vpop.f32.mrf.mxu0
    %3844 = vmatprep.mubr.f32.mxu0 0.0
    %3845 = vmatmul.mubr.f32.gmra.mxu0 %v1064
    %v3846 = vpop.f32.mrf.mxu0
    %v3847 = vadd.f32 0.0, %v3846
    %v3848 = vpop.f32.mrf.mxu0
    %3849 = vdwg.mxu0
    %v3850 = vadd.f32 %v3687, %v3812
    %v3851 = vadd.f32 %v3692, %v3817
    %v3852 = vadd.f32 %v3697, %v3822
    %v3853 = vadd.f32 %v3702, %v3827
    %v3854 = vadd.f32 %v3850, %v411
    %v3855 = vadd.f32 %v3851, %v416
    %v3856 = vadd.f32 %v3852, %v421
    %v3857 = vadd.f32 %v3853, %v426
    %v3858 = vxor.u32 %v3854, 2147483648
    %v3859 = vxor.u32 %v3855, 2147483648
    %v3860 = vxor.u32 %v3856, 2147483648
    %v3861 = vxor.u32 %v3857, 2147483648
    %v3862 = vmul.f32 %v3858, 1.442695
    %v3863 = vpow.pop %v3862
    %v3864 = vmul.f32 %v3859, 1.442695
    %v3865 = vpow.pop %v3864
    %v3866 = vmul.f32 %v3860, 1.442695
    %v3867 = vpow.pop %v3866
    %v3868 = vmul.f32 %v3861, 1.442695
    %v3869 = vpow.pop %v3868
    %v3870 = vadd.f32 %v3863, 1.0
    %v3871 = vadd.f32 %v3865, 1.0
    %v3872 = vadd.f32 %v3867, 1.0
    %v3873 = vadd.f32 %v3869, 1.0
    %v3874 = vrcp.pop %v3870
    %v3875 = vmul.f32 1.0, %v3874
    %v3876 = vrcp.pop %v3871
    %v3877 = vmul.f32 1.0, %v3876
    %v3878 = vrcp.pop %v3872
    %v3879 = vmul.f32 1.0, %v3878
    %v3880 = vrcp.pop %v3873
    %v3881 = vmul.f32 1.0, %v3880
    %v3882 = vadd.f32 %v3707, %v3832
    %v3883 = vadd.f32 %v3712, %v3837
    %v3884 = vadd.f32 %v3717, %v3842
    %v3885 = vadd.f32 %v3722, %v3847
    %v3886 = vxor.u32 %v3882, 2147483648
    %v3887 = vxor.u32 %v3883, 2147483648
    %v3888 = vxor.u32 %v3884, 2147483648
    %v3889 = vxor.u32 %v3885, 2147483648
    %v3890 = vmul.f32 %v3886, 1.442695
    %v3891 = vpow.pop %v3890
    %v3892 = vmul.f32 %v3887, 1.442695
    %v3893 = vpow.pop %v3892
    %v3894 = vmul.f32 %v3888, 1.442695
    %v3895 = vpow.pop %v3894
    %v3896 = vmul.f32 %v3889, 1.442695
    %v3897 = vpow.pop %v3896
    %v3898 = vadd.f32 %v3891, 1.0
    %v3899 = vadd.f32 %v3893, 1.0
    %v3900 = vadd.f32 %v3895, 1.0
    %v3901 = vadd.f32 %v3897, 1.0
    %v3902 = vrcp.pop %v3898
    %v3903 = vmul.f32 1.0, %v3902
    %v3904 = vrcp.pop %v3899
    %v3905 = vmul.f32 1.0, %v3904
    %v3906 = vrcp.pop %v3900
    %v3907 = vmul.f32 1.0, %v3906
    %v3908 = vrcp.pop %v3901
    %v3909 = vmul.f32 1.0, %v3908
    %v3910 = vmul.f32 %v3903, %v3130
    %v3911 = vmul.f32 %v3905, %v3131
    %v3912 = vmul.f32 %v3907, %v3132
    %v3913 = vmul.f32 %v3909, %v3133
    %3914 = vmatprep.subr.mxu0 0.0
    %3915 = vmatpush1.msra.mxu0 0.0
    %3916 = vmatprep.subr.mxu0 0.0
    %3917 = vmatpush1.msra.mxu0 0.0
    %3918 = vmatprep.subr.mxu0 0.0
    %3919 = vmatpush1.msra.mxu0 0.0
    %3920 = vmatprep.subr.mxu0 0.0
    %3921 = vmatpush1.msra.mxu0 0.0
    %3922 = vmatprep.subr.mxu0 0.0
    %3923 = vmatpush1.msra.mxu0 0.0
    %3924 = vmatprep.subr.mxu0 0.0
    %3925 = vmatpush1.msra.mxu0 0.0
    %3926 = vmatprep.subr.mxu0 0.0
    %3927 = vmatpush1.msra.mxu0 0.0
    %3928 = vmatprep.subr.mxu0 0.0
    %3929 = vmatpush1.msra.mxu0 0.0
    %3930 = vmatprep.subr.mxu0 0.0
    %3931 = vmatpush1.msra.mxu0 0.0
    %3932 = vmatprep.subr.mxu0 0.0
    %3933 = vmatpush1.msra.mxu0 0.0
    %3934 = vmatprep.subr.mxu0 0.0
    %3935 = vmatpush1.msra.mxu0 0.0
    %3936 = vmatprep.subr.mxu0 0.0
    %3937 = vmatpush1.msra.mxu0 0.0
    %3938 = vmatprep.subr.mxu0 0.0
    %3939 = vmatpush1.msra.mxu0 %v3913
    %3940 = vmatprep.subr.mxu0 0.0
    %3941 = vmatpush1.msra.mxu0 %v3912
    %3942 = vmatprep.subr.mxu0 0.0
    %3943 = vmatpush1.msra.mxu0 %v3911
    %3944 = vmatprep.subr.mxu0 0.0
    %3945 = vmatpush1.msra.mxu0 %v3910
    %3946 = vmatprep.subr.mxu0 0.0
    %3947 = vmatpush2.msra.mxu0 0.0
    %3948 = vmatprep.subr.mxu0 0.0
    %3949 = vmatpush2.msra.mxu0 0.0
    %3950 = vmatprep.subr.mxu0 0.0
    %3951 = vmatpush2.msra.mxu0 0.0
    %3952 = vmatprep.subr.mxu0 0.0
    %3953 = vmatpush2.msra.mxu0 0.0
    %3954 = vmatprep.subr.mxu0 0.0
    %3955 = vmatpush2.msra.mxu0 0.0
    %3956 = vmatprep.subr.mxu0 0.0
    %3957 = vmatpush2.msra.mxu0 0.0
    %3958 = vmatprep.subr.mxu0 0.0
    %3959 = vmatpush2.msra.mxu0 0.0
    %3960 = vmatprep.subr.mxu0 0.0
    %3961 = vmatpush2.msra.mxu0 0.0
    %3962 = vmatprep.subr.mxu0 0.0
    %3963 = vmatpush2.msra.mxu0 0.0
    %3964 = vmatprep.subr.mxu0 0.0
    %3965 = vmatpush2.msra.mxu0 0.0
    %3966 = vmatprep.subr.mxu0 0.0
    %3967 = vmatpush2.msra.mxu0 0.0
    %3968 = vmatprep.subr.mxu0 0.0
    %3969 = vmatpush2.msra.mxu0 0.0
    %3970 = vmatprep.subr.mxu0 0.0
    %3971 = vmatpush2.msra.mxu0 0.0
    %3972 = vmatprep.subr.mxu0 0.0
    %3973 = vmatpush2.msra.mxu0 0.0
    %3974 = vmatprep.subr.mxu0 0.0
    %3975 = vmatpush2.msra.mxu0 0.0
    %3976 = vmatprep.subr.mxu0 0.0
    %3977 = vmatpush2.msra.mxu0 0.0
    %3978 = vmatprep.mubr.f32.mxu0 0.0
    %3979 = vmatmul.mubr.f32.gmra.mxu0 %v1236
    %v3980 = vpop.f32.mrf.mxu0
    %v3981 = vadd.f32 0.0, %v3980
    %v3982 = vpop.f32.mrf.mxu0
    %3983 = vmatprep.mubr.f32.mxu0 0.0
    %3984 = vmatmul.mubr.f32.gmra.mxu0 %v1239
    %v3985 = vpop.f32.mrf.mxu0
    %v3986 = vadd.f32 0.0, %v3985
    %v3987 = vpop.f32.mrf.mxu0
    %3988 = vmatprep.mubr.f32.mxu0 0.0
    %3989 = vmatmul.mubr.f32.gmra.mxu0 %v1242
    %v3990 = vpop.f32.mrf.mxu0
    %v3991 = vadd.f32 0.0, %v3990
    %v3992 = vpop.f32.mrf.mxu0
    %3993 = vmatprep.mubr.f32.mxu0 0.0
    %3994 = vmatmul.mubr.f32.gmra.mxu0 %v1245
    %v3995 = vpop.f32.mrf.mxu0
    %v3996 = vadd.f32 0.0, %v3995
    %v3997 = vpop.f32.mrf.mxu0
    %3998 = vdwg.mxu0
    %v3999 = vadd.f32 %v3727, %v3981
    %v4000 = vadd.f32 %v3732, %v3986
    %v4001 = vadd.f32 %v3737, %v3991
    %v4002 = vadd.f32 %v3742, %v3996
    %v4003 = vtanh.pop %v3999
    %v4004 = vtanh.pop %v4000
    %v4005 = vtanh.pop %v4001
    %v4006 = vtanh.pop %v4002
    %v4007 = vsub.f32 1.0, %v3875
    %v4008 = vsub.f32 1.0, %v3877
    %v4009 = vsub.f32 1.0, %v3879
    %v4010 = vsub.f32 1.0, %v3881
    %v4011 = vmul.f32 %v4007, %v3130
    %v4012 = vmul.f32 %v4008, %v3131
    %v4013 = vmul.f32 %v4009, %v3132
    %v4014 = vmul.f32 %v4010, %v3133
    %v4015 = vmul.f32 %v3875, %v4003
    %v4016 = vmul.f32 %v3877, %v4004
    %v4017 = vmul.f32 %v3879, %v4005
    %v4018 = vmul.f32 %v3881, %v4006
    %v4019 = vadd.f32 %v4011, %v4015
    %v4020 = vadd.f32 %v4012, %v4016
    %v4021 = vadd.f32 %v4013, %v4017
    %v4022 = vadd.f32 %v4014, %v4018
    %v4023 = vpack.c.bf16 %v4020, %v4019
    %v4024 = vpack.c.bf16 %v4022, %v4021
    %v4025 = vld [vmem:[%s1] sm:$0xf]
    %v4026 = vld [vmem:[%s1 + $0x4] sm:$0xf]
    %v4027 = vld [vmem:[%s1 + $0x8] sm:$0xf]
    %v4028 = vld [vmem:[%s1 + $0xc] sm:$0xf]
    %v4029 = vld [vmem:[%s1 + $0x10] sm:$0xf]
    %v4030 = vld [vmem:[%s1 + $0x14] sm:$0xf]
    %v4031 = vld [vmem:[%s1 + $0x18] sm:$0xf]
    %v4032 = vld [vmem:[%s1 + $0x1c] sm:$0xf]
    %v4033 = vld [vmem:[%s1 + $0x20] sm:$0xf]
    %v4034 = vld [vmem:[%s1 + $0x24] sm:$0xf]
    %v4035 = vld [vmem:[%s1 + $0x28] sm:$0xf]
    %v4036 = vld [vmem:[%s1 + $0x2c] sm:$0xf]
    %v4037 = vld [vmem:[%s1 + $0x30] sm:$0xf]
    %v4038 = vld [vmem:[%s1 + $0x34] sm:$0xf]
    %v4039 = vld [vmem:[%s1 + $0x38] sm:$0xf]
    %v4040 = vld [vmem:[%s1 + $0x3c] sm:$0xf]
    %v4057 = vunpack.c.l.b16 %v4025
    %v4058 = vunpack.c.l.b16 %v4026
    %v4059 = vunpack.c.l.b16 %v4027
    %v4060 = vunpack.c.l.b16 %v4028
    %v4061 = vunpack.c.l.b16 %v4029
    %v4062 = vunpack.c.l.b16 %v4030
    %v4063 = vunpack.c.l.b16 %v4031
    %v4064 = vunpack.c.l.b16 %v4032
    %v4065 = vunpack.c.l.b16 %v4033
    %v4066 = vunpack.c.l.b16 %v4034
    %v4067 = vunpack.c.l.b16 %v4035
    %v4068 = vunpack.c.l.b16 %v4036
    %v4069 = vunpack.c.l.b16 %v4037
    %v4070 = vunpack.c.l.b16 %v4038
    %v4071 = vunpack.c.l.b16 %v4039
    %v4072 = vunpack.c.l.b16 %v4040
    %v4073 = vpack.c.b16 %v4058, %v4057
    %v4074 = vpack.c.b16 %v4060, %v4059
    %v4075 = vpack.c.b16 %v4062, %v4061
    %v4076 = vpack.c.b16 %v4064, %v4063
    %v4077 = vpack.c.b16 %v4066, %v4065
    %v4078 = vpack.c.b16 %v4068, %v4067
    %v4079 = vpack.c.b16 %v4070, %v4069
    %v4080 = vpack.c.b16 %v4072, %v4071
    %4089 = vmatprep.subr.bf16.mxu0 0
    %4090 = vmatpush1.bf16.msra.mxu0 %v4080
    %4091 = vmatprep.subr.bf16.mxu0 0
    %4092 = vmatpush1.bf16.msra.mxu0 %v4079
    %4093 = vmatprep.subr.bf16.mxu0 0
    %4094 = vmatpush1.bf16.msra.mxu0 %v4078
    %4095 = vmatprep.subr.bf16.mxu0 0
    %4096 = vmatpush1.bf16.msra.mxu0 %v4077
    %4097 = vmatprep.subr.bf16.mxu0 0
    %4098 = vmatpush1.bf16.msra.mxu0 %v4076
    %4099 = vmatprep.subr.bf16.mxu0 0
    %4100 = vmatpush1.bf16.msra.mxu0 %v4075
    %4101 = vmatprep.subr.bf16.mxu0 0
    %4102 = vmatpush1.bf16.msra.mxu0 %v4074
    %4103 = vmatprep.subr.bf16.mxu0 0
    %4104 = vmatpush1.bf16.msra.mxu0 %v4073
    %4105 = vmatprep.subr.bf16.mxu0 0
    %4106 = vmatpush2.bf16.msra.mxu0 0
    %4107 = vmatprep.subr.bf16.mxu0 0
    %4108 = vmatpush2.bf16.msra.mxu0 0
    %4109 = vmatprep.subr.bf16.mxu0 0
    %4110 = vmatpush2.bf16.msra.mxu0 0
    %4111 = vmatprep.subr.bf16.mxu0 0
    %4112 = vmatpush2.bf16.msra.mxu0 0
    %4113 = vmatprep.subr.bf16.mxu0 0
    %4114 = vmatpush2.bf16.msra.mxu0 0
    %4115 = vmatprep.subr.bf16.mxu0 0
    %4116 = vmatpush2.bf16.msra.mxu0 0
    %4117 = vmatprep.subr.bf16.mxu0 0
    %4118 = vmatpush2.bf16.msra.mxu0 0
    %4119 = vmatprep.subr.bf16.mxu0 0
    %4120 = vmatpush2.bf16.msra.mxu0 0
    %4121 = vmatprep.mubr.bf16.mxu0 0
    %4122 = vmatmul.mubr.bf16.gmra.mxu0 %v4023
    %v4123 = vpop.f32.mrf.mxu0
    %v4124 = vadd.f32 0.0, %v4123
    %v4125 = vpop.f32.mrf.mxu0
    %v4126 = vpop.f32.mrf.mxu0
    %v4127 = vadd.f32 0.0, %v4126
    %v4128 = vpop.f32.mrf.mxu0
    %4129 = vmatprep.mubr.bf16.mxu0 0
    %4130 = vmatmul.mubr.bf16.gmra.mxu0 %v4024
    %v4131 = vpop.f32.mrf.mxu0
    %v4132 = vadd.f32 0.0, %v4131
    %v4133 = vpop.f32.mrf.mxu0
    %v4134 = vpop.f32.mrf.mxu0
    %v4135 = vadd.f32 0.0, %v4134
    %v4136 = vpop.f32.mrf.mxu0
    %4137 = vdwg.mxu0
    %4138 = vst [vmem:[#allocation2] sm:$0xff] %v4124
    %4139 = vst [vmem:[#allocation2 + $0x8] sm:$0xff] %v4127
    %4140 = vst [vmem:[#allocation2 + $0x10] sm:$0xff] %v4132
    %4141 = vst [vmem:[#allocation2 + $0x18] sm:$0xff] %v4135
    %v4142 = vld [vmem:[%s547] sm:$0xf]
    %v4143 = vld [vmem:[%s547 + $0x4] sm:$0xf]
    %v4144 = vld [vmem:[%s547 + $0x8] sm:$0xf]
    %v4145 = vld [vmem:[%s547 + $0xc] sm:$0xf]
    %v4146 = vld [vmem:[%s547 + $0x10] sm:$0xf]
    %v4147 = vld [vmem:[%s547 + $0x14] sm:$0xf]
    %v4148 = vld [vmem:[%s547 + $0x18] sm:$0xf]
    %v4149 = vld [vmem:[%s547 + $0x1c] sm:$0xf]
    %v4150 = vld [vmem:[%s547 + $0x20] sm:$0xf]
    %v4151 = vld [vmem:[%s547 + $0x24] sm:$0xf]
    %v4152 = vld [vmem:[%s547 + $0x28] sm:$0xf]
    %v4153 = vld [vmem:[%s547 + $0x2c] sm:$0xf]
    %v4154 = vld [vmem:[%s547 + $0x30] sm:$0xf]
    %v4155 = vld [vmem:[%s547 + $0x34] sm:$0xf]
    %v4156 = vld [vmem:[%s547 + $0x38] sm:$0xf]
    %v4157 = vld [vmem:[%s547 + $0x3c] sm:$0xf]
    %v4174 = vunpack.c.l.b16 %v4142
    %v4175 = vunpack.c.l.b16 %v4143
    %v4176 = vunpack.c.l.b16 %v4144
    %v4177 = vunpack.c.l.b16 %v4145
    %v4178 = vunpack.c.l.b16 %v4146
    %v4179 = vunpack.c.l.b16 %v4147
    %v4180 = vunpack.c.l.b16 %v4148
    %v4181 = vunpack.c.l.b16 %v4149
    %v4182 = vunpack.c.l.b16 %v4150
    %v4183 = vunpack.c.l.b16 %v4151
    %v4184 = vunpack.c.l.b16 %v4152
    %v4185 = vunpack.c.l.b16 %v4153
    %v4186 = vunpack.c.l.b16 %v4154
    %v4187 = vunpack.c.l.b16 %v4155
    %v4188 = vunpack.c.l.b16 %v4156
    %v4189 = vunpack.c.l.b16 %v4157
    %v4190 = vpack.c.b16 %v4175, %v4174
    %v4191 = vpack.c.b16 %v4177, %v4176
    %v4192 = vpack.c.b16 %v4179, %v4178
    %v4193 = vpack.c.b16 %v4181, %v4180
    %v4194 = vpack.c.b16 %v4183, %v4182
    %v4195 = vpack.c.b16 %v4185, %v4184
    %v4196 = vpack.c.b16 %v4187, %v4186
    %v4197 = vpack.c.b16 %v4189, %v4188
    %4206 = vmatprep.subr.bf16.mxu0 0
    %4207 = vmatpush1.bf16.msra.mxu0 %v4197
    %4208 = vmatprep.subr.bf16.mxu0 0
    %4209 = vmatpush1.bf16.msra.mxu0 %v4196
    %4210 = vmatprep.subr.bf16.mxu0 0
    %4211 = vmatpush1.bf16.msra.mxu0 %v4195
    %4212 = vmatprep.subr.bf16.mxu0 0
    %4213 = vmatpush1.bf16.msra.mxu0 %v4194
    %4214 = vmatprep.subr.bf16.mxu0 0
    %4215 = vmatpush1.bf16.msra.mxu0 %v4193
    %4216 = vmatprep.subr.bf16.mxu0 0
    %4217 = vmatpush1.bf16.msra.mxu0 %v4192
    %4218 = vmatprep.subr.bf16.mxu0 0
    %4219 = vmatpush1.bf16.msra.mxu0 %v4191
    %4220 = vmatprep.subr.bf16.mxu0 0
    %4221 = vmatpush1.bf16.msra.mxu0 %v4190
    %4222 = vmatprep.subr.bf16.mxu0 0
    %4223 = vmatpush2.bf16.msra.mxu0 0
    %4224 = vmatprep.subr.bf16.mxu0 0
    %4225 = vmatpush2.bf16.msra.mxu0 0
    %4226 = vmatprep.subr.bf16.mxu0 0
    %4227 = vmatpush2.bf16.msra.mxu0 0
    %4228 = vmatprep.subr.bf16.mxu0 0
    %4229 = vmatpush2.bf16.msra.mxu0 0
    %4230 = vmatprep.subr.bf16.mxu0 0
    %4231 = vmatpush2.bf16.msra.mxu0 0
    %4232 = vmatprep.subr.bf16.mxu0 0
    %4233 = vmatpush2.bf16.msra.mxu0 0
    %4234 = vmatprep.subr.bf16.mxu0 0
    %4235 = vmatpush2.bf16.msra.mxu0 0
    %4236 = vmatprep.subr.bf16.mxu0 0
    %4237 = vmatpush2.bf16.msra.mxu0 0
    %4238 = vmatprep.mubr.bf16.mxu0 0
    %4239 = vmatmul.mubr.bf16.gmra.mxu0 %v4023
    %v4240 = vpop.f32.mrf.mxu0
    %v4241 = vadd.f32 0.0, %v4240
    %v4242 = vpop.f32.mrf.mxu0
    %v4243 = vpop.f32.mrf.mxu0
    %v4244 = vadd.f32 0.0, %v4243
    %v4245 = vpop.f32.mrf.mxu0
    %4246 = vmatprep.mubr.bf16.mxu0 0
    %4247 = vmatmul.mubr.bf16.gmra.mxu0 %v4024
    %v4248 = vpop.f32.mrf.mxu0
    %v4249 = vadd.f32 0.0, %v4248
    %v4250 = vpop.f32.mrf.mxu0
    %v4251 = vpop.f32.mrf.mxu0
    %v4252 = vadd.f32 0.0, %v4251
    %v4253 = vpop.f32.mrf.mxu0
    %4254 = vdwg.mxu0
    %4255 = vst [vmem:[#allocation2 + $0x20] sm:$0xff] %v4241
    %4256 = vst [vmem:[#allocation2 + $0x28] sm:$0xff] %v4244
    %4257 = vst [vmem:[#allocation2 + $0x30] sm:$0xff] %v4249
    %4258 = vst [vmem:[#allocation2 + $0x38] sm:$0xff] %v4252
    %v4259 = vld [vmem:[%s665] sm:$0xf]
    %v4260 = vld [vmem:[%s665 + $0x4] sm:$0xf]
    %v4261 = vld [vmem:[%s665 + $0x8] sm:$0xf]
    %v4262 = vld [vmem:[%s665 + $0xc] sm:$0xf]
    %v4263 = vld [vmem:[%s665 + $0x10] sm:$0xf]
    %v4264 = vld [vmem:[%s665 + $0x14] sm:$0xf]
    %v4265 = vld [vmem:[%s665 + $0x18] sm:$0xf]
    %v4266 = vld [vmem:[%s665 + $0x1c] sm:$0xf]
    %v4267 = vld [vmem:[%s665 + $0x20] sm:$0xf]
    %v4268 = vld [vmem:[%s665 + $0x24] sm:$0xf]
    %v4269 = vld [vmem:[%s665 + $0x28] sm:$0xf]
    %v4270 = vld [vmem:[%s665 + $0x2c] sm:$0xf]
    %v4271 = vld [vmem:[%s665 + $0x30] sm:$0xf]
    %v4272 = vld [vmem:[%s665 + $0x34] sm:$0xf]
    %v4273 = vld [vmem:[%s665 + $0x38] sm:$0xf]
    %v4274 = vld [vmem:[%s665 + $0x3c] sm:$0xf]
    %v4291 = vunpack.c.l.b16 %v4259
    %v4292 = vunpack.c.l.b16 %v4260
    %v4293 = vunpack.c.l.b16 %v4261
    %v4294 = vunpack.c.l.b16 %v4262
    %v4295 = vunpack.c.l.b16 %v4263
    %v4296 = vunpack.c.l.b16 %v4264
    %v4297 = vunpack.c.l.b16 %v4265
    %v4298 = vunpack.c.l.b16 %v4266
    %v4299 = vunpack.c.l.b16 %v4267
    %v4300 = vunpack.c.l.b16 %v4268
    %v4301 = vunpack.c.l.b16 %v4269
    %v4302 = vunpack.c.l.b16 %v4270
    %v4303 = vunpack.c.l.b16 %v4271
    %v4304 = vunpack.c.l.b16 %v4272
    %v4305 = vunpack.c.l.b16 %v4273
    %v4306 = vunpack.c.l.b16 %v4274
    %v4307 = vpack.c.b16 %v4292, %v4291
    %v4308 = vpack.c.b16 %v4294, %v4293
    %v4309 = vpack.c.b16 %v4296, %v4295
    %v4310 = vpack.c.b16 %v4298, %v4297
    %v4311 = vpack.c.b16 %v4300, %v4299
    %v4312 = vpack.c.b16 %v4302, %v4301
    %v4313 = vpack.c.b16 %v4304, %v4303
    %v4314 = vpack.c.b16 %v4306, %v4305
    %4323 = vmatprep.subr.bf16.mxu0 0
    %4324 = vmatpush1.bf16.msra.mxu0 %v4314
    %4325 = vmatprep.subr.bf16.mxu0 0
    %4326 = vmatpush1.bf16.msra.mxu0 %v4313
    %4327 = vmatprep.subr.bf16.mxu0 0
    %4328 = vmatpush1.bf16.msra.mxu0 %v4312
    %4329 = vmatprep.subr.bf16.mxu0 0
    %4330 = vmatpush1.bf16.msra.mxu0 %v4311
    %4331 = vmatprep.subr.bf16.mxu0 0
    %4332 = vmatpush1.bf16.msra.mxu0 %v4310
    %4333 = vmatprep.subr.bf16.mxu0 0
    %4334 = vmatpush1.bf16.msra.mxu0 %v4309
    %4335 = vmatprep.subr.bf16.mxu0 0
    %4336 = vmatpush1.bf16.msra.mxu0 %v4308
    %4337 = vmatprep.subr.bf16.mxu0 0
    %4338 = vmatpush1.bf16.msra.mxu0 %v4307
    %4339 = vmatprep.subr.bf16.mxu0 0
    %4340 = vmatpush2.bf16.msra.mxu0 0
    %4341 = vmatprep.subr.bf16.mxu0 0
    %4342 = vmatpush2.bf16.msra.mxu0 0
    %4343 = vmatprep.subr.bf16.mxu0 0
    %4344 = vmatpush2.bf16.msra.mxu0 0
    %4345 = vmatprep.subr.bf16.mxu0 0
    %4346 = vmatpush2.bf16.msra.mxu0 0
    %4347 = vmatprep.subr.bf16.mxu0 0
    %4348 = vmatpush2.bf16.msra.mxu0 0
    %4349 = vmatprep.subr.bf16.mxu0 0
    %4350 = vmatpush2.bf16.msra.mxu0 0
    %4351 = vmatprep.subr.bf16.mxu0 0
    %4352 = vmatpush2.bf16.msra.mxu0 0
    %4353 = vmatprep.subr.bf16.mxu0 0
    %4354 = vmatpush2.bf16.msra.mxu0 0
    %4355 = vmatprep.mubr.bf16.mxu0 0
    %4356 = vmatmul.mubr.bf16.gmra.mxu0 %v4023
    %v4357 = vpop.f32.mrf.mxu0
    %v4358 = vadd.f32 0.0, %v4357
    %v4359 = vpop.f32.mrf.mxu0
    %v4360 = vpop.f32.mrf.mxu0
    %v4361 = vadd.f32 0.0, %v4360
    %v4362 = vpop.f32.mrf.mxu0
    %4363 = vmatprep.mubr.bf16.mxu0 0
    %4364 = vmatmul.mubr.bf16.gmra.mxu0 %v4024
    %v4365 = vpop.f32.mrf.mxu0
    %v4366 = vadd.f32 0.0, %v4365
    %v4367 = vpop.f32.mrf.mxu0
    %v4368 = vpop.f32.mrf.mxu0
    %v4369 = vadd.f32 0.0, %v4368
    %v4370 = vpop.f32.mrf.mxu0
    %4371 = vdwg.mxu0
    %4372 = vst [vmem:[#allocation2 + $0x40] sm:$0xff] %v4358
    %4373 = vst [vmem:[#allocation2 + $0x48] sm:$0xff] %v4361
    %4374 = vst [vmem:[#allocation2 + $0x50] sm:$0xff] %v4366
    %4375 = vst [vmem:[#allocation2 + $0x58] sm:$0xff] %v4369
    %v4376 = vld [vmem:[%s783] sm:$0xf]
    %v4377 = vld [vmem:[%s783 + $0x4] sm:$0xf]
    %v4378 = vld [vmem:[%s783 + $0x8] sm:$0xf]
    %v4379 = vld [vmem:[%s783 + $0xc] sm:$0xf]
    %v4380 = vld [vmem:[%s783 + $0x10] sm:$0xf]
    %v4381 = vld [vmem:[%s783 + $0x14] sm:$0xf]
    %v4382 = vld [vmem:[%s783 + $0x18] sm:$0xf]
    %v4383 = vld [vmem:[%s783 + $0x1c] sm:$0xf]
    %v4384 = vld [vmem:[%s783 + $0x20] sm:$0xf]
    %v4385 = vld [vmem:[%s783 + $0x24] sm:$0xf]
    %v4386 = vld [vmem:[%s783 + $0x28] sm:$0xf]
    %v4387 = vld [vmem:[%s783 + $0x2c] sm:$0xf]
    %v4388 = vld [vmem:[%s783 + $0x30] sm:$0xf]
    %v4389 = vld [vmem:[%s783 + $0x34] sm:$0xf]
    %v4390 = vld [vmem:[%s783 + $0x38] sm:$0xf]
    %v4391 = vld [vmem:[%s783 + $0x3c] sm:$0xf]
    %v4408 = vunpack.c.l.b16 %v4376
    %v4409 = vunpack.c.l.b16 %v4377
    %v4410 = vunpack.c.l.b16 %v4378
    %v4411 = vunpack.c.l.b16 %v4379
    %v4412 = vunpack.c.l.b16 %v4380
    %v4413 = vunpack.c.l.b16 %v4381
    %v4414 = vunpack.c.l.b16 %v4382
    %v4415 = vunpack.c.l.b16 %v4383
    %v4416 = vunpack.c.l.b16 %v4384
    %v4417 = vunpack.c.l.b16 %v4385
    %v4418 = vunpack.c.l.b16 %v4386
    %v4419 = vunpack.c.l.b16 %v4387
    %v4420 = vunpack.c.l.b16 %v4388
    %v4421 = vunpack.c.l.b16 %v4389
    %v4422 = vunpack.c.l.b16 %v4390
    %v4423 = vunpack.c.l.b16 %v4391
    %v4424 = vpack.c.b16 %v4409, %v4408
    %v4425 = vpack.c.b16 %v4411, %v4410
    %v4426 = vpack.c.b16 %v4413, %v4412
    %v4427 = vpack.c.b16 %v4415, %v4414
    %v4428 = vpack.c.b16 %v4417, %v4416
    %v4429 = vpack.c.b16 %v4419, %v4418
    %v4430 = vpack.c.b16 %v4421, %v4420
    %v4431 = vpack.c.b16 %v4423, %v4422
    %4440 = vmatprep.subr.bf16.mxu0 0
    %4441 = vmatpush1.bf16.msra.mxu0 %v4431
    %4442 = vmatprep.subr.bf16.mxu0 0
    %4443 = vmatpush1.bf16.msra.mxu0 %v4430
    %4444 = vmatprep.subr.bf16.mxu0 0
    %4445 = vmatpush1.bf16.msra.mxu0 %v4429
    %4446 = vmatprep.subr.bf16.mxu0 0
    %4447 = vmatpush1.bf16.msra.mxu0 %v4428
    %4448 = vmatprep.subr.bf16.mxu0 0
    %4449 = vmatpush1.bf16.msra.mxu0 %v4427
    %4450 = vmatprep.subr.bf16.mxu0 0
    %4451 = vmatpush1.bf16.msra.mxu0 %v4426
    %4452 = vmatprep.subr.bf16.mxu0 0
    %4453 = vmatpush1.bf16.msra.mxu0 %v4425
    %4454 = vmatprep.subr.bf16.mxu0 0
    %4455 = vmatpush1.bf16.msra.mxu0 %v4424
    %4456 = vmatprep.subr.bf16.mxu0 0
    %4457 = vmatpush2.bf16.msra.mxu0 0
    %4458 = vmatprep.subr.bf16.mxu0 0
    %4459 = vmatpush2.bf16.msra.mxu0 0
    %4460 = vmatprep.subr.bf16.mxu0 0
    %4461 = vmatpush2.bf16.msra.mxu0 0
    %4462 = vmatprep.subr.bf16.mxu0 0
    %4463 = vmatpush2.bf16.msra.mxu0 0
    %4464 = vmatprep.subr.bf16.mxu0 0
    %4465 = vmatpush2.bf16.msra.mxu0 0
    %4466 = vmatprep.subr.bf16.mxu0 0
    %4467 = vmatpush2.bf16.msra.mxu0 0
    %4468 = vmatprep.subr.bf16.mxu0 0
    %4469 = vmatpush2.bf16.msra.mxu0 0
    %4470 = vmatprep.subr.bf16.mxu0 0
    %4471 = vmatpush2.bf16.msra.mxu0 0
    %4472 = vmatprep.mubr.bf16.mxu0 0
    %4473 = vmatmul.mubr.bf16.gmra.mxu0 %v4023
    %v4474 = vpop.f32.mrf.mxu0
    %v4475 = vadd.f32 0.0, %v4474
    %v4476 = vpop.f32.mrf.mxu0
    %v4477 = vpop.f32.mrf.mxu0
    %v4478 = vadd.f32 0.0, %v4477
    %v4479 = vpop.f32.mrf.mxu0
    %4480 = vmatprep.mubr.bf16.mxu0 0
    %4481 = vmatmul.mubr.bf16.gmra.mxu0 %v4024
    %v4482 = vpop.f32.mrf.mxu0
    %v4483 = vadd.f32 0.0, %v4482
    %v4484 = vpop.f32.mrf.mxu0
    %v4485 = vpop.f32.mrf.mxu0
    %v4486 = vadd.f32 0.0, %v4485
    %v4487 = vpop.f32.mrf.mxu0
    %4488 = vdwg.mxu0
    %4489 = vst [vmem:[#allocation2 + $0x60] sm:$0xff] %v4475
    %4490 = vst [vmem:[#allocation2 + $0x68] sm:$0xff] %v4478
    %4491 = vst [vmem:[#allocation2 + $0x70] sm:$0xff] %v4483
    %4492 = vst [vmem:[#allocation2 + $0x78] sm:$0xff] %v4486
    %v4493 = vld [vmem:[#allocation2] sm:$0xff]
    %v4494 = vld [vmem:[#allocation2 + $0x8] sm:$0xff]
    %v4495 = vld [vmem:[#allocation2 + $0x10] sm:$0xff]
    %v4496 = vld [vmem:[#allocation2 + $0x18] sm:$0xff]
    %v4497 = vld [vmem:[#allocation2 + $0x20] sm:$0xff]
    %v4498 = vld [vmem:[#allocation2 + $0x28] sm:$0xff]
    %v4499 = vld [vmem:[#allocation2 + $0x30] sm:$0xff]
    %v4500 = vld [vmem:[#allocation2 + $0x38] sm:$0xff]
    %v4501 = vld [vmem:[#allocation2 + $0x40] sm:$0xff]
    %v4502 = vld [vmem:[#allocation2 + $0x48] sm:$0xff]
    %v4503 = vld [vmem:[#allocation2 + $0x50] sm:$0xff]
    %v4504 = vld [vmem:[#allocation2 + $0x58] sm:$0xff]
    %v4505 = vld [vmem:[#allocation2 + $0x60] sm:$0xff]
    %v4506 = vld [vmem:[#allocation2 + $0x68] sm:$0xff]
    %v4507 = vld [vmem:[#allocation2 + $0x70] sm:$0xff]
    %v4508 = vld [vmem:[#allocation2 + $0x78] sm:$0xff]
    %4509 = vmatprep.subr.mxu0 0.0
    %4510 = vmatpush1.msra.mxu0 %v4508
    %4511 = vmatprep.subr.mxu0 0.0
    %4512 = vmatpush1.msra.mxu0 %v4507
    %4513 = vmatprep.subr.mxu0 0.0
    %4514 = vmatpush1.msra.mxu0 %v4506
    %4515 = vmatprep.subr.mxu0 0.0
    %4516 = vmatpush1.msra.mxu0 %v4505
    %4517 = vmatprep.subr.mxu0 0.0
    %4518 = vmatpush1.msra.mxu0 %v4504
    %4519 = vmatprep.subr.mxu0 0.0
    %4520 = vmatpush1.msra.mxu0 %v4503
    %4521 = vmatprep.subr.mxu0 0.0
    %4522 = vmatpush1.msra.mxu0 %v4502
    %4523 = vmatprep.subr.mxu0 0.0
    %4524 = vmatpush1.msra.mxu0 %v4501
    %4525 = vmatprep.subr.mxu0 0.0
    %4526 = vmatpush1.msra.mxu0 %v4500
    %4527 = vmatprep.subr.mxu0 0.0
    %4528 = vmatpush1.msra.mxu0 %v4499
    %4529 = vmatprep.subr.mxu0 0.0
    %4530 = vmatpush1.msra.mxu0 %v4498
    %4531 = vmatprep.subr.mxu0 0.0
    %4532 = vmatpush1.msra.mxu0 %v4497
    %4533 = vmatprep.subr.mxu0 0.0
    %4534 = vmatpush1.msra.mxu0 %v4496
    %4535 = vmatprep.subr.mxu0 0.0
    %4536 = vmatpush1.msra.mxu0 %v4495
    %4537 = vmatprep.subr.mxu0 0.0
    %4538 = vmatpush1.msra.mxu0 %v4494
    %4539 = vmatprep.subr.mxu0 0.0
    %4540 = vmatpush1.msra.mxu0 %v4493
    %4541 = vmatprep.subr.mxu0 0.0
    %4542 = vmatpush2.msra.mxu0 0.0
    %4543 = vmatprep.subr.mxu0 0.0
    %4544 = vmatpush2.msra.mxu0 0.0
    %4545 = vmatprep.subr.mxu0 0.0
    %4546 = vmatpush2.msra.mxu0 0.0
    %4547 = vmatprep.subr.mxu0 0.0
    %4548 = vmatpush2.msra.mxu0 0.0
    %4549 = vmatprep.subr.mxu0 0.0
    %4550 = vmatpush2.msra.mxu0 0.0
    %4551 = vmatprep.subr.mxu0 0.0
    %4552 = vmatpush2.msra.mxu0 0.0
    %4553 = vmatprep.subr.mxu0 0.0
    %4554 = vmatpush2.msra.mxu0 0.0
    %4555 = vmatprep.subr.mxu0 0.0
    %4556 = vmatpush2.msra.mxu0 0.0
    %4557 = vmatprep.subr.mxu0 0.0
    %4558 = vmatpush2.msra.mxu0 0.0
    %4559 = vmatprep.subr.mxu0 0.0
    %4560 = vmatpush2.msra.mxu0 0.0
    %4561 = vmatprep.subr.mxu0 0.0
    %4562 = vmatpush2.msra.mxu0 0.0
    %4563 = vmatprep.subr.mxu0 0.0
    %4564 = vmatpush2.msra.mxu0 0.0
    %4565 = vmatprep.subr.mxu0 0.0
    %4566 = vmatpush2.msra.mxu0 0.0
    %4567 = vmatprep.subr.mxu0 0.0
    %4568 = vmatpush2.msra.mxu0 0.0
    %4569 = vmatprep.subr.mxu0 0.0
    %4570 = vmatpush2.msra.mxu0 0.0
    %4571 = vmatprep.subr.mxu0 0.0
    %4572 = vmatpush2.msra.mxu0 0.0
    %4573 = vmatprep.mubr.f32.mxu0 0.0
    %4574 = vmatmul.mubr.f32.gmra.mxu0 %v380
    %v4575 = vpop.f32.mrf.mxu0
    %v4576 = vadd.f32 0.0, %v4575
    %v4577 = vpop.f32.mrf.mxu0
    %4578 = vmatprep.mubr.f32.mxu0 0.0
    %4579 = vmatmul.mubr.f32.gmra.mxu0 %v381
    %v4580 = vpop.f32.mrf.mxu0
    %v4581 = vadd.f32 0.0, %v4580
    %v4582 = vpop.f32.mrf.mxu0
    %4583 = vmatprep.mubr.f32.mxu0 0.0
    %4584 = vmatmul.mubr.f32.gmra.mxu0 %v382
    %v4585 = vpop.f32.mrf.mxu0
    %v4586 = vadd.f32 0.0, %v4585
    %v4587 = vpop.f32.mrf.mxu0
    %4588 = vmatprep.mubr.f32.mxu0 0.0
    %4589 = vmatmul.mubr.f32.gmra.mxu0 %v383
    %v4590 = vpop.f32.mrf.mxu0
    %v4591 = vadd.f32 0.0, %v4590
    %v4592 = vpop.f32.mrf.mxu0
    %4593 = vmatprep.mubr.f32.mxu0 0.0
    %4594 = vmatmul.mubr.f32.gmra.mxu0 %v384
    %v4595 = vpop.f32.mrf.mxu0
    %v4596 = vadd.f32 0.0, %v4595
    %v4597 = vpop.f32.mrf.mxu0
    %4598 = vmatprep.mubr.f32.mxu0 0.0
    %4599 = vmatmul.mubr.f32.gmra.mxu0 %v385
    %v4600 = vpop.f32.mrf.mxu0
    %v4601 = vadd.f32 0.0, %v4600
    %v4602 = vpop.f32.mrf.mxu0
    %4603 = vmatprep.mubr.f32.mxu0 0.0
    %4604 = vmatmul.mubr.f32.gmra.mxu0 %v386
    %v4605 = vpop.f32.mrf.mxu0
    %v4606 = vadd.f32 0.0, %v4605
    %v4607 = vpop.f32.mrf.mxu0
    %4608 = vmatprep.mubr.f32.mxu0 0.0
    %4609 = vmatmul.mubr.f32.gmra.mxu0 %v387
    %v4610 = vpop.f32.mrf.mxu0
    %v4611 = vadd.f32 0.0, %v4610
    %v4612 = vpop.f32.mrf.mxu0
    %4613 = vmatprep.mubr.f32.mxu0 0.0
    %4614 = vmatmul.mubr.f32.gmra.mxu0 %v388
    %v4615 = vpop.f32.mrf.mxu0
    %v4616 = vadd.f32 0.0, %v4615
    %v4617 = vpop.f32.mrf.mxu0
    %4618 = vmatprep.mubr.f32.mxu0 0.0
    %4619 = vmatmul.mubr.f32.gmra.mxu0 %v389
    %v4620 = vpop.f32.mrf.mxu0
    %v4621 = vadd.f32 0.0, %v4620
    %v4622 = vpop.f32.mrf.mxu0
    %4623 = vmatprep.mubr.f32.mxu0 0.0
    %4624 = vmatmul.mubr.f32.gmra.mxu0 %v390
    %v4625 = vpop.f32.mrf.mxu0
    %v4626 = vadd.f32 0.0, %v4625
    %v4627 = vpop.f32.mrf.mxu0
    %4628 = vmatprep.mubr.f32.mxu0 0.0
    %4629 = vmatmul.mubr.f32.gmra.mxu0 %v391
    %v4630 = vpop.f32.mrf.mxu0
    %v4631 = vadd.f32 0.0, %v4630
    %v4632 = vpop.f32.mrf.mxu0
    %4633 = vdwg.mxu0
    %4634 = vmatprep.subr.mxu0 0.0
    %4635 = vmatpush1.msra.mxu0 0.0
    %4636 = vmatprep.subr.mxu0 0.0
    %4637 = vmatpush1.msra.mxu0 0.0
    %4638 = vmatprep.subr.mxu0 0.0
    %4639 = vmatpush1.msra.mxu0 0.0
    %4640 = vmatprep.subr.mxu0 0.0
    %4641 = vmatpush1.msra.mxu0 0.0
    %4642 = vmatprep.subr.mxu0 0.0
    %4643 = vmatpush1.msra.mxu0 0.0
    %4644 = vmatprep.subr.mxu0 0.0
    %4645 = vmatpush1.msra.mxu0 0.0
    %4646 = vmatprep.subr.mxu0 0.0
    %4647 = vmatpush1.msra.mxu0 0.0
    %4648 = vmatprep.subr.mxu0 0.0
    %4649 = vmatpush1.msra.mxu0 0.0
    %4650 = vmatprep.subr.mxu0 0.0
    %4651 = vmatpush1.msra.mxu0 0.0
    %4652 = vmatprep.subr.mxu0 0.0
    %4653 = vmatpush1.msra.mxu0 0.0
    %4654 = vmatprep.subr.mxu0 0.0
    %4655 = vmatpush1.msra.mxu0 0.0
    %4656 = vmatprep.subr.mxu0 0.0
    %4657 = vmatpush1.msra.mxu0 0.0
    %4658 = vmatprep.subr.mxu0 0.0
    %4659 = vmatpush1.msra.mxu0 %v4022
    %4660 = vmatprep.subr.mxu0 0.0
    %4661 = vmatpush1.msra.mxu0 %v4021
    %4662 = vmatprep.subr.mxu0 0.0
    %4663 = vmatpush1.msra.mxu0 %v4020
    %4664 = vmatprep.subr.mxu0 0.0
    %4665 = vmatpush1.msra.mxu0 %v4019
    %4666 = vmatprep.subr.mxu0 0.0
    %4667 = vmatpush2.msra.mxu0 0.0
    %4668 = vmatprep.subr.mxu0 0.0
    %4669 = vmatpush2.msra.mxu0 0.0
    %4670 = vmatprep.subr.mxu0 0.0
    %4671 = vmatpush2.msra.mxu0 0.0
    %4672 = vmatprep.subr.mxu0 0.0
    %4673 = vmatpush2.msra.mxu0 0.0
    %4674 = vmatprep.subr.mxu0 0.0
    %4675 = vmatpush2.msra.mxu0 0.0
    %4676 = vmatprep.subr.mxu0 0.0
    %4677 = vmatpush2.msra.mxu0 0.0
    %4678 = vmatprep.subr.mxu0 0.0
    %4679 = vmatpush2.msra.mxu0 0.0
    %4680 = vmatprep.subr.mxu0 0.0
    %4681 = vmatpush2.msra.mxu0 0.0
    %4682 = vmatprep.subr.mxu0 0.0
    %4683 = vmatpush2.msra.mxu0 0.0
    %4684 = vmatprep.subr.mxu0 0.0
    %4685 = vmatpush2.msra.mxu0 0.0
    %4686 = vmatprep.subr.mxu0 0.0
    %4687 = vmatpush2.msra.mxu0 0.0
    %4688 = vmatprep.subr.mxu0 0.0
    %4689 = vmatpush2.msra.mxu0 0.0
    %4690 = vmatprep.subr.mxu0 0.0
    %4691 = vmatpush2.msra.mxu0 0.0
    %4692 = vmatprep.subr.mxu0 0.0
    %4693 = vmatpush2.msra.mxu0 0.0
    %4694 = vmatprep.subr.mxu0 0.0
    %4695 = vmatpush2.msra.mxu0 0.0
    %4696 = vmatprep.subr.mxu0 0.0
    %4697 = vmatpush2.msra.mxu0 0.0
    %4698 = vmatprep.mubr.f32.mxu0 0.0
    %4699 = vmatmul.mubr.f32.gmra.mxu0 %v1043
    %v4700 = vpop.f32.mrf.mxu0
    %v4701 = vadd.f32 0.0, %v4700
    %v4702 = vpop.f32.mrf.mxu0
    %4703 = vmatprep.mubr.f32.mxu0 0.0
    %4704 = vmatmul.mubr.f32.gmra.mxu0 %v1046
    %v4705 = vpop.f32.mrf.mxu0
    %v4706 = vadd.f32 0.0, %v4705
    %v4707 = vpop.f32.mrf.mxu0
    %4708 = vmatprep.mubr.f32.mxu0 0.0
    %4709 = vmatmul.mubr.f32.gmra.mxu0 %v1049
    %v4710 = vpop.f32.mrf.mxu0
    %v4711 = vadd.f32 0.0, %v4710
    %v4712 = vpop.f32.mrf.mxu0
    %4713 = vmatprep.mubr.f32.mxu0 0.0
    %4714 = vmatmul.mubr.f32.gmra.mxu0 %v1052
    %v4715 = vpop.f32.mrf.mxu0
    %v4716 = vadd.f32 0.0, %v4715
    %v4717 = vpop.f32.mrf.mxu0
    %4718 = vmatprep.mubr.f32.mxu0 0.0
    %4719 = vmatmul.mubr.f32.gmra.mxu0 %v1055
    %v4720 = vpop.f32.mrf.mxu0
    %v4721 = vadd.f32 0.0, %v4720
    %v4722 = vpop.f32.mrf.mxu0
    %4723 = vmatprep.mubr.f32.mxu0 0.0
    %4724 = vmatmul.mubr.f32.gmra.mxu0 %v1058
    %v4725 = vpop.f32.mrf.mxu0
    %v4726 = vadd.f32 0.0, %v4725
    %v4727 = vpop.f32.mrf.mxu0
    %4728 = vmatprep.mubr.f32.mxu0 0.0
    %4729 = vmatmul.mubr.f32.gmra.mxu0 %v1061
    %v4730 = vpop.f32.mrf.mxu0
    %v4731 = vadd.f32 0.0, %v4730
    %v4732 = vpop.f32.mrf.mxu0
    %4733 = vmatprep.mubr.f32.mxu0 0.0
    %4734 = vmatmul.mubr.f32.gmra.mxu0 %v1064
    %v4735 = vpop.f32.mrf.mxu0
    %v4736 = vadd.f32 0.0, %v4735
    %v4737 = vpop.f32.mrf.mxu0
    %4738 = vdwg.mxu0
    %v4739 = vadd.f32 %v4576, %v4701
    %v4740 = vadd.f32 %v4581, %v4706
    %v4741 = vadd.f32 %v4586, %v4711
    %v4742 = vadd.f32 %v4591, %v4716
    %v4743 = vadd.f32 %v4739, %v411
    %v4744 = vadd.f32 %v4740, %v416
    %v4745 = vadd.f32 %v4741, %v421
    %v4746 = vadd.f32 %v4742, %v426
    %v4747 = vxor.u32 %v4743, 2147483648
    %v4748 = vxor.u32 %v4744, 2147483648
    %v4749 = vxor.u32 %v4745, 2147483648
    %v4750 = vxor.u32 %v4746, 2147483648
    %v4751 = vmul.f32 %v4747, 1.442695
    %v4752 = vpow.pop %v4751
    %v4753 = vmul.f32 %v4748, 1.442695
    %v4754 = vpow.pop %v4753
    %v4755 = vmul.f32 %v4749, 1.442695
    %v4756 = vpow.pop %v4755
    %v4757 = vmul.f32 %v4750, 1.442695
    %v4758 = vpow.pop %v4757
    %v4759 = vadd.f32 %v4752, 1.0
    %v4760 = vadd.f32 %v4754, 1.0
    %v4761 = vadd.f32 %v4756, 1.0
    %v4762 = vadd.f32 %v4758, 1.0
    %v4763 = vrcp.pop %v4759
    %v4764 = vmul.f32 1.0, %v4763
    %v4765 = vrcp.pop %v4760
    %v4766 = vmul.f32 1.0, %v4765
    %v4767 = vrcp.pop %v4761
    %v4768 = vmul.f32 1.0, %v4767
    %v4769 = vrcp.pop %v4762
    %v4770 = vmul.f32 1.0, %v4769
    %v4771 = vadd.f32 %v4596, %v4721
    %v4772 = vadd.f32 %v4601, %v4726
    %v4773 = vadd.f32 %v4606, %v4731
    %v4774 = vadd.f32 %v4611, %v4736
    %v4775 = vxor.u32 %v4771, 2147483648
    %v4776 = vxor.u32 %v4772, 2147483648
    %v4777 = vxor.u32 %v4773, 2147483648
    %v4778 = vxor.u32 %v4774, 2147483648
    %v4779 = vmul.f32 %v4775, 1.442695
    %v4780 = vpow.pop %v4779
    %v4781 = vmul.f32 %v4776, 1.442695
    %v4782 = vpow.pop %v4781
    %v4783 = vmul.f32 %v4777, 1.442695
    %v4784 = vpow.pop %v4783
    %v4785 = vmul.f32 %v4778, 1.442695
    %v4786 = vpow.pop %v4785
    %v4787 = vadd.f32 %v4780, 1.0
    %v4788 = vadd.f32 %v4782, 1.0
    %v4789 = vadd.f32 %v4784, 1.0
    %v4790 = vadd.f32 %v4786, 1.0
    %v4791 = vrcp.pop %v4787
    %v4792 = vmul.f32 1.0, %v4791
    %v4793 = vrcp.pop %v4788
    %v4794 = vmul.f32 1.0, %v4793
    %v4795 = vrcp.pop %v4789
    %v4796 = vmul.f32 1.0, %v4795
    %v4797 = vrcp.pop %v4790
    %v4798 = vmul.f32 1.0, %v4797
    %v4799 = vmul.f32 %v4792, %v4019
    %v4800 = vmul.f32 %v4794, %v4020
    %v4801 = vmul.f32 %v4796, %v4021
    %v4802 = vmul.f32 %v4798, %v4022
    %4803 = vmatprep.subr.mxu0 0.0
    %4804 = vmatpush1.msra.mxu0 0.0
    %4805 = vmatprep.subr.mxu0 0.0
    %4806 = vmatpush1.msra.mxu0 0.0
    %4807 = vmatprep.subr.mxu0 0.0
    %4808 = vmatpush1.msra.mxu0 0.0
    %4809 = vmatprep.subr.mxu0 0.0
    %4810 = vmatpush1.msra.mxu0 0.0
    %4811 = vmatprep.subr.mxu0 0.0
    %4812 = vmatpush1.msra.mxu0 0.0
    %4813 = vmatprep.subr.mxu0 0.0
    %4814 = vmatpush1.msra.mxu0 0.0
    %4815 = vmatprep.subr.mxu0 0.0
    %4816 = vmatpush1.msra.mxu0 0.0
    %4817 = vmatprep.subr.mxu0 0.0
    %4818 = vmatpush1.msra.mxu0 0.0
    %4819 = vmatprep.subr.mxu0 0.0
    %4820 = vmatpush1.msra.mxu0 0.0
    %4821 = vmatprep.subr.mxu0 0.0
    %4822 = vmatpush1.msra.mxu0 0.0
    %4823 = vmatprep.subr.mxu0 0.0
    %4824 = vmatpush1.msra.mxu0 0.0
    %4825 = vmatprep.subr.mxu0 0.0
    %4826 = vmatpush1.msra.mxu0 0.0
    %4827 = vmatprep.subr.mxu0 0.0
    %4828 = vmatpush1.msra.mxu0 %v4802
    %4829 = vmatprep.subr.mxu0 0.0
    %4830 = vmatpush1.msra.mxu0 %v4801
    %4831 = vmatprep.subr.mxu0 0.0
    %4832 = vmatpush1.msra.mxu0 %v4800
    %4833 = vmatprep.subr.mxu0 0.0
    %4834 = vmatpush1.msra.mxu0 %v4799
    %4835 = vmatprep.subr.mxu0 0.0
    %4836 = vmatpush2.msra.mxu0 0.0
    %4837 = vmatprep.subr.mxu0 0.0
    %4838 = vmatpush2.msra.mxu0 0.0
    %4839 = vmatprep.subr.mxu0 0.0
    %4840 = vmatpush2.msra.mxu0 0.0
    %4841 = vmatprep.subr.mxu0 0.0
    %4842 = vmatpush2.msra.mxu0 0.0
    %4843 = vmatprep.subr.mxu0 0.0
    %4844 = vmatpush2.msra.mxu0 0.0
    %4845 = vmatprep.subr.mxu0 0.0
    %4846 = vmatpush2.msra.mxu0 0.0
    %4847 = vmatprep.subr.mxu0 0.0
    %4848 = vmatpush2.msra.mxu0 0.0
    %4849 = vmatprep.subr.mxu0 0.0
    %4850 = vmatpush2.msra.mxu0 0.0
    %4851 = vmatprep.subr.mxu0 0.0
    %4852 = vmatpush2.msra.mxu0 0.0
    %4853 = vmatprep.subr.mxu0 0.0
    %4854 = vmatpush2.msra.mxu0 0.0
    %4855 = vmatprep.subr.mxu0 0.0
    %4856 = vmatpush2.msra.mxu0 0.0
    %4857 = vmatprep.subr.mxu0 0.0
    %4858 = vmatpush2.msra.mxu0 0.0
    %4859 = vmatprep.subr.mxu0 0.0
    %4860 = vmatpush2.msra.mxu0 0.0
    %4861 = vmatprep.subr.mxu0 0.0
    %4862 = vmatpush2.msra.mxu0 0.0
    %4863 = vmatprep.subr.mxu0 0.0
    %4864 = vmatpush2.msra.mxu0 0.0
    %4865 = vmatprep.subr.mxu0 0.0
    %4866 = vmatpush2.msra.mxu0 0.0
    %4867 = vmatprep.mubr.f32.mxu0 0.0
    %4868 = vmatmul.mubr.f32.gmra.mxu0 %v1236
    %v4869 = vpop.f32.mrf.mxu0
    %v4870 = vadd.f32 0.0, %v4869
    %v4871 = vpop.f32.mrf.mxu0
    %4872 = vmatprep.mubr.f32.mxu0 0.0
    %4873 = vmatmul.mubr.f32.gmra.mxu0 %v1239
    %v4874 = vpop.f32.mrf.mxu0
    %v4875 = vadd.f32 0.0, %v4874
    %v4876 = vpop.f32.mrf.mxu0
    %4877 = vmatprep.mubr.f32.mxu0 0.0
    %4878 = vmatmul.mubr.f32.gmra.mxu0 %v1242
    %v4879 = vpop.f32.mrf.mxu0
    %v4880 = vadd.f32 0.0, %v4879
    %v4881 = vpop.f32.mrf.mxu0
    %4882 = vmatprep.mubr.f32.mxu0 0.0
    %4883 = vmatmul.mubr.f32.gmra.mxu0 %v1245
    %v4884 = vpop.f32.mrf.mxu0
    %v4885 = vadd.f32 0.0, %v4884
    %v4886 = vpop.f32.mrf.mxu0
    %4887 = vdwg.mxu0
    %v4888 = vadd.f32 %v4616, %v4870
    %v4889 = vadd.f32 %v4621, %v4875
    %v4890 = vadd.f32 %v4626, %v4880
    %v4891 = vadd.f32 %v4631, %v4885
    %v4892 = vtanh.pop %v4888
    %v4893 = vtanh.pop %v4889
    %v4894 = vtanh.pop %v4890
    %v4895 = vtanh.pop %v4891
    %v4896 = vsub.f32 1.0, %v4764
    %v4897 = vsub.f32 1.0, %v4766
    %v4898 = vsub.f32 1.0, %v4768
    %v4899 = vsub.f32 1.0, %v4770
    %v4900 = vmul.f32 %v4896, %v4019
    %v4901 = vmul.f32 %v4897, %v4020
    %v4902 = vmul.f32 %v4898, %v4021
    %v4903 = vmul.f32 %v4899, %v4022
    %v4904 = vmul.f32 %v4764, %v4892
    %v4905 = vmul.f32 %v4766, %v4893
    %v4906 = vmul.f32 %v4768, %v4894
    %v4907 = vmul.f32 %v4770, %v4895
    %v4908 = vadd.f32 %v4900, %v4904
    %v4909 = vadd.f32 %v4901, %v4905
    %v4910 = vadd.f32 %v4902, %v4906
    %v4911 = vadd.f32 %v4903, %v4907
    %v4912 = vld [vmem:[#allocation11] sm:$0xff]
    %v4913 = vld [vmem:[#allocation11 + $0x8] sm:$0xff]
    %v4914 = vld [vmem:[#allocation11 + $0x10] sm:$0xff]
    %v4915 = vld [vmem:[#allocation11 + $0x18] sm:$0xff]
    %v4916 = vld [vmem:[%s11] sm:$0xff]
    %v4917 = vld [vmem:[%s11 + $0x8] sm:$0xff]
    %v4918 = vld [vmem:[%s11 + $0x10] sm:$0xff]
    %v4919 = vld [vmem:[%s11 + $0x18] sm:$0xff]
    %4921 = vset.pattern.permute.xlu0 0
    %4922 = vperm.xlu0 %4921, %v4916
    %v4923 = vpop.permute.xlu0 %4922
    %4926 = vset.pattern.permute.xlu0 0
    %4927 = vperm.xlu0 %4926, %v4917
    %v4928 = vpop.permute.xlu0 %4927
    %4931 = vset.pattern.permute.xlu0 0
    %4932 = vperm.xlu0 %4931, %v4918
    %v4933 = vpop.permute.xlu0 %4932
    %4936 = vset.pattern.permute.xlu0 0
    %4937 = vperm.xlu0 %4936, %v4919
    %v4938 = vpop.permute.xlu0 %4937
    %v4941 = vsel %vm278, %v4912, 0
    %v4944 = vsel %vm278, %v4913, 0
    %v4947 = vsel %vm278, %v4914, 0
    %v4950 = vsel %vm278, %v4915, 0
    %4952 = vmatprep.subr.mxu0 0.0
    %4953 = vmatpush1.msra.mxu0 0.0
    %4954 = vmatprep.subr.mxu0 0.0
    %4955 = vmatpush1.msra.mxu0 0.0
    %4956 = vmatprep.subr.mxu0 0.0
    %4957 = vmatpush1.msra.mxu0 0.0
    %4958 = vmatprep.subr.mxu0 0.0
    %4959 = vmatpush1.msra.mxu0 0.0
    %4960 = vmatprep.subr.mxu0 0.0
    %4961 = vmatpush1.msra.mxu0 0.0
    %4962 = vmatprep.subr.mxu0 0.0
    %4963 = vmatpush1.msra.mxu0 0.0
    %4964 = vmatprep.subr.mxu0 0.0
    %4965 = vmatpush1.msra.mxu0 0.0
    %4966 = vmatprep.subr.mxu0 0.0
    %4967 = vmatpush1.msra.mxu0 0.0
    %4968 = vmatprep.subr.mxu0 0.0
    %4969 = vmatpush1.msra.mxu0 0.0
    %4970 = vmatprep.subr.mxu0 0.0
    %4971 = vmatpush1.msra.mxu0 0.0
    %4972 = vmatprep.subr.mxu0 0.0
    %4973 = vmatpush1.msra.mxu0 0.0
    %4974 = vmatprep.subr.mxu0 0.0
    %4975 = vmatpush1.msra.mxu0 0.0
    %4976 = vmatprep.subr.mxu0 0.0
    %4977 = vmatpush1.msra.mxu0 %v4911
    %4978 = vmatprep.subr.mxu0 0.0
    %4979 = vmatpush1.msra.mxu0 %v4910
    %4980 = vmatprep.subr.mxu0 0.0
    %4981 = vmatpush1.msra.mxu0 %v4909
    %4982 = vmatprep.subr.mxu0 0.0
    %4983 = vmatpush1.msra.mxu0 %v4908
    %4984 = vmatprep.subr.mxu0 0.0
    %4985 = vmatpush2.msra.mxu0 0.0
    %4986 = vmatprep.subr.mxu0 0.0
    %4987 = vmatpush2.msra.mxu0 0.0
    %4988 = vmatprep.subr.mxu0 0.0
    %4989 = vmatpush2.msra.mxu0 0.0
    %4990 = vmatprep.subr.mxu0 0.0
    %4991 = vmatpush2.msra.mxu0 0.0
    %4992 = vmatprep.subr.mxu0 0.0
    %4993 = vmatpush2.msra.mxu0 0.0
    %4994 = vmatprep.subr.mxu0 0.0
    %4995 = vmatpush2.msra.mxu0 0.0
    %4996 = vmatprep.subr.mxu0 0.0
    %4997 = vmatpush2.msra.mxu0 0.0
    %4998 = vmatprep.subr.mxu0 0.0
    %4999 = vmatpush2.msra.mxu0 0.0
    %5000 = vmatprep.subr.mxu0 0.0
    %5001 = vmatpush2.msra.mxu0 0.0
    %5002 = vmatprep.subr.mxu0 0.0
    %5003 = vmatpush2.msra.mxu0 0.0
    %5004 = vmatprep.subr.mxu0 0.0
    %5005 = vmatpush2.msra.mxu0 0.0
    %5006 = vmatprep.subr.mxu0 0.0
    %5007 = vmatpush2.msra.mxu0 0.0
    %5008 = vmatprep.subr.mxu0 0.0
    %5009 = vmatpush2.msra.mxu0 0.0
    %5010 = vmatprep.subr.mxu0 0.0
    %5011 = vmatpush2.msra.mxu0 0.0
    %5012 = vmatprep.subr.mxu0 0.0
    %5013 = vmatpush2.msra.mxu0 0.0
    %5014 = vmatprep.subr.mxu0 0.0
    %5015 = vmatpush2.msra.mxu0 0.0
    %5016 = vmatprep.mubr.f32.mxu0 0.0
    %5017 = vmatmul.mubr.f32.gmra.mxu0 %v4941
    %v5018 = vpop.f32.mrf.mxu0
    %v5019 = vadd.f32 %v4923, %v5018
    %v5020 = vpop.f32.mrf.mxu0
    %5021 = vmatprep.mubr.f32.mxu0 0.0
    %5022 = vmatmul.mubr.f32.gmra.mxu0 %v4944
    %v5023 = vpop.f32.mrf.mxu0
    %v5024 = vadd.f32 %v4928, %v5023
    %v5025 = vpop.f32.mrf.mxu0
    %5026 = vmatprep.mubr.f32.mxu0 0.0
    %5027 = vmatmul.mubr.f32.gmra.mxu0 %v4947
    %v5028 = vpop.f32.mrf.mxu0
    %v5029 = vadd.f32 %v4933, %v5028
    %v5030 = vpop.f32.mrf.mxu0
    %5031 = vmatprep.mubr.f32.mxu0 0.0
    %5032 = vmatmul.mubr.f32.gmra.mxu0 %v4950
    %v5033 = vpop.f32.mrf.mxu0
    %v5034 = vadd.f32 %v4938, %v5033
    %v5035 = vpop.f32.mrf.mxu0
    %5036 = vdwg.mxu0
    %v5037 = vmax.f32 %v5019, 0.0
    %v5038 = vmax.f32 %v5024, 0.0
    %v5039 = vmax.f32 %v5029, 0.0
    %v5040 = vmax.f32 %v5034, 0.0
    %v5041 = vld [vmem:[%s12] sm:$0xff]
    %v5042 = vld [vmem:[%s13] sm:$0xff]
    %5044 = vset.pattern.permute.xlu0 0
    %5045 = vperm.xlu0 %5044, %v5042
    %v5046 = vpop.permute.xlu0 %5045
    %v5049 = vsel %vm278, %v5041, 0
    %5051 = vmatprep.subr.mxu0 0.0
    %5052 = vmatpush1.msra.mxu0 0.0
    %5053 = vmatprep.subr.mxu0 0.0
    %5054 = vmatpush1.msra.mxu0 0.0
    %5055 = vmatprep.subr.mxu0 0.0
    %5056 = vmatpush1.msra.mxu0 0.0
    %5057 = vmatprep.subr.mxu0 0.0
    %5058 = vmatpush1.msra.mxu0 0.0
    %5059 = vmatprep.subr.mxu0 0.0
    %5060 = vmatpush1.msra.mxu0 0.0
    %5061 = vmatprep.subr.mxu0 0.0
    %5062 = vmatpush1.msra.mxu0 0.0
    %5063 = vmatprep.subr.mxu0 0.0
    %5064 = vmatpush1.msra.mxu0 0.0
    %5065 = vmatprep.subr.mxu0 0.0
    %5066 = vmatpush1.msra.mxu0 0.0
    %5067 = vmatprep.subr.mxu0 0.0
    %5068 = vmatpush1.msra.mxu0 0.0
    %5069 = vmatprep.subr.mxu0 0.0
    %5070 = vmatpush1.msra.mxu0 0.0
    %5071 = vmatprep.subr.mxu0 0.0
    %5072 = vmatpush1.msra.mxu0 0.0
    %5073 = vmatprep.subr.mxu0 0.0
    %5074 = vmatpush1.msra.mxu0 0.0
    %5075 = vmatprep.subr.mxu0 0.0
    %5076 = vmatpush1.msra.mxu0 %v5040
    %5077 = vmatprep.subr.mxu0 0.0
    %5078 = vmatpush1.msra.mxu0 %v5039
    %5079 = vmatprep.subr.mxu0 0.0
    %5080 = vmatpush1.msra.mxu0 %v5038
    %5081 = vmatprep.subr.mxu0 0.0
    %5082 = vmatpush1.msra.mxu0 %v5037
    %5083 = vmatprep.subr.mxu0 0.0
    %5084 = vmatpush2.msra.mxu0 0.0
    %5085 = vmatprep.subr.mxu0 0.0
    %5086 = vmatpush2.msra.mxu0 0.0
    %5087 = vmatprep.subr.mxu0 0.0
    %5088 = vmatpush2.msra.mxu0 0.0
    %5089 = vmatprep.subr.mxu0 0.0
    %5090 = vmatpush2.msra.mxu0 0.0
    %5091 = vmatprep.subr.mxu0 0.0
    %5092 = vmatpush2.msra.mxu0 0.0
    %5093 = vmatprep.subr.mxu0 0.0
    %5094 = vmatpush2.msra.mxu0 0.0
    %5095 = vmatprep.subr.mxu0 0.0
    %5096 = vmatpush2.msra.mxu0 0.0
    %5097 = vmatprep.subr.mxu0 0.0
    %5098 = vmatpush2.msra.mxu0 0.0
    %5099 = vmatprep.subr.mxu0 0.0
    %5100 = vmatpush2.msra.mxu0 0.0
    %5101 = vmatprep.subr.mxu0 0.0
    %5102 = vmatpush2.msra.mxu0 0.0
    %5103 = vmatprep.subr.mxu0 0.0
    %5104 = vmatpush2.msra.mxu0 0.0
    %5105 = vmatprep.subr.mxu0 0.0
    %5106 = vmatpush2.msra.mxu0 0.0
    %5107 = vmatprep.subr.mxu0 0.0
    %5108 = vmatpush2.msra.mxu0 0.0
    %5109 = vmatprep.subr.mxu0 0.0
    %5110 = vmatpush2.msra.mxu0 0.0
    %5111 = vmatprep.subr.mxu0 0.0
    %5112 = vmatpush2.msra.mxu0 0.0
    %5113 = vmatprep.subr.mxu0 0.0
    %5114 = vmatpush2.msra.mxu0 0.0
    %5115 = vmatprep.mubr.f32.mxu0 0.0
    %5116 = vmatmul.mubr.f32.gmra.mxu0 %v5049
    %v5117 = vpop.f32.mrf.mxu0
    %v5118 = vadd.f32 %v5046, %v5117
    %v5119 = vpop.f32.mrf.mxu0
    %5120 = vdwg.mxu0
    %v5121 = vxor.u32 %v5118, 2147483648
    %v5122 = vmul.f32 %v5121, 1.442695
    %v5123 = vpow.pop %v5122
    %v5124 = vadd.f32 %v5123, 1.0
    %v5125 = vrcp.pop %v5124
    %v5126 = vmul.f32 1.0, %v5125
    %5127 = vst [vmem:[#allocation12] sm:$0xff] %v5126
    // Predicated region
    $region78: #{tpu_custom_call.1} parent=1 // pred_check
      _
    $region79: #{tpu_custom_call.1} parent=1 // pred_check_branch
      %5129 = sbr.rel (0) target = $region81
    $region80: #{tpu_custom_call.1} parent=1 // pred_region
      %s5131 = ssub.s32 128, 128
      %5132 = vsyncadd [#allocation5], %s5131
      %s5134 = sshll.u32 [#allocation12], 4
      %s5135 = int_to_ptr.vmem [resolvable:$true] %s5134
      %5137 = dma.vmem_to_hbm [thread:$0]  %s5135, 128, %s14, [#allocation5]
    $region81: #{tpu_custom_call.1} parent=1 // pred_fallthru
      _
    // Predicated region
    $region82: #{tpu_custom_call.1} parent=1 // pred_check
      _
    $region83: #{tpu_custom_call.1} parent=1 // pred_check_branch
      %5139 = sbr.rel (0) target = $region85
    $region84: #{tpu_custom_call.1} parent=1 // pred_region
      %5140 = dma.done [#allocation5], 128
    $region85: #{tpu_custom_call.1} parent=1 // pred_fallthru
      _
    %5141 = vsyncpa [#allocation4], 1
    %5142 = vsyncpa [#allocation7], 1
    %5143 = vsyncpa [#allocation10], 1
    %5144 = vsyncpa [#allocation5], 1

</llo_original>
